<compile_context>
chip_gen: v7x
topology: tpu7x:2x2x1
jax: 0.10.0
libtpu: 0.0.40
codegen_flags: <defaults>
</compile_context>

<pallas_src>
import functools

import numpy as np
import jax
import jax.numpy as jnp
from jax.experimental import pallas as pl
from jax.experimental.pallas import tpu as pltpu


# ----------------------------- Pallas kernels --------------------------------

def _conv_pool_kernel(np_, blk_b, a_ref, w_ref, b_ref, o_ref):
    """Fused conv(as one GEMM) + 2x2 maxpool + bias + ReLU for BLK_B images.

    a_ref: (K, 4*blk_b*np_) bf16  transposed im2col; lanes = [window][image][pixel]
    w_ref: (Cout, K)        bf16  conv weights (rows = out channel)
    b_ref: (Cout, 1)        f32   conv bias
    o_ref: (blk_b, Cout, np_) f32 pooled + ReLU'd activations in NCHW order
    """
    # Single MXU push per grid step; f32 accumulation.
    y = jnp.dot(w_ref[...], a_ref[...],
                preferred_element_type=jnp.float32)        # (Cout, 4*blk_b*np_)
    m = blk_b * np_
    # max over the 4 pool-window positions (contiguous lane slabs).  ReLU is
    # monotone and the bias is shared across the window, so pooling first is
    # exactly equivalent to PyTorch's relu(conv) -> maxpool.
    pooled = jnp.maximum(jnp.maximum(y[:, 0 * m:1 * m], y[:, 1 * m:2 * m]),
                         jnp.maximum(y[:, 2 * m:3 * m], y[:, 3 * m:4 * m]))
    act = jnp.maximum(pooled + b_ref[...], 0.0)            # (Cout, blk_b*np_) f32
    for b in range(blk_b):                                 # static unrolled stores
        o_ref[b] = act[:, b * np_:(b + 1) * np_]


def _mlp_softmax_kernel(x_ref, w1_ref, b1_ref, w2_ref, b2_ref, w3_ref, b3_ref,
                        o_ref):
    """classify(): fc1 -> ReLU -> fc2 -> ReLU -> fc3(padded to 128) -> softmax.
    Matmul operands bf16, accumulation / elementwise f32.  Padded logit lanes
    carry a -1e30 bias so their exp() is exactly 0 and the softmax matches the
    unpadded 19-way softmax; the wrapper slices the first 19 lanes."""
    h = jnp.dot(x_ref[...], w1_ref[...], preferred_element_type=jnp.float32)
    h = jnp.maximum(h + b1_ref[...], 0.0)
    h = jnp.dot(h.astype(jnp.bfloat16), w2_ref[...],
                preferred_element_type=jnp.float32)
    h = jnp.maximum(h + b2_ref[...], 0.0)
    logits = jnp.dot(h.astype(jnp.bfloat16), w3_ref[...],
                     preferred_element_type=jnp.float32) + b3_ref[...]
    z = logits - jnp.max(logits, axis=1, keepdims=True)
    e = jnp.exp(z)
    inv = pl.reciprocal(jnp.sum(e, axis=1, keepdims=True), approx=True)
    o_ref[...] = e * inv


# ------------------------------- JAX glue ------------------------------------

def _pick_block(n, target):
    """Largest divisor of n that is <= target."""
    d = min(n, target)
    while n % d:
        d -= 1
    return d


def _im2col_T(x_nchw, k=3, pad=1, pool=2):
    """Patch extraction (layout glue, not compute).

    Returns [B, pool*pool, K, Ho*Wo] with K = C*k*k ordered (ci, dy, dx) to
    match w_oihw.reshape(Cout, C*k*k).
    """
    B, C, H, W = x_nchw.shape
    Ho, Wo = H // pool, W // pool
    xp = jnp.pad(x_nchw, ((0, 0), (0, 0), (pad, pad), (pad, pad)))
    wins = []
    for py in range(pool):
        for px in range(pool):
            taps = []
            for dy in range(k):
                for dx in range(k):
                    r0, c0 = py + dy, px + dx
                    sl = xp[:, :,
                            r0:r0 + pool * (Ho - 1) + 1:pool,
                            c0:c0 + pool * (Wo - 1) + 1:pool]     # [B,C,Ho,Wo]
                    taps.append(sl.reshape(B, C, 1, Ho * Wo))
            wins.append(jnp.concatenate(taps, axis=2).reshape(B, C * k * k,
                                                              Ho * Wo))
    return jnp.stack(wins, axis=1), Ho, Wo                         # [B,4,K,Np]


def _conv_relu_pool(x_nchw, w_oihw, bias, blk_b_target=8):
    """Conv2d(k=3,s=1,p=1) + ReLU + MaxPool2d(2,2).  NCHW in, (B,Cout,Ho*Wo) out."""
    B = x_nchw.shape[0]
    Cout, Cin = w_oihw.shape[0], w_oihw.shape[1]
    A4, Ho, Wo = _im2col_T(x_nchw)                                 # [B,4,K,Np]
    K, Np = Cin * 9, Ho * Wo

    blk = _pick_block(B, blk_b_target)                             # images / grid step
    nb = B // blk
    lanes = 4 * blk * Np
    # pack batch blocks into the lane dim: lane = window*blk*Np + image*Np + pixel
    A = jnp.transpose(A4.reshape(nb, blk, 4, K, Np), (0, 3, 2, 1, 4))
    A = A.reshape(nb, K, lanes).astype(jnp.bfloat16)

    wT = w_oihw.reshape(Cout, K).astype(jnp.bfloat16)              # (Cout, K)
    b2d = bias.reshape(Cout, 1).astype(jnp.float32)

    kernel = functools.partial(_conv_pool_kernel, Np, blk)
    out = pl.pallas_call(
        kernel,
        out_shape=jax.ShapeDtypeStruct((B, Cout, Np), jnp.float32),
        grid=(nb,),
        in_specs=[
            pl.BlockSpec((None, K, lanes), lambda i: (i, 0, 0)),
            pl.BlockSpec((Cout, K), lambda i: (0, 0)),   # constant -> stays resident
            pl.BlockSpec((Cout, 1), lambda i: (0, 0)),   # constant -> stays resident
        ],
        out_specs=pl.BlockSpec((blk, Cout, Np), lambda i: (i, 0, 0)),
        compiler_params=pltpu.CompilerParams(
            dimension_semantics=("parallel",)),
    )(A, wT, b2d)
    return out                                                     # (B, Cout, Np) NCHW


def forward(x_nchw, params):
    """DisjointMNISTAdditionCNN.forward: [B,1,28,28] -> [B, 32*7*7]."""
    x = x_nchw.astype(jnp.float32)
    B = x.shape[0]
    y = _conv_relu_pool(x, params["conv1_w"], params["conv1_b"])   # (B,16,196)
    y = y.reshape(B, 16, 14, 14)                                   # NCHW
    y = _conv_relu_pool(y, params["conv2_w"], params["conv2_b"])   # (B,32,49)
    # output already channel-major per image -> PyTorch NCHW flatten is a reshape
    return y.reshape(B, 32 * 7 * 7)


_NCLS = 19
_NCLS_PAD = 128   # lane-dense output store (unmasked vst), sliced back to 19 outside


def classify(emb_list, params, n_images):
    """DisjointMNISTAdditionCNN.classify."""
    assert len(emb_list) == n_images
    x = jnp.concatenate(emb_list, axis=1)                          # [B, n*1568]
    B, Din = x.shape
    tb = _pick_block(B, 256)
    if tb != B and tb % 8 != 0:        # blocked second-minor dim must be 8-aligned
        tb = B
    nb = B // tb

    bf = jnp.bfloat16
    # Pad fc3 to 128 output lanes: zero weights + -1e30 bias on padded lanes
    # => padded logits underflow to prob 0 and the softmax is unchanged.
    w3p = jnp.zeros((64, _NCLS_PAD), jnp.float32).at[:, :_NCLS].set(
        params["fc3_w"])
    b3p = jnp.full((1, _NCLS_PAD), -1e30, jnp.float32).at[:, :_NCLS].set(
        params["fc3_b"])

    out = pl.pallas_call(
        _mlp_softmax_kernel,
        out_shape=jax.ShapeDtypeStruct((B, _NCLS_PAD), jnp.float32),
        grid=(nb,),
        in_specs=[
            pl.BlockSpec((tb, Din), lambda i: (i, 0)),
            pl.BlockSpec((Din, 128), lambda i: (0, 0)),
            pl.BlockSpec((1, 128), lambda i: (0, 0)),
            pl.BlockSpec((128, 64), lambda i: (0, 0)),
            pl.BlockSpec((1, 64), lambda i: (0, 0)),
            pl.BlockSpec((64, _NCLS_PAD), lambda i: (0, 0)),
            pl.BlockSpec((1, _NCLS_PAD), lambda i: (0, 0)),
        ],
        out_specs=pl.BlockSpec((tb, _NCLS_PAD), lambda i: (i, 0)),
        compiler_params=pltpu.CompilerParams(
            dimension_semantics=("parallel",)),
    )(x.astype(bf), params["fc1_w"].astype(bf), params["fc1_b"],
      params["fc2_w"].astype(bf), params["fc2_b"],
      w3p.astype(bf), b3p)
    return out[:, :_NCLS]


# --------------------------- params / reference -------------------------------

def init_params(key, n_images):
    ks = jax.random.split(key, 10)

    def u(k, shape, fan_in):
        bound = 1.0 / np.sqrt(fan_in)
        return jax.random.uniform(k, shape, jnp.float32, -bound, bound)

    d_in = 32 * 7 * 7 * n_images
    return {
        "conv1_w": u(ks[0], (16, 1, 3, 3), 1 * 9),
        "conv1_b": u(ks[1], (16,), 1 * 9),
        "conv2_w": u(ks[2], (32, 16, 3, 3), 16 * 9),
        "conv2_b": u(ks[3], (32,), 16 * 9),
        # linear weights stored as [in, out] (PyTorch weight transposed)
        "fc1_w": u(ks[4], (d_in, 128), d_in),
        "fc1_b": u(ks[5], (1, 128), d_in),
        "fc2_w": u(ks[6], (128, 64), 128),
        "fc2_b": u(ks[7], (1, 64), 128),
        "fc3_w": u(ks[8], (64, 19), 64),
        "fc3_b": u(ks[9], (1, 19), 64),
    }


def forward_ref(x_nchw, params):
    dn = ("NCHW", "OIHW", "NCHW")
    y = jax.lax.conv_general_dilated(
        x_nchw, params["conv1_w"], (1, 1), ((1, 1), (1, 1)),
        dimension_numbers=dn)
    y = jax.nn.relu(y + params["conv1_b"][None, :, None, None])
    y = jax.lax.reduce_window(y, -jnp.inf, jax.lax.max,
                              (1, 1, 2, 2), (1, 1, 2, 2), "VALID")
    y = jax.lax.conv_general_dilated(
        y, params["conv2_w"], (1, 1), ((1, 1), (1, 1)),
        dimension_numbers=dn)
    y = jax.nn.relu(y + params["conv2_b"][None, :, None, None])
    y = jax.lax.reduce_window(y, -jnp.inf, jax.lax.max,
                              (1, 1, 2, 2), (1, 1, 2, 2), "VALID")
    return y.reshape(y.shape[0], -1)


def classify_ref(emb_list, params):
    x = jnp.concatenate(emb_list, axis=1)
    h = jax.nn.relu(x @ params["fc1_w"] + params["fc1_b"])
    h = jax.nn.relu(h @ params["fc2_w"] + params["fc2_b"])
    return jax.nn.softmax(h @ params["fc3_w"] + params["fc3_b"], axis=1)


# ----------------------------------- main -------------------------------------

if __name__ == "__main__":
    key = jax.random.PRNGKey(0)
    k_p, k_x1, k_x2 = jax.random.split(key, 3)

    N_IMAGES = 2
    BATCH = 2
    params = init_params(k_p, N_IMAGES)

    # Two MNIST-shaped images per sample (NCHW, like the PyTorch module).
    x1 = jax.random.normal(k_x1, (BATCH, 1, 28, 28), jnp.float32)
    x2 = jax.random.normal(k_x2, (BATCH, 1, 28, 28), jnp.float32)

    @jax.jit
    def pipeline(x1, x2, params):
        # Stack both images on the batch axis -> one pass through the CNN
        # kernels (half the launches); numerically identical to two calls.
        xs = jnp.concatenate([x1, x2], axis=0)
        e = forward(xs, params)
        e1, e2 = e[:x1.shape[0]], e[x1.shape[0]:]
        probs = classify([e1, e2], params, N_IMAGES)
        return e1, e2, probs

    e1, e2, probs = pipeline(x1, x2, params)
    jax.block_until_ready((e1, e2, probs))

    # Pure-JAX reference check (f32 everywhere)
    r1 = forward_ref(x1, params)
    r2 = forward_ref(x2, params)
    rp = classify_ref([r1, r2], params)
    jax.block_until_ready((r1, r2, rp))

    assert e1.shape == (BATCH, 32 * 7 * 7) and probs.shape == (BATCH, 19)
    assert np.allclose(np.asarray(e1), np.asarray(r1), atol=5e-2, rtol=5e-2)
    assert np.allclose(np.asarray(e2), np.asarray(r2), atol=5e-2, rtol=5e-2)
    assert np.allclose(np.asarray(probs), np.asarray(rp), atol=5e-2, rtol=5e-2)

    print("KERNEL_OK")
</pallas_src>

<mosaic_0001>
module attributes {stable_mosaic.version = 11 : i64} {
  func.func @_conv_pool_kernel(%arg0: i32, %arg1: memref<1x9x3136xbf16, #tpu.memory_space<vmem>>, %arg2: memref<16x9xbf16, #tpu.memory_space<vmem>>, %arg3: memref<16x1xf32, #tpu.memory_space<vmem>>, %arg4: memref<4x16x196xf32, #tpu.memory_space<vmem>>) attributes {dimension_semantics = [#tpu.dimension_semantics<parallel>], iteration_bounds = array<i64: 1>, scalar_prefetch = 0 : i64, scratch_operands = 0 : i64, tpu.core_type = #tpu.core_type<tc>, window_params = [{transform_indices = @transform_0, window_bounds = array<i64: 1, 9, 3136>}, {pipeline_mode = #tpu.pipeline_mode<synchronous>, transform_indices = @transform_1, window_bounds = array<i64: 16, 9>}, {pipeline_mode = #tpu.pipeline_mode<synchronous>, transform_indices = @transform_2, window_bounds = array<i64: 16, 1>}, {transform_indices = @transform_3, window_bounds = array<i64: 4, 16, 196>}]} {
    %c0 = arith.constant 0 : index
    %c0_0 = arith.constant 0 : index
    %0 = vector.load %arg2[%c0, %c0_0] : memref<16x9xbf16, #tpu.memory_space<vmem>>, vector<16x9xbf16>
    %c0_1 = arith.constant 0 : index
    %c0_2 = arith.constant 0 : index
    %c0_3 = arith.constant 0 : index
    %1 = vector.load %arg1[%c0_1, %c0_2, %c0_3] : memref<1x9x3136xbf16, #tpu.memory_space<vmem>>, vector<1x9x3136xbf16>
    %2 = vector.shape_cast %1 : vector<1x9x3136xbf16> to vector<9x3136xbf16>
    %cst = arith.constant dense<0.000000e+00> : vector<16x3136xf32>
    %3 = tpu.matmul %0, %2, %cst {dimension_numbers = #tpu.dot_dimension_numbers<[1], [0], [0], [1], [0, 0, 1, 1], [], []>} : vector<16x9xbf16>, vector<9x3136xbf16>, vector<16x3136xf32> -> vector<16x3136xf32>
    %4 = vector.extract_strided_slice %3 {offsets = [0, 0], sizes = [16, 784], strides = [1, 1]} : vector<16x3136xf32> to vector<16x784xf32>
    %5 = vector.extract_strided_slice %3 {offsets = [0, 784], sizes = [16, 784], strides = [1, 1]} : vector<16x3136xf32> to vector<16x784xf32>
    %6 = arith.maximumf %4, %5 : vector<16x784xf32>
    %7 = vector.extract_strided_slice %3 {offsets = [0, 1568], sizes = [16, 784], strides = [1, 1]} : vector<16x3136xf32> to vector<16x784xf32>
    %8 = vector.extract_strided_slice %3 {offsets = [0, 2352], sizes = [16, 784], strides = [1, 1]} : vector<16x3136xf32> to vector<16x784xf32>
    %9 = arith.maximumf %7, %8 : vector<16x784xf32>
    %10 = arith.maximumf %6, %9 : vector<16x784xf32>
    %c0_4 = arith.constant 0 : index
    %c0_5 = arith.constant 0 : index
    %11 = vector.load %arg3[%c0_4, %c0_5] : memref<16x1xf32, #tpu.memory_space<vmem>>, vector<16x1xf32>
    %12 = vector.broadcast %11 : vector<16x1xf32> to vector<16x784xf32>
    %13 = arith.addf %10, %12 : vector<16x784xf32>
    %cst_6 = arith.constant 0.000000e+00 : f32
    %14 = vector.broadcast %cst_6 : f32 to vector<16x784xf32>
    %15 = arith.maximumf %13, %14 : vector<16x784xf32>
    %16 = vector.extract_strided_slice %15 {offsets = [0, 0], sizes = [16, 196], strides = [1, 1]} : vector<16x784xf32> to vector<16x196xf32>
    %c0_7 = arith.constant 0 : index
    %c0_8 = arith.constant 0 : index
    %c0_9 = arith.constant 0 : index
    %17 = vector.load %arg4[%c0_7, %c0_8, %c0_9] : memref<4x16x196xf32, #tpu.memory_space<vmem>>, vector<1x16x196xf32>
    %18 = vector.shape_cast %17 : vector<1x16x196xf32> to vector<16x196xf32>
    %19 = vector.shape_cast %16 : vector<16x196xf32> to vector<1x16x196xf32>
    tpu.vector_store %arg4[%c0_7, %c0_8, %c0_9], %19 {strides = array<i32>} : memref<4x16x196xf32, #tpu.memory_space<vmem>>, vector<1x16x196xf32>,
    %20 = vector.extract_strided_slice %15 {offsets = [0, 196], sizes = [16, 196], strides = [1, 1]} : vector<16x784xf32> to vector<16x196xf32>
    %c1 = arith.constant 1 : index
    %c0_10 = arith.constant 0 : index
    %c0_11 = arith.constant 0 : index
    %21 = vector.load %arg4[%c1, %c0_10, %c0_11] : memref<4x16x196xf32, #tpu.memory_space<vmem>>, vector<1x16x196xf32>
    %22 = vector.shape_cast %21 : vector<1x16x196xf32> to vector<16x196xf32>
    %23 = vector.shape_cast %20 : vector<16x196xf32> to vector<1x16x196xf32>
    tpu.vector_store %arg4[%c1, %c0_10, %c0_11], %23 {strides = array<i32>} : memref<4x16x196xf32, #tpu.memory_space<vmem>>, vector<1x16x196xf32>,
    %24 = vector.extract_strided_slice %15 {offsets = [0, 392], sizes = [16, 196], strides = [1, 1]} : vector<16x784xf32> to vector<16x196xf32>
    %c2 = arith.constant 2 : index
    %c0_12 = arith.constant 0 : index
    %c0_13 = arith.constant 0 : index
    %25 = vector.load %arg4[%c2, %c0_12, %c0_13] : memref<4x16x196xf32, #tpu.memory_space<vmem>>, vector<1x16x196xf32>
    %26 = vector.shape_cast %25 : vector<1x16x196xf32> to vector<16x196xf32>
    %27 = vector.shape_cast %24 : vector<16x196xf32> to vector<1x16x196xf32>
    tpu.vector_store %arg4[%c2, %c0_12, %c0_13], %27 {strides = array<i32>} : memref<4x16x196xf32, #tpu.memory_space<vmem>>, vector<1x16x196xf32>,
    %28 = vector.extract_strided_slice %15 {offsets = [0, 588], sizes = [16, 196], strides = [1, 1]} : vector<16x784xf32> to vector<16x196xf32>
    %c3 = arith.constant 3 : index
    %c0_14 = arith.constant 0 : index
    %c0_15 = arith.constant 0 : index
    %29 = vector.load %arg4[%c3, %c0_14, %c0_15] : memref<4x16x196xf32, #tpu.memory_space<vmem>>, vector<1x16x196xf32>
    %30 = vector.shape_cast %29 : vector<1x16x196xf32> to vector<16x196xf32>
    %31 = vector.shape_cast %28 : vector<16x196xf32> to vector<1x16x196xf32>
    tpu.vector_store %arg4[%c3, %c0_14, %c0_15], %31 {strides = array<i32>} : memref<4x16x196xf32, #tpu.memory_space<vmem>>, vector<1x16x196xf32>,
    return
  }
  func.func @transform_0(%arg0: i32) -> (i32, i32, i32) {
    %c0_i32 = arith.constant 0 : i32
    %c0_i32_0 = arith.constant 0 : i32
    %c0_i32_1 = arith.constant 0 : i32
    return %arg0, %c0_i32, %c0_i32_0 : i32, i32, i32
  }
  func.func @transform_1(%arg0: i32) -> (i32, i32) {
    %c0_i32 = arith.constant 0 : i32
    %c0_i32_0 = arith.constant 0 : i32
    %c0_i32_1 = arith.constant 0 : i32
    return %c0_i32, %c0_i32_0 : i32, i32
  }
  func.func @transform_2(%arg0: i32) -> (i32, i32) {
    %c0_i32 = arith.constant 0 : i32
    %c0_i32_0 = arith.constant 0 : i32
    %c0_i32_1 = arith.constant 0 : i32
    return %c0_i32, %c0_i32_0 : i32, i32
  }
  func.func @transform_3(%arg0: i32) -> (i32, i32, i32) {
    %c0_i32 = arith.constant 0 : i32
    %c0_i32_0 = arith.constant 0 : i32
    %c0_i32_1 = arith.constant 0 : i32
    return %arg0, %c0_i32, %c0_i32_0 : i32, i32, i32
  }
}

module attributes {stable_mosaic.version = 11 : i64} {
  func.func @_conv_pool_kernel(%arg0: i32, %arg1: memref<1x144x784xbf16, #tpu.memory_space<vmem>>, %arg2: memref<32x144xbf16, #tpu.memory_space<vmem>>, %arg3: memref<32x1xf32, #tpu.memory_space<vmem>>, %arg4: memref<4x32x49xf32, #tpu.memory_space<vmem>>) attributes {dimension_semantics = [#tpu.dimension_semantics<parallel>], iteration_bounds = array<i64: 1>, scalar_prefetch = 0 : i64, scratch_operands = 0 : i64, tpu.core_type = #tpu.core_type<tc>, window_params = [{transform_indices = @transform_0, window_bounds = array<i64: 1, 144, 784>}, {pipeline_mode = #tpu.pipeline_mode<synchronous>, transform_indices = @transform_1, window_bounds = array<i64: 32, 144>}, {pipeline_mode = #tpu.pipeline_mode<synchronous>, transform_indices = @transform_2, window_bounds = array<i64: 32, 1>}, {transform_indices = @transform_3, window_bounds = array<i64: 4, 32, 49>}]} {
    %c0 = arith.constant 0 : index
    %c0_0 = arith.constant 0 : index
    %0 = vector.load %arg2[%c0, %c0_0] : memref<32x144xbf16, #tpu.memory_space<vmem>>, vector<32x144xbf16>
    %c0_1 = arith.constant 0 : index
    %c0_2 = arith.constant 0 : index
    %c0_3 = arith.constant 0 : index
    %1 = vector.load %arg1[%c0_1, %c0_2, %c0_3] : memref<1x144x784xbf16, #tpu.memory_space<vmem>>, vector<1x144x784xbf16>
    %2 = vector.shape_cast %1 : vector<1x144x784xbf16> to vector<144x784xbf16>
    %cst = arith.constant dense<0.000000e+00> : vector<32x784xf32>
    %3 = tpu.matmul %0, %2, %cst {dimension_numbers = #tpu.dot_dimension_numbers<[1], [0], [0], [1], [0, 0, 1, 1], [], []>} : vector<32x144xbf16>, vector<144x784xbf16>, vector<32x784xf32> -> vector<32x784xf32>
    %4 = vector.extract_strided_slice %3 {offsets = [0, 0], sizes = [32, 196], strides = [1, 1]} : vector<32x784xf32> to vector<32x196xf32>
    %5 = vector.extract_strided_slice %3 {offsets = [0, 196], sizes = [32, 196], strides = [1, 1]} : vector<32x784xf32> to vector<32x196xf32>
    %6 = arith.maximumf %4, %5 : vector<32x196xf32>
    %7 = vector.extract_strided_slice %3 {offsets = [0, 392], sizes = [32, 196], strides = [1, 1]} : vector<32x784xf32> to vector<32x196xf32>
    %8 = vector.extract_strided_slice %3 {offsets = [0, 588], sizes = [32, 196], strides = [1, 1]} : vector<32x784xf32> to vector<32x196xf32>
    %9 = arith.maximumf %7, %8 : vector<32x196xf32>
    %10 = arith.maximumf %6, %9 : vector<32x196xf32>
    %c0_4 = arith.constant 0 : index
    %c0_5 = arith.constant 0 : index
    %11 = vector.load %arg3[%c0_4, %c0_5] : memref<32x1xf32, #tpu.memory_space<vmem>>, vector<32x1xf32>
    %12 = vector.broadcast %11 : vector<32x1xf32> to vector<32x196xf32>
    %13 = arith.addf %10, %12 : vector<32x196xf32>
    %cst_6 = arith.constant 0.000000e+00 : f32
    %14 = vector.broadcast %cst_6 : f32 to vector<32x196xf32>
    %15 = arith.maximumf %13, %14 : vector<32x196xf32>
    %16 = vector.extract_strided_slice %15 {offsets = [0, 0], sizes = [32, 49], strides = [1, 1]} : vector<32x196xf32> to vector<32x49xf32>
    %c0_7 = arith.constant 0 : index
    %c0_8 = arith.constant 0 : index
    %c0_9 = arith.constant 0 : index
    %17 = vector.load %arg4[%c0_7, %c0_8, %c0_9] : memref<4x32x49xf32, #tpu.memory_space<vmem>>, vector<1x32x49xf32>
    %18 = vector.shape_cast %17 : vector<1x32x49xf32> to vector<32x49xf32>
    %19 = vector.shape_cast %16 : vector<32x49xf32> to vector<1x32x49xf32>
    tpu.vector_store %arg4[%c0_7, %c0_8, %c0_9], %19 {strides = array<i32>} : memref<4x32x49xf32, #tpu.memory_space<vmem>>, vector<1x32x49xf32>,
    %20 = vector.extract_strided_slice %15 {offsets = [0, 49], sizes = [32, 49], strides = [1, 1]} : vector<32x196xf32> to vector<32x49xf32>
    %c1 = arith.constant 1 : index
    %c0_10 = arith.constant 0 : index
    %c0_11 = arith.constant 0 : index
    %21 = vector.load %arg4[%c1, %c0_10, %c0_11] : memref<4x32x49xf32, #tpu.memory_space<vmem>>, vector<1x32x49xf32>
    %22 = vector.shape_cast %21 : vector<1x32x49xf32> to vector<32x49xf32>
    %23 = vector.shape_cast %20 : vector<32x49xf32> to vector<1x32x49xf32>
    tpu.vector_store %arg4[%c1, %c0_10, %c0_11], %23 {strides = array<i32>} : memref<4x32x49xf32, #tpu.memory_space<vmem>>, vector<1x32x49xf32>,
    %24 = vector.extract_strided_slice %15 {offsets = [0, 98], sizes = [32, 49], strides = [1, 1]} : vector<32x196xf32> to vector<32x49xf32>
    %c2 = arith.constant 2 : index
    %c0_12 = arith.constant 0 : index
    %c0_13 = arith.constant 0 : index
    %25 = vector.load %arg4[%c2, %c0_12, %c0_13] : memref<4x32x49xf32, #tpu.memory_space<vmem>>, vector<1x32x49xf32>
    %26 = vector.shape_cast %25 : vector<1x32x49xf32> to vector<32x49xf32>
    %27 = vector.shape_cast %24 : vector<32x49xf32> to vector<1x32x49xf32>
    tpu.vector_store %arg4[%c2, %c0_12, %c0_13], %27 {strides = array<i32>} : memref<4x32x49xf32, #tpu.memory_space<vmem>>, vector<1x32x49xf32>,
    %28 = vector.extract_strided_slice %15 {offsets = [0, 147], sizes = [32, 49], strides = [1, 1]} : vector<32x196xf32> to vector<32x49xf32>
    %c3 = arith.constant 3 : index
    %c0_14 = arith.constant 0 : index
    %c0_15 = arith.constant 0 : index
    %29 = vector.load %arg4[%c3, %c0_14, %c0_15] : memref<4x32x49xf32, #tpu.memory_space<vmem>>, vector<1x32x49xf32>
    %30 = vector.shape_cast %29 : vector<1x32x49xf32> to vector<32x49xf32>
    %31 = vector.shape_cast %28 : vector<32x49xf32> to vector<1x32x49xf32>
    tpu.vector_store %arg4[%c3, %c0_14, %c0_15], %31 {strides = array<i32>} : memref<4x32x49xf32, #tpu.memory_space<vmem>>, vector<1x32x49xf32>,
    return
  }
  func.func @transform_0(%arg0: i32) -> (i32, i32, i32) {
    %c0_i32 = arith.constant 0 : i32
    %c0_i32_0 = arith.constant 0 : i32
    %c0_i32_1 = arith.constant 0 : i32
    return %arg0, %c0_i32, %c0_i32_0 : i32, i32, i32
  }
  func.func @transform_1(%arg0: i32) -> (i32, i32) {
    %c0_i32 = arith.constant 0 : i32
    %c0_i32_0 = arith.constant 0 : i32
    %c0_i32_1 = arith.constant 0 : i32
    return %c0_i32, %c0_i32_0 : i32, i32
  }
  func.func @transform_2(%arg0: i32) -> (i32, i32) {
    %c0_i32 = arith.constant 0 : i32
    %c0_i32_0 = arith.constant 0 : i32
    %c0_i32_1 = arith.constant 0 : i32
    return %c0_i32, %c0_i32_0 : i32, i32
  }
  func.func @transform_3(%arg0: i32) -> (i32, i32, i32) {
    %c0_i32 = arith.constant 0 : i32
    %c0_i32_0 = arith.constant 0 : i32
    %c0_i32_1 = arith.constant 0 : i32
    return %arg0, %c0_i32, %c0_i32_0 : i32, i32, i32
  }
}

module attributes {stable_mosaic.version = 11 : i64} {
  func.func @_mlp_softmax_kernel(%arg0: i32, %arg1: memref<2x3136xbf16, #tpu.memory_space<vmem>>, %arg2: memref<3136x128xbf16, #tpu.memory_space<vmem>>, %arg3: memref<1x128xf32, #tpu.memory_space<vmem>>, %arg4: memref<128x64xbf16, #tpu.memory_space<vmem>>, %arg5: memref<1x64xf32, #tpu.memory_space<vmem>>, %arg6: memref<64x128xbf16, #tpu.memory_space<vmem>>, %arg7: memref<1x128xf32, #tpu.memory_space<vmem>>, %arg8: memref<2x128xf32, #tpu.memory_space<vmem>>) attributes {dimension_semantics = [#tpu.dimension_semantics<parallel>], iteration_bounds = array<i64: 1>, scalar_prefetch = 0 : i64, scratch_operands = 0 : i64, tpu.core_type = #tpu.core_type<tc>, window_params = [{transform_indices = @transform_0, window_bounds = array<i64: 2, 3136>}, {pipeline_mode = #tpu.pipeline_mode<synchronous>, transform_indices = @transform_1, window_bounds = array<i64: 3136, 128>}, {pipeline_mode = #tpu.pipeline_mode<synchronous>, transform_indices = @transform_2, window_bounds = array<i64: 1, 128>}, {pipeline_mode = #tpu.pipeline_mode<synchronous>, transform_indices = @transform_3, window_bounds = array<i64: 128, 64>}, {pipeline_mode = #tpu.pipeline_mode<synchronous>, transform_indices = @transform_4, window_bounds = array<i64: 1, 64>}, {pipeline_mode = #tpu.pipeline_mode<synchronous>, transform_indices = @transform_5, window_bounds = array<i64: 64, 128>}, {pipeline_mode = #tpu.pipeline_mode<synchronous>, transform_indices = @transform_6, window_bounds = array<i64: 1, 128>}, {transform_indices = @transform_7, window_bounds = array<i64: 2, 128>}]} {
    %c0 = arith.constant 0 : index
    %c0_0 = arith.constant 0 : index
    %0 = vector.load %arg1[%c0, %c0_0] : memref<2x3136xbf16, #tpu.memory_space<vmem>>, vector<2x3136xbf16>
    %c0_1 = arith.constant 0 : index
    %c0_2 = arith.constant 0 : index
    %1 = vector.load %arg2[%c0_1, %c0_2] : memref<3136x128xbf16, #tpu.memory_space<vmem>>, vector<3136x128xbf16>
    %cst = arith.constant dense<0.000000e+00> : vector<2x128xf32>
    %2 = tpu.matmul %0, %1, %cst {dimension_numbers = #tpu.dot_dimension_numbers<[1], [0], [0], [1], [0, 0, 1, 1], [], []>} : vector<2x3136xbf16>, vector<3136x128xbf16>, vector<2x128xf32> -> vector<2x128xf32>
    %c0_3 = arith.constant 0 : index
    %c0_4 = arith.constant 0 : index
    %3 = vector.load %arg3[%c0_3, %c0_4] : memref<1x128xf32, #tpu.memory_space<vmem>>, vector<1x128xf32>
    %4 = vector.broadcast %3 : vector<1x128xf32> to vector<2x128xf32>
    %5 = arith.addf %2, %4 : vector<2x128xf32>
    %cst_5 = arith.constant 0.000000e+00 : f32
    %6 = vector.broadcast %cst_5 : f32 to vector<2x128xf32>
    %7 = arith.maximumf %5, %6 : vector<2x128xf32>
    %8 = arith.truncf %7 : vector<2x128xf32> to vector<2x128xbf16>
    %c0_6 = arith.constant 0 : index
    %c0_7 = arith.constant 0 : index
    %9 = vector.load %arg4[%c0_6, %c0_7] : memref<128x64xbf16, #tpu.memory_space<vmem>>, vector<128x64xbf16>
    %cst_8 = arith.constant dense<0.000000e+00> : vector<2x64xf32>
    %10 = tpu.matmul %8, %9, %cst_8 {dimension_numbers = #tpu.dot_dimension_numbers<[1], [0], [0], [1], [0, 0, 1, 1], [], []>} : vector<2x128xbf16>, vector<128x64xbf16>, vector<2x64xf32> -> vector<2x64xf32>
    %c0_9 = arith.constant 0 : index
    %c0_10 = arith.constant 0 : index
    %11 = vector.load %arg5[%c0_9, %c0_10] : memref<1x64xf32, #tpu.memory_space<vmem>>, vector<1x64xf32>
    %12 = vector.broadcast %11 : vector<1x64xf32> to vector<2x64xf32>
    %13 = arith.addf %10, %12 : vector<2x64xf32>
    %cst_11 = arith.constant 0.000000e+00 : f32
    %14 = vector.broadcast %cst_11 : f32 to vector<2x64xf32>
    %15 = arith.maximumf %13, %14 : vector<2x64xf32>
    %16 = arith.truncf %15 : vector<2x64xf32> to vector<2x64xbf16>
    %c0_12 = arith.constant 0 : index
    %c0_13 = arith.constant 0 : index
    %17 = vector.load %arg6[%c0_12, %c0_13] : memref<64x128xbf16, #tpu.memory_space<vmem>>, vector<64x128xbf16>
    %cst_14 = arith.constant dense<0.000000e+00> : vector<2x128xf32>
    %18 = tpu.matmul %16, %17, %cst_14 {dimension_numbers = #tpu.dot_dimension_numbers<[1], [0], [0], [1], [0, 0, 1, 1], [], []>} : vector<2x64xbf16>, vector<64x128xbf16>, vector<2x128xf32> -> vector<2x128xf32>
    %c0_15 = arith.constant 0 : index
    %c0_16 = arith.constant 0 : index
    %19 = vector.load %arg7[%c0_15, %c0_16] : memref<1x128xf32, #tpu.memory_space<vmem>>, vector<1x128xf32>
    %20 = vector.broadcast %19 : vector<1x128xf32> to vector<2x128xf32>
    %21 = arith.addf %18, %20 : vector<2x128xf32>
    %cst_17 = arith.constant dense<0xFF800000> : vector<2xf32>
    %22 = vector.multi_reduction <maximumf>, %21, %cst_17 [1] : vector<2x128xf32> to vector<2xf32>
    %23 = vector.shape_cast %22 : vector<2xf32> to vector<2x1xf32>
    %24 = vector.broadcast %23 : vector<2x1xf32> to vector<2x128xf32>
    %25 = arith.subf %21, %24 : vector<2x128xf32>
    %26 = math.exp %25 : vector<2x128xf32>
    %cst_18 = arith.constant dense<0.000000e+00> : vector<2xf32>
    %27 = vector.multi_reduction <add>, %26, %cst_18 [1] : vector<2x128xf32> to vector<2xf32>
    %28 = vector.shape_cast %27 : vector<2xf32> to vector<2x1xf32>
    %29 = tpu.reciprocal %28 {approx = true} : vector<2x1xf32> -> vector<2x1xf32>
    %30 = vector.broadcast %29 : vector<2x1xf32> to vector<2x128xf32>
    %31 = arith.mulf %26, %30 : vector<2x128xf32>
    %c0_19 = arith.constant 0 : index
    %c0_20 = arith.constant 0 : index
    %32 = vector.load %arg8[%c0_19, %c0_20] : memref<2x128xf32, #tpu.memory_space<vmem>>, vector<2x128xf32>
    tpu.vector_store %arg8[%c0_19, %c0_20], %31 {strides = array<i32>} : memref<2x128xf32, #tpu.memory_space<vmem>>, vector<2x128xf32>,
    return
  }
  func.func @transform_0(%arg0: i32) -> (i32, i32) {
    %c0_i32 = arith.constant 0 : i32
    %c0_i32_0 = arith.constant 0 : i32
    return %arg0, %c0_i32 : i32, i32
  }
  func.func @transform_1(%arg0: i32) -> (i32, i32) {
    %c0_i32 = arith.constant 0 : i32
    %c0_i32_0 = arith.constant 0 : i32
    %c0_i32_1 = arith.constant 0 : i32
    return %c0_i32, %c0_i32_0 : i32, i32
  }
  func.func @transform_2(%arg0: i32) -> (i32, i32) {
    %c0_i32 = arith.constant 0 : i32
    %c0_i32_0 = arith.constant 0 : i32
    %c0_i32_1 = arith.constant 0 : i32
    return %c0_i32, %c0_i32_0 : i32, i32
  }
  func.func @transform_3(%arg0: i32) -> (i32, i32) {
    %c0_i32 = arith.constant 0 : i32
    %c0_i32_0 = arith.constant 0 : i32
    %c0_i32_1 = arith.constant 0 : i32
    return %c0_i32, %c0_i32_0 : i32, i32
  }
  func.func @transform_4(%arg0: i32) -> (i32, i32) {
    %c0_i32 = arith.constant 0 : i32
    %c0_i32_0 = arith.constant 0 : i32
    %c0_i32_1 = arith.constant 0 : i32
    return %c0_i32, %c0_i32_0 : i32, i32
  }
  func.func @transform_5(%arg0: i32) -> (i32, i32) {
    %c0_i32 = arith.constant 0 : i32
    %c0_i32_0 = arith.constant 0 : i32
    %c0_i32_1 = arith.constant 0 : i32
    return %c0_i32, %c0_i32_0 : i32, i32
  }
  func.func @transform_6(%arg0: i32) -> (i32, i32) {
    %c0_i32 = arith.constant 0 : i32
    %c0_i32_0 = arith.constant 0 : i32
    %c0_i32_1 = arith.constant 0 : i32
    return %c0_i32, %c0_i32_0 : i32, i32
  }
  func.func @transform_7(%arg0: i32) -> (i32, i32) {
    %c0_i32 = arith.constant 0 : i32
    %c0_i32_0 = arith.constant 0 : i32
    return %arg0, %c0_i32 : i32, i32
  }
}

</mosaic_0001>

<llo_original>
// kernel: pipeline.3
$region0: #{pipeline.3}
  #allocation0 [shape = 'u32[]', space=smem, size = 0x4, offset = 0x4, fixed_abs, tag = 'smem constant byte address 0x4 - core index']
  #allocation1 [shape = 'u32[144,128]{1,0:T(1,128)}', space=vmem, size = 0x12000, scoped, tag = 'internal scratch']
  %s0 = inlined_call_operand.vmem [shape: bf16[1,9,3136], index: 0, kind: input, shape index: {}]
  %s1 = inlined_call_operand.vmem [shape: bf16[16,9], index: 1, kind: input, shape index: {}]
  %s2 = inlined_call_operand.vmem [shape: f32[16,1], index: 2, kind: input, shape index: {}]
  %s3 = inlined_call_operand.vmem [shape: f32[4,16,196], index: 3, kind: output, shape index: {}]
  %s4 = sld [smem:[#allocation0]]
  $region22: #{pipeline.3} parent=0
    _
  %s6 = ssub.s32 1, %s4
  %s7 = scalar_select 0, %s6, %s4
  // Predicated region
  $region2: #{pipeline.3} parent=0 // pred_check
    _
  $region3: #{pipeline.3} parent=0 // pred_check_branch
    %9 = sbr.rel (0) target = $region5
  $region4: #{pipeline.3} parent=0 // pred_region
    _
  $region5: #{pipeline.3} parent=0 // pred_fallthru
    _
  // Predicated region
  $region6: #{pipeline.3} parent=0 // pred_check
    _
  $region7: #{pipeline.3} parent=0 // pred_check_branch
    %11 = sbr.rel (0) target = $region9
  $region8: #{pipeline.3} parent=0 // pred_region
    _
  $region9: #{pipeline.3} parent=0 // pred_fallthru
    _
  // Predicated region
  $region10: #{pipeline.3} parent=0 // pred_check
    _
  $region11: #{pipeline.3} parent=0 // pred_check_branch
    %13 = sbr.rel (0) target = $region13
  $region12: #{pipeline.3} parent=0 // pred_region
    _
  $region13: #{pipeline.3} parent=0 // pred_fallthru
    _
  %v15 = vld [vmem:[%s1] sm:$0xf]
  %v16 = vld [vmem:[%s1 + $0x4] sm:$0xf]
  %v17 = vld [vmem:[%s0] sm:$0xff]
  %v18 = vld [vmem:[%s0 + $0x8] sm:$0xff]
  %v19 = vld [vmem:[%s0 + $0x10] sm:$0xff]
  %v20 = vld [vmem:[%s0 + $0x18] sm:$0xff]
  %v21 = vld [vmem:[%s0 + $0x20] sm:$0xff]
  %v22 = vld [vmem:[%s0 + $0x28] sm:$0xff]
  %v23 = vld [vmem:[%s0 + $0x30] sm:$0xff]
  %v24 = vld [vmem:[%s0 + $0x38] sm:$0xff]
  %v25 = vld [vmem:[%s0 + $0x40] sm:$0xff]
  %v26 = vld [vmem:[%s0 + $0x48] sm:$0xff]
  %v27 = vld [vmem:[%s0 + $0x50] sm:$0xff]
  %v28 = vld [vmem:[%s0 + $0x58] sm:$0xff]
  %v29 = vld [vmem:[%s0 + $0x60] sm:$0xf]
  %v30 = vld [vmem:[%s0 + $0x64] sm:$0x11]
  %v31 = vld [vmem:[%s0 + $0x6c] sm:$0x11]
  %v32 = vld [vmem:[%s0 + $0x74] sm:$0x11]
  %v33 = vld [vmem:[%s0 + $0x7c] sm:$0x11]
  %v34 = vld [vmem:[%s0 + $0x84] sm:$0x11]
  %v35 = vld [vmem:[%s0 + $0x8c] sm:$0x11]
  %v36 = vld [vmem:[%s0 + $0x94] sm:$0x11]
  %v37 = vld [vmem:[%s0 + $0x9c] sm:$0x11]
  %v38 = vld [vmem:[%s0 + $0xa4] sm:$0x11]
  %v39 = vld [vmem:[%s0 + $0xac] sm:$0x11]
  %v40 = vld [vmem:[%s0 + $0xb4] sm:$0x11]
  %v41 = vld [vmem:[%s0 + $0xbc] sm:$0x11]
  %v42 = vld [vmem:[%s0 + $0xc4] sm:$0x1]
  %v45 = vunpack.c.l.b16 %v15
  %v46 = vunpack.c.l.b16 %v16
  %v47 = vpack.c.b16 %v46, %v45
  %v74 = vunpack.c.l.b16 %v17
  %v75 = vunpack.c.h.b16 %v17
  %v76 = vunpack.c.l.b16 %v18
  %v77 = vunpack.c.h.b16 %v18
  %v78 = vunpack.c.l.b16 %v19
  %v79 = vunpack.c.h.b16 %v19
  %v80 = vunpack.c.l.b16 %v20
  %v81 = vunpack.c.h.b16 %v20
  %v82 = vunpack.c.l.b16 %v21
  %v83 = vunpack.c.h.b16 %v21
  %v84 = vunpack.c.l.b16 %v22
  %v85 = vunpack.c.h.b16 %v22
  %v86 = vunpack.c.l.b16 %v23
  %v87 = vunpack.c.h.b16 %v23
  %v88 = vunpack.c.l.b16 %v24
  %v89 = vunpack.c.h.b16 %v24
  %v90 = vunpack.c.l.b16 %v25
  %v91 = vunpack.c.h.b16 %v25
  %v92 = vunpack.c.l.b16 %v26
  %v93 = vunpack.c.h.b16 %v26
  %v94 = vunpack.c.l.b16 %v27
  %v95 = vunpack.c.h.b16 %v27
  %v96 = vunpack.c.l.b16 %v28
  %v97 = vunpack.c.h.b16 %v28
  %v98 = vunpack.c.l.b16 %v29
  %v99 = vunpack.c.l.b16 %v30
  %v100 = vunpack.c.h.b16 %v30
  %v101 = vunpack.c.l.b16 %v31
  %v102 = vunpack.c.h.b16 %v31
  %v103 = vunpack.c.l.b16 %v32
  %v104 = vunpack.c.h.b16 %v32
  %v105 = vunpack.c.l.b16 %v33
  %v106 = vunpack.c.h.b16 %v33
  %v107 = vunpack.c.l.b16 %v34
  %v108 = vunpack.c.h.b16 %v34
  %v109 = vunpack.c.l.b16 %v35
  %v110 = vunpack.c.h.b16 %v35
  %v111 = vunpack.c.l.b16 %v36
  %v112 = vunpack.c.h.b16 %v36
  %v113 = vunpack.c.l.b16 %v37
  %v114 = vunpack.c.h.b16 %v37
  %v115 = vunpack.c.l.b16 %v38
  %v116 = vunpack.c.h.b16 %v38
  %v117 = vunpack.c.l.b16 %v39
  %v118 = vunpack.c.h.b16 %v39
  %v119 = vunpack.c.l.b16 %v40
  %v120 = vunpack.c.h.b16 %v40
  %v121 = vunpack.c.l.b16 %v41
  %v122 = vunpack.c.h.b16 %v41
  %v123 = vunpack.c.l.b16 %v42
  %v124 = vpack.c.b16 %v99, %v74
  %v125 = vpack.c.b16 %v100, %v75
  %v126 = vpack.c.b16 %v101, %v76
  %v127 = vpack.c.b16 %v102, %v77
  %v128 = vpack.c.b16 %v103, %v78
  %v129 = vpack.c.b16 %v104, %v79
  %v130 = vpack.c.b16 %v105, %v80
  %v131 = vpack.c.b16 %v106, %v81
  %v132 = vpack.c.b16 %v107, %v82
  %v133 = vpack.c.b16 %v108, %v83
  %v134 = vpack.c.b16 %v109, %v84
  %v135 = vpack.c.b16 %v110, %v85
  %v136 = vpack.c.b16 %v111, %v86
  %v137 = vpack.c.b16 %v112, %v87
  %v138 = vpack.c.b16 %v113, %v88
  %v139 = vpack.c.b16 %v114, %v89
  %v140 = vpack.c.b16 %v115, %v90
  %v141 = vpack.c.b16 %v116, %v91
  %v142 = vpack.c.b16 %v117, %v92
  %v143 = vpack.c.b16 %v118, %v93
  %v144 = vpack.c.b16 %v119, %v94
  %v145 = vpack.c.b16 %v120, %v95
  %v146 = vpack.c.b16 %v121, %v96
  %v147 = vpack.c.b16 %v122, %v97
  %v148 = vpack.c.b16 %v123, %v98
  %vm149 = vcmask 72704
  %v151 = vsel %vm149, %v47, 0
  %vm153 = vcmask 1043456
  %vm154 = vcmask 1044480
  %v155 = vsel %vm153, 4294967295, 65535
  %v156 = vsel %vm154, %v155, 0
  %v158 = vand.u32 %v124, %v156
  %v161 = vand.u32 %v125, %v156
  %v164 = vand.u32 %v126, %v156
  %v167 = vand.u32 %v127, %v156
  %v170 = vand.u32 %v128, %v156
  %v173 = vand.u32 %v129, %v156
  %v176 = vand.u32 %v130, %v156
  %v179 = vand.u32 %v131, %v156
  %v182 = vand.u32 %v132, %v156
  %v185 = vand.u32 %v133, %v156
  %v188 = vand.u32 %v134, %v156
  %v191 = vand.u32 %v135, %v156
  %v194 = vand.u32 %v136, %v156
  %v197 = vand.u32 %v137, %v156
  %v200 = vand.u32 %v138, %v156
  %v203 = vand.u32 %v139, %v156
  %v206 = vand.u32 %v140, %v156
  %v209 = vand.u32 %v141, %v156
  %v212 = vand.u32 %v142, %v156
  %v215 = vand.u32 %v143, %v156
  %v218 = vand.u32 %v144, %v156
  %v221 = vand.u32 %v145, %v156
  %v224 = vand.u32 %v146, %v156
  %v227 = vand.u32 %v147, %v156
  %v230 = vand.u32 %v148, %v156
  %232 = vmatprep.subr.bf16.mxu0 %v161
  %233 = vmatpush1.bf16.msra.mxu0 %v158
  %234 = vmatprep.subr.bf16.mxu0 0
  %235 = vmatpush1.bf16.msra.mxu0 0
  %236 = vmatprep.subr.bf16.mxu0 0
  %237 = vmatpush1.bf16.msra.mxu0 0
  %238 = vmatprep.subr.bf16.mxu0 0
  %239 = vmatpush1.bf16.msra.mxu0 0
  %240 = vmatprep.subr.bf16.mxu0 0
  %241 = vmatpush1.bf16.msra.mxu0 0
  %242 = vmatprep.subr.bf16.mxu0 0
  %243 = vmatpush1.bf16.msra.mxu0 0
  %244 = vmatprep.subr.bf16.mxu0 0
  %245 = vmatpush1.bf16.msra.mxu0 0
  %246 = vmatprep.subr.bf16.mxu0 0
  %247 = vmatpush1.bf16.msra.mxu0 0
  %248 = vmatprep.subr.bf16.mxu0 0
  %249 = vmatpush1.bf16.msra.mxu0 0
  %250 = vmatprep.subr.bf16.mxu0 0
  %251 = vmatpush1.bf16.msra.mxu0 0
  %252 = vmatprep.subr.bf16.mxu0 0
  %253 = vmatpush1.bf16.msra.mxu0 0
  %254 = vmatprep.subr.bf16.mxu0 0
  %255 = vmatpush1.bf16.msra.mxu0 0
  %256 = vmatprep.subr.bf16.mxu0 0
  %257 = vmatpush1.bf16.msra.mxu0 0
  %258 = vmatprep.subr.bf16.mxu0 0
  %259 = vmatpush1.bf16.msra.mxu0 0
  %260 = vmatprep.subr.bf16.mxu0 0
  %261 = vmatpush1.bf16.msra.mxu0 0
  %262 = vmatprep.subr.bf16.mxu0 0
  %263 = vmatpush1.bf16.msra.mxu0 0
  %264 = vmatprep.mubr.bf16.mxu0 0
  %265 = vmatmul.mubr.bf16.gmra.mrb[0].mxu0 %v151
  %v266 = vpop.f32.mrb[0].mxu0
  %v267 = vadd.f32 0.0, %v266
  %v268 = vpop.f32.mrb[0].mxu0
  %v269 = vadd.f32 0.0, %v268
  %v270 = vpop.f32.mrb[0].mxu0
  %v271 = vadd.f32 0.0, %v270
  %v272 = vpop.f32.mrb[0].mxu0
  %v273 = vadd.f32 0.0, %v272
  %274 = vdwg.mxu0
  %275 = vmatprep.subr.bf16.mxu0 %v167
  %276 = vmatpush1.bf16.msra.mxu0 %v164
  %277 = vmatprep.subr.bf16.mxu0 0
  %278 = vmatpush1.bf16.msra.mxu0 0
  %279 = vmatprep.subr.bf16.mxu0 0
  %280 = vmatpush1.bf16.msra.mxu0 0
  %281 = vmatprep.subr.bf16.mxu0 0
  %282 = vmatpush1.bf16.msra.mxu0 0
  %283 = vmatprep.subr.bf16.mxu0 0
  %284 = vmatpush1.bf16.msra.mxu0 0
  %285 = vmatprep.subr.bf16.mxu0 0
  %286 = vmatpush1.bf16.msra.mxu0 0
  %287 = vmatprep.subr.bf16.mxu0 0
  %288 = vmatpush1.bf16.msra.mxu0 0
  %289 = vmatprep.subr.bf16.mxu0 0
  %290 = vmatpush1.bf16.msra.mxu0 0
  %291 = vmatprep.subr.bf16.mxu0 0
  %292 = vmatpush1.bf16.msra.mxu0 0
  %293 = vmatprep.subr.bf16.mxu0 0
  %294 = vmatpush1.bf16.msra.mxu0 0
  %295 = vmatprep.subr.bf16.mxu0 0
  %296 = vmatpush1.bf16.msra.mxu0 0
  %297 = vmatprep.subr.bf16.mxu0 0
  %298 = vmatpush1.bf16.msra.mxu0 0
  %299 = vmatprep.subr.bf16.mxu0 0
  %300 = vmatpush1.bf16.msra.mxu0 0
  %301 = vmatprep.subr.bf16.mxu0 0
  %302 = vmatpush1.bf16.msra.mxu0 0
  %303 = vmatprep.subr.bf16.mxu0 0
  %304 = vmatpush1.bf16.msra.mxu0 0
  %305 = vmatprep.subr.bf16.mxu0 0
  %306 = vmatpush1.bf16.msra.mxu0 0
  %307 = vmatprep.mubr.bf16.mxu0 0
  %308 = vmatmul.mubr.bf16.gmra.mrb[0].mxu0 %v151
  %v309 = vpop.f32.mrb[0].mxu0
  %v310 = vadd.f32 0.0, %v309
  %v311 = vpop.f32.mrb[0].mxu0
  %v312 = vadd.f32 0.0, %v311
  %v313 = vpop.f32.mrb[0].mxu0
  %v314 = vadd.f32 0.0, %v313
  %v315 = vpop.f32.mrb[0].mxu0
  %v316 = vadd.f32 0.0, %v315
  %317 = vdwg.mxu0
  %318 = vmatprep.subr.bf16.mxu0 %v173
  %319 = vmatpush1.bf16.msra.mxu0 %v170
  %320 = vmatprep.subr.bf16.mxu0 0
  %321 = vmatpush1.bf16.msra.mxu0 0
  %322 = vmatprep.subr.bf16.mxu0 0
  %323 = vmatpush1.bf16.msra.mxu0 0
  %324 = vmatprep.subr.bf16.mxu0 0
  %325 = vmatpush1.bf16.msra.mxu0 0
  %326 = vmatprep.subr.bf16.mxu0 0
  %327 = vmatpush1.bf16.msra.mxu0 0
  %328 = vmatprep.subr.bf16.mxu0 0
  %329 = vmatpush1.bf16.msra.mxu0 0
  %330 = vmatprep.subr.bf16.mxu0 0
  %331 = vmatpush1.bf16.msra.mxu0 0
  %332 = vmatprep.subr.bf16.mxu0 0
  %333 = vmatpush1.bf16.msra.mxu0 0
  %334 = vmatprep.subr.bf16.mxu0 0
  %335 = vmatpush1.bf16.msra.mxu0 0
  %336 = vmatprep.subr.bf16.mxu0 0
  %337 = vmatpush1.bf16.msra.mxu0 0
  %338 = vmatprep.subr.bf16.mxu0 0
  %339 = vmatpush1.bf16.msra.mxu0 0
  %340 = vmatprep.subr.bf16.mxu0 0
  %341 = vmatpush1.bf16.msra.mxu0 0
  %342 = vmatprep.subr.bf16.mxu0 0
  %343 = vmatpush1.bf16.msra.mxu0 0
  %344 = vmatprep.subr.bf16.mxu0 0
  %345 = vmatpush1.bf16.msra.mxu0 0
  %346 = vmatprep.subr.bf16.mxu0 0
  %347 = vmatpush1.bf16.msra.mxu0 0
  %348 = vmatprep.subr.bf16.mxu0 0
  %349 = vmatpush1.bf16.msra.mxu0 0
  %350 = vmatprep.mubr.bf16.mxu0 0
  %351 = vmatmul.mubr.bf16.gmra.mrb[0].mxu0 %v151
  %v352 = vpop.f32.mrb[0].mxu0
  %v353 = vadd.f32 0.0, %v352
  %v354 = vpop.f32.mrb[0].mxu0
  %v355 = vadd.f32 0.0, %v354
  %v356 = vpop.f32.mrb[0].mxu0
  %v357 = vadd.f32 0.0, %v356
  %v358 = vpop.f32.mrb[0].mxu0
  %v359 = vadd.f32 0.0, %v358
  %360 = vdwg.mxu0
  %361 = vmatprep.subr.bf16.mxu0 %v179
  %362 = vmatpush1.bf16.msra.mxu0 %v176
  %363 = vmatprep.subr.bf16.mxu0 0
  %364 = vmatpush1.bf16.msra.mxu0 0
  %365 = vmatprep.subr.bf16.mxu0 0
  %366 = vmatpush1.bf16.msra.mxu0 0
  %367 = vmatprep.subr.bf16.mxu0 0
  %368 = vmatpush1.bf16.msra.mxu0 0
  %369 = vmatprep.subr.bf16.mxu0 0
  %370 = vmatpush1.bf16.msra.mxu0 0
  %371 = vmatprep.subr.bf16.mxu0 0
  %372 = vmatpush1.bf16.msra.mxu0 0
  %373 = vmatprep.subr.bf16.mxu0 0
  %374 = vmatpush1.bf16.msra.mxu0 0
  %375 = vmatprep.subr.bf16.mxu0 0
  %376 = vmatpush1.bf16.msra.mxu0 0
  %377 = vmatprep.subr.bf16.mxu0 0
  %378 = vmatpush1.bf16.msra.mxu0 0
  %379 = vmatprep.subr.bf16.mxu0 0
  %380 = vmatpush1.bf16.msra.mxu0 0
  %381 = vmatprep.subr.bf16.mxu0 0
  %382 = vmatpush1.bf16.msra.mxu0 0
  %383 = vmatprep.subr.bf16.mxu0 0
  %384 = vmatpush1.bf16.msra.mxu0 0
  %385 = vmatprep.subr.bf16.mxu0 0
  %386 = vmatpush1.bf16.msra.mxu0 0
  %387 = vmatprep.subr.bf16.mxu0 0
  %388 = vmatpush1.bf16.msra.mxu0 0
  %389 = vmatprep.subr.bf16.mxu0 0
  %390 = vmatpush1.bf16.msra.mxu0 0
  %391 = vmatprep.subr.bf16.mxu0 0
  %392 = vmatpush1.bf16.msra.mxu0 0
  %393 = vmatprep.mubr.bf16.mxu0 0
  %394 = vmatmul.mubr.bf16.gmra.mrb[0].mxu0 %v151
  %v395 = vpop.f32.mrb[0].mxu0
  %v396 = vadd.f32 0.0, %v395
  %v397 = vpop.f32.mrb[0].mxu0
  %v398 = vadd.f32 0.0, %v397
  %v399 = vpop.f32.mrb[0].mxu0
  %v400 = vadd.f32 0.0, %v399
  %v401 = vpop.f32.mrb[0].mxu0
  %v402 = vadd.f32 0.0, %v401
  %403 = vdwg.mxu0
  %404 = vmatprep.subr.bf16.mxu0 %v185
  %405 = vmatpush1.bf16.msra.mxu0 %v182
  %406 = vmatprep.subr.bf16.mxu0 0
  %407 = vmatpush1.bf16.msra.mxu0 0
  %408 = vmatprep.subr.bf16.mxu0 0
  %409 = vmatpush1.bf16.msra.mxu0 0
  %410 = vmatprep.subr.bf16.mxu0 0
  %411 = vmatpush1.bf16.msra.mxu0 0
  %412 = vmatprep.subr.bf16.mxu0 0
  %413 = vmatpush1.bf16.msra.mxu0 0
  %414 = vmatprep.subr.bf16.mxu0 0
  %415 = vmatpush1.bf16.msra.mxu0 0
  %416 = vmatprep.subr.bf16.mxu0 0
  %417 = vmatpush1.bf16.msra.mxu0 0
  %418 = vmatprep.subr.bf16.mxu0 0
  %419 = vmatpush1.bf16.msra.mxu0 0
  %420 = vmatprep.subr.bf16.mxu0 0
  %421 = vmatpush1.bf16.msra.mxu0 0
  %422 = vmatprep.subr.bf16.mxu0 0
  %423 = vmatpush1.bf16.msra.mxu0 0
  %424 = vmatprep.subr.bf16.mxu0 0
  %425 = vmatpush1.bf16.msra.mxu0 0
  %426 = vmatprep.subr.bf16.mxu0 0
  %427 = vmatpush1.bf16.msra.mxu0 0
  %428 = vmatprep.subr.bf16.mxu0 0
  %429 = vmatpush1.bf16.msra.mxu0 0
  %430 = vmatprep.subr.bf16.mxu0 0
  %431 = vmatpush1.bf16.msra.mxu0 0
  %432 = vmatprep.subr.bf16.mxu0 0
  %433 = vmatpush1.bf16.msra.mxu0 0
  %434 = vmatprep.subr.bf16.mxu0 0
  %435 = vmatpush1.bf16.msra.mxu0 0
  %436 = vmatprep.mubr.bf16.mxu0 0
  %437 = vmatmul.mubr.bf16.gmra.mrb[0].mxu0 %v151
  %v438 = vpop.f32.mrb[0].mxu0
  %v439 = vadd.f32 0.0, %v438
  %v440 = vpop.f32.mrb[0].mxu0
  %v441 = vadd.f32 0.0, %v440
  %v442 = vpop.f32.mrb[0].mxu0
  %v443 = vadd.f32 0.0, %v442
  %v444 = vpop.f32.mrb[0].mxu0
  %v445 = vadd.f32 0.0, %v444
  %446 = vdwg.mxu0
  %447 = vmatprep.subr.bf16.mxu0 %v191
  %448 = vmatpush1.bf16.msra.mxu0 %v188
  %449 = vmatprep.subr.bf16.mxu0 0
  %450 = vmatpush1.bf16.msra.mxu0 0
  %451 = vmatprep.subr.bf16.mxu0 0
  %452 = vmatpush1.bf16.msra.mxu0 0
  %453 = vmatprep.subr.bf16.mxu0 0
  %454 = vmatpush1.bf16.msra.mxu0 0
  %455 = vmatprep.subr.bf16.mxu0 0
  %456 = vmatpush1.bf16.msra.mxu0 0
  %457 = vmatprep.subr.bf16.mxu0 0
  %458 = vmatpush1.bf16.msra.mxu0 0
  %459 = vmatprep.subr.bf16.mxu0 0
  %460 = vmatpush1.bf16.msra.mxu0 0
  %461 = vmatprep.subr.bf16.mxu0 0
  %462 = vmatpush1.bf16.msra.mxu0 0
  %463 = vmatprep.subr.bf16.mxu0 0
  %464 = vmatpush1.bf16.msra.mxu0 0
  %465 = vmatprep.subr.bf16.mxu0 0
  %466 = vmatpush1.bf16.msra.mxu0 0
  %467 = vmatprep.subr.bf16.mxu0 0
  %468 = vmatpush1.bf16.msra.mxu0 0
  %469 = vmatprep.subr.bf16.mxu0 0
  %470 = vmatpush1.bf16.msra.mxu0 0
  %471 = vmatprep.subr.bf16.mxu0 0
  %472 = vmatpush1.bf16.msra.mxu0 0
  %473 = vmatprep.subr.bf16.mxu0 0
  %474 = vmatpush1.bf16.msra.mxu0 0
  %475 = vmatprep.subr.bf16.mxu0 0
  %476 = vmatpush1.bf16.msra.mxu0 0
  %477 = vmatprep.subr.bf16.mxu0 0
  %478 = vmatpush1.bf16.msra.mxu0 0
  %479 = vmatprep.mubr.bf16.mxu0 0
  %480 = vmatmul.mubr.bf16.gmra.mrb[0].mxu0 %v151
  %v481 = vpop.f32.mrb[0].mxu0
  %v482 = vadd.f32 0.0, %v481
  %v483 = vpop.f32.mrb[0].mxu0
  %v484 = vadd.f32 0.0, %v483
  %v485 = vpop.f32.mrb[0].mxu0
  %v486 = vadd.f32 0.0, %v485
  %v487 = vpop.f32.mrb[0].mxu0
  %v488 = vadd.f32 0.0, %v487
  %489 = vdwg.mxu0
  %490 = vmatprep.subr.bf16.mxu0 %v197
  %491 = vmatpush1.bf16.msra.mxu0 %v194
  %492 = vmatprep.subr.bf16.mxu0 0
  %493 = vmatpush1.bf16.msra.mxu0 0
  %494 = vmatprep.subr.bf16.mxu0 0
  %495 = vmatpush1.bf16.msra.mxu0 0
  %496 = vmatprep.subr.bf16.mxu0 0
  %497 = vmatpush1.bf16.msra.mxu0 0
  %498 = vmatprep.subr.bf16.mxu0 0
  %499 = vmatpush1.bf16.msra.mxu0 0
  %500 = vmatprep.subr.bf16.mxu0 0
  %501 = vmatpush1.bf16.msra.mxu0 0
  %502 = vmatprep.subr.bf16.mxu0 0
  %503 = vmatpush1.bf16.msra.mxu0 0
  %504 = vmatprep.subr.bf16.mxu0 0
  %505 = vmatpush1.bf16.msra.mxu0 0
  %506 = vmatprep.subr.bf16.mxu0 0
  %507 = vmatpush1.bf16.msra.mxu0 0
  %508 = vmatprep.subr.bf16.mxu0 0
  %509 = vmatpush1.bf16.msra.mxu0 0
  %510 = vmatprep.subr.bf16.mxu0 0
  %511 = vmatpush1.bf16.msra.mxu0 0
  %512 = vmatprep.subr.bf16.mxu0 0
  %513 = vmatpush1.bf16.msra.mxu0 0
  %514 = vmatprep.subr.bf16.mxu0 0
  %515 = vmatpush1.bf16.msra.mxu0 0
  %516 = vmatprep.subr.bf16.mxu0 0
  %517 = vmatpush1.bf16.msra.mxu0 0
  %518 = vmatprep.subr.bf16.mxu0 0
  %519 = vmatpush1.bf16.msra.mxu0 0
  %520 = vmatprep.subr.bf16.mxu0 0
  %521 = vmatpush1.bf16.msra.mxu0 0
  %522 = vmatprep.mubr.bf16.mxu0 0
  %523 = vmatmul.mubr.bf16.gmra.mrb[0].mxu0 %v151
  %v524 = vpop.f32.mrb[0].mxu0
  %v525 = vadd.f32 0.0, %v524
  %v526 = vpop.f32.mrb[0].mxu0
  %v527 = vadd.f32 0.0, %v526
  %v528 = vpop.f32.mrb[0].mxu0
  %v529 = vadd.f32 0.0, %v528
  %v530 = vpop.f32.mrb[0].mxu0
  %v531 = vadd.f32 0.0, %v530
  %532 = vdwg.mxu0
  %533 = vmatprep.subr.bf16.mxu0 %v203
  %534 = vmatpush1.bf16.msra.mxu0 %v200
  %535 = vmatprep.subr.bf16.mxu0 0
  %536 = vmatpush1.bf16.msra.mxu0 0
  %537 = vmatprep.subr.bf16.mxu0 0
  %538 = vmatpush1.bf16.msra.mxu0 0
  %539 = vmatprep.subr.bf16.mxu0 0
  %540 = vmatpush1.bf16.msra.mxu0 0
  %541 = vmatprep.subr.bf16.mxu0 0
  %542 = vmatpush1.bf16.msra.mxu0 0
  %543 = vmatprep.subr.bf16.mxu0 0
  %544 = vmatpush1.bf16.msra.mxu0 0
  %545 = vmatprep.subr.bf16.mxu0 0
  %546 = vmatpush1.bf16.msra.mxu0 0
  %547 = vmatprep.subr.bf16.mxu0 0
  %548 = vmatpush1.bf16.msra.mxu0 0
  %549 = vmatprep.subr.bf16.mxu0 0
  %550 = vmatpush1.bf16.msra.mxu0 0
  %551 = vmatprep.subr.bf16.mxu0 0
  %552 = vmatpush1.bf16.msra.mxu0 0
  %553 = vmatprep.subr.bf16.mxu0 0
  %554 = vmatpush1.bf16.msra.mxu0 0
  %555 = vmatprep.subr.bf16.mxu0 0
  %556 = vmatpush1.bf16.msra.mxu0 0
  %557 = vmatprep.subr.bf16.mxu0 0
  %558 = vmatpush1.bf16.msra.mxu0 0
  %559 = vmatprep.subr.bf16.mxu0 0
  %560 = vmatpush1.bf16.msra.mxu0 0
  %561 = vmatprep.subr.bf16.mxu0 0
  %562 = vmatpush1.bf16.msra.mxu0 0
  %563 = vmatprep.subr.bf16.mxu0 0
  %564 = vmatpush1.bf16.msra.mxu0 0
  %565 = vmatprep.mubr.bf16.mxu0 0
  %566 = vmatmul.mubr.bf16.gmra.mrb[0].mxu0 %v151
  %v567 = vpop.f32.mrb[0].mxu0
  %v568 = vadd.f32 0.0, %v567
  %v569 = vpop.f32.mrb[0].mxu0
  %v570 = vadd.f32 0.0, %v569
  %v571 = vpop.f32.mrb[0].mxu0
  %v572 = vadd.f32 0.0, %v571
  %v573 = vpop.f32.mrb[0].mxu0
  %v574 = vadd.f32 0.0, %v573
  %575 = vdwg.mxu0
  %576 = vmatprep.subr.bf16.mxu0 %v209
  %577 = vmatpush1.bf16.msra.mxu0 %v206
  %578 = vmatprep.subr.bf16.mxu0 0
  %579 = vmatpush1.bf16.msra.mxu0 0
  %580 = vmatprep.subr.bf16.mxu0 0
  %581 = vmatpush1.bf16.msra.mxu0 0
  %582 = vmatprep.subr.bf16.mxu0 0
  %583 = vmatpush1.bf16.msra.mxu0 0
  %584 = vmatprep.subr.bf16.mxu0 0
  %585 = vmatpush1.bf16.msra.mxu0 0
  %586 = vmatprep.subr.bf16.mxu0 0
  %587 = vmatpush1.bf16.msra.mxu0 0
  %588 = vmatprep.subr.bf16.mxu0 0
  %589 = vmatpush1.bf16.msra.mxu0 0
  %590 = vmatprep.subr.bf16.mxu0 0
  %591 = vmatpush1.bf16.msra.mxu0 0
  %592 = vmatprep.subr.bf16.mxu0 0
  %593 = vmatpush1.bf16.msra.mxu0 0
  %594 = vmatprep.subr.bf16.mxu0 0
  %595 = vmatpush1.bf16.msra.mxu0 0
  %596 = vmatprep.subr.bf16.mxu0 0
  %597 = vmatpush1.bf16.msra.mxu0 0
  %598 = vmatprep.subr.bf16.mxu0 0
  %599 = vmatpush1.bf16.msra.mxu0 0
  %600 = vmatprep.subr.bf16.mxu0 0
  %601 = vmatpush1.bf16.msra.mxu0 0
  %602 = vmatprep.subr.bf16.mxu0 0
  %603 = vmatpush1.bf16.msra.mxu0 0
  %604 = vmatprep.subr.bf16.mxu0 0
  %605 = vmatpush1.bf16.msra.mxu0 0
  %606 = vmatprep.subr.bf16.mxu0 0
  %607 = vmatpush1.bf16.msra.mxu0 0
  %608 = vmatprep.mubr.bf16.mxu0 0
  %609 = vmatmul.mubr.bf16.gmra.mrb[0].mxu0 %v151
  %v610 = vpop.f32.mrb[0].mxu0
  %v611 = vadd.f32 0.0, %v610
  %v612 = vpop.f32.mrb[0].mxu0
  %v613 = vadd.f32 0.0, %v612
  %v614 = vpop.f32.mrb[0].mxu0
  %v615 = vadd.f32 0.0, %v614
  %v616 = vpop.f32.mrb[0].mxu0
  %v617 = vadd.f32 0.0, %v616
  %618 = vdwg.mxu0
  %619 = vmatprep.subr.bf16.mxu0 %v215
  %620 = vmatpush1.bf16.msra.mxu0 %v212
  %621 = vmatprep.subr.bf16.mxu0 0
  %622 = vmatpush1.bf16.msra.mxu0 0
  %623 = vmatprep.subr.bf16.mxu0 0
  %624 = vmatpush1.bf16.msra.mxu0 0
  %625 = vmatprep.subr.bf16.mxu0 0
  %626 = vmatpush1.bf16.msra.mxu0 0
  %627 = vmatprep.subr.bf16.mxu0 0
  %628 = vmatpush1.bf16.msra.mxu0 0
  %629 = vmatprep.subr.bf16.mxu0 0
  %630 = vmatpush1.bf16.msra.mxu0 0
  %631 = vmatprep.subr.bf16.mxu0 0
  %632 = vmatpush1.bf16.msra.mxu0 0
  %633 = vmatprep.subr.bf16.mxu0 0
  %634 = vmatpush1.bf16.msra.mxu0 0
  %635 = vmatprep.subr.bf16.mxu0 0
  %636 = vmatpush1.bf16.msra.mxu0 0
  %637 = vmatprep.subr.bf16.mxu0 0
  %638 = vmatpush1.bf16.msra.mxu0 0
  %639 = vmatprep.subr.bf16.mxu0 0
  %640 = vmatpush1.bf16.msra.mxu0 0
  %641 = vmatprep.subr.bf16.mxu0 0
  %642 = vmatpush1.bf16.msra.mxu0 0
  %643 = vmatprep.subr.bf16.mxu0 0
  %644 = vmatpush1.bf16.msra.mxu0 0
  %645 = vmatprep.subr.bf16.mxu0 0
  %646 = vmatpush1.bf16.msra.mxu0 0
  %647 = vmatprep.subr.bf16.mxu0 0
  %648 = vmatpush1.bf16.msra.mxu0 0
  %649 = vmatprep.subr.bf16.mxu0 0
  %650 = vmatpush1.bf16.msra.mxu0 0
  %651 = vmatprep.mubr.bf16.mxu0 0
  %652 = vmatmul.mubr.bf16.gmra.mrb[0].mxu0 %v151
  %v653 = vpop.f32.mrb[0].mxu0
  %v654 = vadd.f32 0.0, %v653
  %v655 = vpop.f32.mrb[0].mxu0
  %v656 = vadd.f32 0.0, %v655
  %v657 = vpop.f32.mrb[0].mxu0
  %v658 = vadd.f32 0.0, %v657
  %v659 = vpop.f32.mrb[0].mxu0
  %v660 = vadd.f32 0.0, %v659
  %661 = vdwg.mxu0
  %662 = vmatprep.subr.bf16.mxu0 %v221
  %663 = vmatpush1.bf16.msra.mxu0 %v218
  %664 = vmatprep.subr.bf16.mxu0 0
  %665 = vmatpush1.bf16.msra.mxu0 0
  %666 = vmatprep.subr.bf16.mxu0 0
  %667 = vmatpush1.bf16.msra.mxu0 0
  %668 = vmatprep.subr.bf16.mxu0 0
  %669 = vmatpush1.bf16.msra.mxu0 0
  %670 = vmatprep.subr.bf16.mxu0 0
  %671 = vmatpush1.bf16.msra.mxu0 0
  %672 = vmatprep.subr.bf16.mxu0 0
  %673 = vmatpush1.bf16.msra.mxu0 0
  %674 = vmatprep.subr.bf16.mxu0 0
  %675 = vmatpush1.bf16.msra.mxu0 0
  %676 = vmatprep.subr.bf16.mxu0 0
  %677 = vmatpush1.bf16.msra.mxu0 0
  %678 = vmatprep.subr.bf16.mxu0 0
  %679 = vmatpush1.bf16.msra.mxu0 0
  %680 = vmatprep.subr.bf16.mxu0 0
  %681 = vmatpush1.bf16.msra.mxu0 0
  %682 = vmatprep.subr.bf16.mxu0 0
  %683 = vmatpush1.bf16.msra.mxu0 0
  %684 = vmatprep.subr.bf16.mxu0 0
  %685 = vmatpush1.bf16.msra.mxu0 0
  %686 = vmatprep.subr.bf16.mxu0 0
  %687 = vmatpush1.bf16.msra.mxu0 0
  %688 = vmatprep.subr.bf16.mxu0 0
  %689 = vmatpush1.bf16.msra.mxu0 0
  %690 = vmatprep.subr.bf16.mxu0 0
  %691 = vmatpush1.bf16.msra.mxu0 0
  %692 = vmatprep.subr.bf16.mxu0 0
  %693 = vmatpush1.bf16.msra.mxu0 0
  %694 = vmatprep.mubr.bf16.mxu0 0
  %695 = vmatmul.mubr.bf16.gmra.mrb[0].mxu0 %v151
  %v696 = vpop.f32.mrb[0].mxu0
  %v697 = vadd.f32 0.0, %v696
  %v698 = vpop.f32.mrb[0].mxu0
  %v699 = vadd.f32 0.0, %v698
  %v700 = vpop.f32.mrb[0].mxu0
  %v701 = vadd.f32 0.0, %v700
  %v702 = vpop.f32.mrb[0].mxu0
  %v703 = vadd.f32 0.0, %v702
  %704 = vdwg.mxu0
  %705 = vmatprep.subr.bf16.mxu0 %v227
  %706 = vmatpush1.bf16.msra.mxu0 %v224
  %707 = vmatprep.subr.bf16.mxu0 0
  %708 = vmatpush1.bf16.msra.mxu0 0
  %709 = vmatprep.subr.bf16.mxu0 0
  %710 = vmatpush1.bf16.msra.mxu0 0
  %711 = vmatprep.subr.bf16.mxu0 0
  %712 = vmatpush1.bf16.msra.mxu0 0
  %713 = vmatprep.subr.bf16.mxu0 0
  %714 = vmatpush1.bf16.msra.mxu0 0
  %715 = vmatprep.subr.bf16.mxu0 0
  %716 = vmatpush1.bf16.msra.mxu0 0
  %717 = vmatprep.subr.bf16.mxu0 0
  %718 = vmatpush1.bf16.msra.mxu0 0
  %719 = vmatprep.subr.bf16.mxu0 0
  %720 = vmatpush1.bf16.msra.mxu0 0
  %721 = vmatprep.subr.bf16.mxu0 0
  %722 = vmatpush1.bf16.msra.mxu0 0
  %723 = vmatprep.subr.bf16.mxu0 0
  %724 = vmatpush1.bf16.msra.mxu0 0
  %725 = vmatprep.subr.bf16.mxu0 0
  %726 = vmatpush1.bf16.msra.mxu0 0
  %727 = vmatprep.subr.bf16.mxu0 0
  %728 = vmatpush1.bf16.msra.mxu0 0
  %729 = vmatprep.subr.bf16.mxu0 0
  %730 = vmatpush1.bf16.msra.mxu0 0
  %731 = vmatprep.subr.bf16.mxu0 0
  %732 = vmatpush1.bf16.msra.mxu0 0
  %733 = vmatprep.subr.bf16.mxu0 0
  %734 = vmatpush1.bf16.msra.mxu0 0
  %735 = vmatprep.subr.bf16.mxu0 0
  %736 = vmatpush1.bf16.msra.mxu0 0
  %737 = vmatprep.mubr.bf16.mxu0 0
  %738 = vmatmul.mubr.bf16.gmra.mrb[0].mxu0 %v151
  %v739 = vpop.f32.mrb[0].mxu0
  %v740 = vadd.f32 0.0, %v739
  %v741 = vpop.f32.mrb[0].mxu0
  %v742 = vadd.f32 0.0, %v741
  %v743 = vpop.f32.mrb[0].mxu0
  %v744 = vadd.f32 0.0, %v743
  %v745 = vpop.f32.mrb[0].mxu0
  %v746 = vadd.f32 0.0, %v745
  %747 = vdwg.mxu0
  %748 = vmatprep.subr.bf16.mxu0 0
  %749 = vmatpush1.bf16.msra.mxu0 %v230
  %750 = vmatprep.subr.bf16.mxu0 0
  %751 = vmatpush1.bf16.msra.mxu0 0
  %752 = vmatprep.subr.bf16.mxu0 0
  %753 = vmatpush1.bf16.msra.mxu0 0
  %754 = vmatprep.subr.bf16.mxu0 0
  %755 = vmatpush1.bf16.msra.mxu0 0
  %756 = vmatprep.subr.bf16.mxu0 0
  %757 = vmatpush1.bf16.msra.mxu0 0
  %758 = vmatprep.subr.bf16.mxu0 0
  %759 = vmatpush1.bf16.msra.mxu0 0
  %760 = vmatprep.subr.bf16.mxu0 0
  %761 = vmatpush1.bf16.msra.mxu0 0
  %762 = vmatprep.subr.bf16.mxu0 0
  %763 = vmatpush1.bf16.msra.mxu0 0
  %764 = vmatprep.subr.bf16.mxu0 0
  %765 = vmatpush1.bf16.msra.mxu0 0
  %766 = vmatprep.subr.bf16.mxu0 0
  %767 = vmatpush1.bf16.msra.mxu0 0
  %768 = vmatprep.subr.bf16.mxu0 0
  %769 = vmatpush1.bf16.msra.mxu0 0
  %770 = vmatprep.subr.bf16.mxu0 0
  %771 = vmatpush1.bf16.msra.mxu0 0
  %772 = vmatprep.subr.bf16.mxu0 0
  %773 = vmatpush1.bf16.msra.mxu0 0
  %774 = vmatprep.subr.bf16.mxu0 0
  %775 = vmatpush1.bf16.msra.mxu0 0
  %776 = vmatprep.subr.bf16.mxu0 0
  %777 = vmatpush1.bf16.msra.mxu0 0
  %778 = vmatprep.subr.bf16.mxu0 0
  %779 = vmatpush1.bf16.msra.mxu0 0
  %780 = vmatprep.mubr.bf16.mxu0 0
  %781 = vmatmul.mubr.bf16.gmra.mrb[0].mxu0 %v151
  %v782 = vpop.f32.mrb[0].mxu0
  %v783 = vadd.f32 0.0, %v782
  %v784 = vpop.f32.mrb[0].mxu0
  %v785 = vpop.f32.mrb[0].mxu0
  %v786 = vadd.f32 0.0, %v785
  %v787 = vpop.f32.mrb[0].mxu0
  %788 = vdwg.mxu0
  %803 = vrot.lane.b32.xlu0 %v396, 112
  %v804 = vpop.permute.xlu0 %803
  %805 = vrot.lane.b32.xlu0 %v398, 112
  %v806 = vpop.permute.xlu0 %805
  %807 = vrot.lane.b32.xlu0 %v439, 112
  %v808 = vpop.permute.xlu0 %807
  %809 = vrot.lane.b32.xlu0 %v441, 112
  %v810 = vpop.permute.xlu0 %809
  %811 = vrot.lane.b32.xlu0 %v482, 112
  %v812 = vpop.permute.xlu0 %811
  %813 = vrot.lane.b32.xlu0 %v484, 112
  %v814 = vpop.permute.xlu0 %813
  %815 = vrot.lane.b32.xlu0 %v525, 112
  %v816 = vpop.permute.xlu0 %815
  %817 = vrot.lane.b32.xlu0 %v400, 112
  %v818 = vpop.permute.xlu0 %817
  %819 = vrot.lane.b32.xlu0 %v402, 112
  %v820 = vpop.permute.xlu0 %819
  %821 = vrot.lane.b32.xlu0 %v443, 112
  %v822 = vpop.permute.xlu0 %821
  %823 = vrot.lane.b32.xlu0 %v445, 112
  %v824 = vpop.permute.xlu0 %823
  %825 = vrot.lane.b32.xlu0 %v486, 112
  %v826 = vpop.permute.xlu0 %825
  %827 = vrot.lane.b32.xlu0 %v488, 112
  %v828 = vpop.permute.xlu0 %827
  %829 = vrot.lane.b32.xlu0 %v529, 112
  %v830 = vpop.permute.xlu0 %829
  %vm831 = vcmask 916480
  %v832 = vsel %vm831, %v804, %v806
  %v833 = vsel %vm831, %v806, %v808
  %v834 = vsel %vm831, %v808, %v810
  %v835 = vsel %vm831, %v810, %v812
  %v836 = vsel %vm831, %v812, %v814
  %v837 = vsel %vm831, %v814, %v816
  %v838 = vsel %vm831, %v818, %v820
  %v839 = vsel %vm831, %v820, %v822
  %v840 = vsel %vm831, %v822, %v824
  %v841 = vsel %vm831, %v824, %v826
  %v842 = vsel %vm831, %v826, %v828
  %v843 = vsel %vm831, %v828, %v830
  %v858 = vmax.f32 %v267, %v832
  %v859 = vmax.f32 %v269, %v833
  %v860 = vmax.f32 %v310, %v834
  %v861 = vmax.f32 %v312, %v835
  %v862 = vmax.f32 %v353, %v836
  %v863 = vmax.f32 %v355, %v837
  %v864 = vmax.f32 %v396, %v816
  %v865 = vmax.f32 %v271, %v838
  %v866 = vmax.f32 %v273, %v839
  %v867 = vmax.f32 %v314, %v840
  %v868 = vmax.f32 %v316, %v841
  %v869 = vmax.f32 %v357, %v842
  %v870 = vmax.f32 %v359, %v843
  %v871 = vmax.f32 %v400, %v830
  %886 = vrot.lane.b32.xlu0 %v654, 112
  %v887 = vpop.permute.xlu0 %886
  %888 = vrot.lane.b32.xlu0 %v656, 112
  %v889 = vpop.permute.xlu0 %888
  %890 = vrot.lane.b32.xlu0 %v697, 112
  %v891 = vpop.permute.xlu0 %890
  %892 = vrot.lane.b32.xlu0 %v699, 112
  %v893 = vpop.permute.xlu0 %892
  %894 = vrot.lane.b32.xlu0 %v740, 112
  %v895 = vpop.permute.xlu0 %894
  %896 = vrot.lane.b32.xlu0 %v742, 112
  %v897 = vpop.permute.xlu0 %896
  %898 = vrot.lane.b32.xlu0 %v783, 112
  %v899 = vpop.permute.xlu0 %898
  %900 = vrot.lane.b32.xlu0 %v658, 112
  %v901 = vpop.permute.xlu0 %900
  %902 = vrot.lane.b32.xlu0 %v660, 112
  %v903 = vpop.permute.xlu0 %902
  %904 = vrot.lane.b32.xlu0 %v701, 112
  %v905 = vpop.permute.xlu0 %904
  %906 = vrot.lane.b32.xlu0 %v703, 112
  %v907 = vpop.permute.xlu0 %906
  %908 = vrot.lane.b32.xlu0 %v744, 112
  %v909 = vpop.permute.xlu0 %908
  %910 = vrot.lane.b32.xlu0 %v746, 112
  %v911 = vpop.permute.xlu0 %910
  %912 = vrot.lane.b32.xlu0 %v786, 112
  %v913 = vpop.permute.xlu0 %912
  %v914 = vsel %vm831, %v887, %v889
  %v915 = vsel %vm831, %v889, %v891
  %v916 = vsel %vm831, %v891, %v893
  %v917 = vsel %vm831, %v893, %v895
  %v918 = vsel %vm831, %v895, %v897
  %v919 = vsel %vm831, %v897, %v899
  %v920 = vsel %vm831, %v901, %v903
  %v921 = vsel %vm831, %v903, %v905
  %v922 = vsel %vm831, %v905, %v907
  %v923 = vsel %vm831, %v907, %v909
  %v924 = vsel %vm831, %v909, %v911
  %v925 = vsel %vm831, %v911, %v913
  %v940 = vmax.f32 %v525, %v914
  %v941 = vmax.f32 %v527, %v915
  %v942 = vmax.f32 %v568, %v916
  %v943 = vmax.f32 %v570, %v917
  %v944 = vmax.f32 %v611, %v918
  %v945 = vmax.f32 %v613, %v919
  %v946 = vmax.f32 %v654, %v899
  %v947 = vmax.f32 %v529, %v920
  %v948 = vmax.f32 %v531, %v921
  %v949 = vmax.f32 %v572, %v922
  %v950 = vmax.f32 %v574, %v923
  %v951 = vmax.f32 %v615, %v924
  %v952 = vmax.f32 %v617, %v925
  %v953 = vmax.f32 %v658, %v913
  %968 = vrot.lane.b32.xlu0 %v940, 96
  %v969 = vpop.permute.xlu0 %968
  %970 = vrot.lane.b32.xlu0 %v941, 96
  %v971 = vpop.permute.xlu0 %970
  %972 = vrot.lane.b32.xlu0 %v942, 96
  %v973 = vpop.permute.xlu0 %972
  %974 = vrot.lane.b32.xlu0 %v943, 96
  %v975 = vpop.permute.xlu0 %974
  %976 = vrot.lane.b32.xlu0 %v944, 96
  %v977 = vpop.permute.xlu0 %976
  %978 = vrot.lane.b32.xlu0 %v945, 96
  %v979 = vpop.permute.xlu0 %978
  %980 = vrot.lane.b32.xlu0 %v946, 96
  %v981 = vpop.permute.xlu0 %980
  %982 = vrot.lane.b32.xlu0 %v947, 96
  %v983 = vpop.permute.xlu0 %982
  %984 = vrot.lane.b32.xlu0 %v948, 96
  %v985 = vpop.permute.xlu0 %984
  %986 = vrot.lane.b32.xlu0 %v949, 96
  %v987 = vpop.permute.xlu0 %986
  %988 = vrot.lane.b32.xlu0 %v950, 96
  %v989 = vpop.permute.xlu0 %988
  %990 = vrot.lane.b32.xlu0 %v951, 96
  %v991 = vpop.permute.xlu0 %990
  %992 = vrot.lane.b32.xlu0 %v952, 96
  %v993 = vpop.permute.xlu0 %992
  %994 = vrot.lane.b32.xlu0 %v953, 96
  %v995 = vpop.permute.xlu0 %994
  %vm996 = vcmask 785408
  %v997 = vsel %vm996, %v969, %v971
  %v998 = vsel %vm996, %v971, %v973
  %v999 = vsel %vm996, %v973, %v975
  %v1000 = vsel %vm996, %v975, %v977
  %v1001 = vsel %vm996, %v977, %v979
  %v1002 = vsel %vm996, %v979, %v981
  %v1003 = vsel %vm996, %v983, %v985
  %v1004 = vsel %vm996, %v985, %v987
  %v1005 = vsel %vm996, %v987, %v989
  %v1006 = vsel %vm996, %v989, %v991
  %v1007 = vsel %vm996, %v991, %v993
  %v1008 = vsel %vm996, %v993, %v995
  %v1023 = vmax.f32 %v858, %v997
  %v1024 = vmax.f32 %v859, %v998
  %v1025 = vmax.f32 %v860, %v999
  %v1026 = vmax.f32 %v861, %v1000
  %v1027 = vmax.f32 %v862, %v1001
  %v1028 = vmax.f32 %v863, %v1002
  %v1029 = vmax.f32 %v864, %v981
  %v1030 = vmax.f32 %v865, %v1003
  %v1031 = vmax.f32 %v866, %v1004
  %v1032 = vmax.f32 %v867, %v1005
  %v1033 = vmax.f32 %v868, %v1006
  %v1034 = vmax.f32 %v869, %v1007
  %v1035 = vmax.f32 %v870, %v1008
  %v1036 = vmax.f32 %v871, %v995
  %v1037 = vld [vmem:[%s2] sm:$0xff]
  %v1038 = vld [vmem:[%s2 + $0x8] sm:$0xff]
  %1040 = vset.pattern.permute.xlu0 0
  %1041 = vperm.xlu0 %1040, %v1037
  %v1042 = vpop.permute.xlu0 %1041
  %1045 = vset.pattern.permute.xlu0 0
  %1046 = vperm.xlu0 %1045, %v1038
  %v1047 = vpop.permute.xlu0 %1046
  %v1049 = vadd.f32 %v1023, %v1042
  %v1050 = vadd.f32 %v1024, %v1042
  %v1051 = vadd.f32 %v1025, %v1042
  %v1052 = vadd.f32 %v1026, %v1042
  %v1053 = vadd.f32 %v1027, %v1042
  %v1054 = vadd.f32 %v1028, %v1042
  %v1055 = vadd.f32 %v1029, %v1042
  %v1056 = vadd.f32 %v1030, %v1047
  %v1057 = vadd.f32 %v1031, %v1047
  %v1058 = vadd.f32 %v1032, %v1047
  %v1059 = vadd.f32 %v1033, %v1047
  %v1060 = vadd.f32 %v1034, %v1047
  %v1061 = vadd.f32 %v1035, %v1047
  %v1062 = vadd.f32 %v1036, %v1047
  %v1063 = vmax.f32 %v1049, 0.0
  %v1064 = vmax.f32 %v1050, 0.0
  %v1065 = vmax.f32 %v1051, 0.0
  %v1066 = vmax.f32 %v1052, 0.0
  %v1067 = vmax.f32 %v1053, 0.0
  %v1068 = vmax.f32 %v1054, 0.0
  %v1069 = vmax.f32 %v1055, 0.0
  %v1070 = vmax.f32 %v1056, 0.0
  %v1071 = vmax.f32 %v1057, 0.0
  %v1072 = vmax.f32 %v1058, 0.0
  %v1073 = vmax.f32 %v1059, 0.0
  %v1074 = vmax.f32 %v1060, 0.0
  %v1075 = vmax.f32 %v1061, 0.0
  %v1076 = vmax.f32 %v1062, 0.0
  %1077 = vst [vmem:[%s3] sm:$0xff] %v1063
  %vm1078 = vcmask 556032
  %1079 = vst.msk [vmem:[%s3 + $0x8] sm:$0xff] %vm1078, %v1064
  %1080 = vst [vmem:[%s3 + $0x10] sm:$0xff] %v1070
  %1081 = vst.msk [vmem:[%s3 + $0x18] sm:$0xff] %vm1078, %v1071
  %1088 = vrot.lane.b32.xlu0 %v1064, 60
  %v1089 = vpop.permute.xlu0 %1088
  %1090 = vrot.lane.b32.xlu0 %v1065, 60
  %v1091 = vpop.permute.xlu0 %1090
  %1092 = vrot.lane.b32.xlu0 %v1066, 60
  %v1093 = vpop.permute.xlu0 %1092
  %1094 = vrot.lane.b32.xlu0 %v1071, 60
  %v1095 = vpop.permute.xlu0 %1094
  %1096 = vrot.lane.b32.xlu0 %v1072, 60
  %v1097 = vpop.permute.xlu0 %1096
  %1098 = vrot.lane.b32.xlu0 %v1073, 60
  %v1099 = vpop.permute.xlu0 %1098
  %vm1100 = vcmask 490496
  %v1101 = vsel %vm1100, %v1089, %v1091
  %v1102 = vsel %vm1100, %v1091, %v1093
  %v1103 = vsel %vm1100, %v1095, %v1097
  %v1104 = vsel %vm1100, %v1097, %v1099
  %s1109 = scalar_lea.vmem %s3, 32
  %1110 = vst [vmem:[%s1109] sm:$0xff] %v1101
  %1111 = vst.msk [vmem:[%s1109 + $0x8] sm:$0xff] %vm1078, %v1102
  %1112 = vst [vmem:[%s1109 + $0x10] sm:$0xff] %v1103
  %1113 = vst.msk [vmem:[%s1109 + $0x18] sm:$0xff] %vm1078, %v1104
  %1116 = vrot.lane.b32.xlu0 %v1066, 120
  %v1117 = vpop.permute.xlu0 %1116
  %1118 = vrot.lane.b32.xlu0 %v1067, 120
  %v1119 = vpop.permute.xlu0 %1118
  %1120 = vrot.lane.b32.xlu0 %v1073, 120
  %v1121 = vpop.permute.xlu0 %1120
  %1122 = vrot.lane.b32.xlu0 %v1074, 120
  %v1123 = vpop.permute.xlu0 %1122
  %vm1124 = vcmask 982016
  %v1125 = vsel %vm1124, %v1117, %v1119
  %v1126 = vsel %vm1124, %v1121, %v1123
  %s1131 = scalar_lea.vmem %s3, 64
  %1132 = vst [vmem:[%s1131] sm:$0xff] %v1125
  %1133 = vst.msk [vmem:[%s1131 + $0x8] sm:$0xff] %vm1078, %v1119
  %1134 = vst [vmem:[%s1131 + $0x10] sm:$0xff] %v1126
  %1135 = vst.msk [vmem:[%s1131 + $0x18] sm:$0xff] %vm1078, %v1123
  %1140 = vrot.lane.b32.xlu0 %v1067, 52
  %v1141 = vpop.permute.xlu0 %1140
  %1142 = vrot.lane.b32.xlu0 %v1068, 52
  %v1143 = vpop.permute.xlu0 %1142
  %1144 = vrot.lane.b32.xlu0 %v1069, 52
  %v1145 = vpop.permute.xlu0 %1144
  %1146 = vrot.lane.b32.xlu0 %v1074, 52
  %v1147 = vpop.permute.xlu0 %1146
  %1148 = vrot.lane.b32.xlu0 %v1075, 52
  %v1149 = vpop.permute.xlu0 %1148
  %1150 = vrot.lane.b32.xlu0 %v1076, 52
  %v1151 = vpop.permute.xlu0 %1150
  %vm1152 = vcmask 424960
  %v1153 = vsel %vm1152, %v1141, %v1143
  %v1154 = vsel %vm1152, %v1143, %v1145
  %v1155 = vsel %vm1152, %v1147, %v1149
  %v1156 = vsel %vm1152, %v1149, %v1151
  %s1161 = scalar_lea.vmem %s3, 96
  %1162 = vst [vmem:[%s1161] sm:$0xff] %v1153
  %1163 = vst.msk [vmem:[%s1161 + $0x8] sm:$0xff] %vm1078, %v1154
  %1164 = vst [vmem:[%s1161 + $0x10] sm:$0xff] %v1155
  %1165 = vst.msk [vmem:[%s1161 + $0x18] sm:$0xff] %vm1078, %v1156
  // Predicated region
  $region14: #{pipeline.3} parent=0 // pred_check
    _
  $region15: #{pipeline.3} parent=0 // pred_check_branch
    %1167 = sbr.rel (0) target = $region17
  $region16: #{pipeline.3} parent=0 // pred_region
    _
  $region17: #{pipeline.3} parent=0 // pred_fallthru
    _
  // Predicated region
  $region18: #{pipeline.3} parent=0 // pred_check
    _
  $region19: #{pipeline.3} parent=0 // pred_check_branch
    %1169 = sbr.rel (0) target = $region21
  $region20: #{pipeline.3} parent=0 // pred_region
    _
  $region21: #{pipeline.3} parent=0 // pred_fallthru
    _

// kernel: pipeline.4
$region0: #{pipeline.4}
  #allocation0 [shape = 'u32[]', space=smem, size = 0x4, offset = 0x4, fixed_abs, tag = 'smem constant byte address 0x4 - core index']
  #allocation1 [shape = 'u32[144,128]{1,0:T(1,128)}', space=vmem, size = 0x12000, scoped, tag = 'internal scratch']
  %s0 = inlined_call_operand.vmem [shape: bf16[1,144,784], index: 0, kind: input, shape index: {}]
  %s1 = inlined_call_operand.vmem [shape: bf16[32,144], index: 1, kind: input, shape index: {}]
  %s2 = inlined_call_operand.vmem [shape: f32[32,1], index: 2, kind: input, shape index: {}]
  %s3 = inlined_call_operand.vmem [shape: f32[4,32,49], index: 3, kind: output, shape index: {}]
  %s4 = sld [smem:[#allocation0]]
  $region22: #{pipeline.4} parent=0
    _
  %s6 = ssub.s32 1, %s4
  %s7 = scalar_select 0, %s6, %s4
  // Predicated region
  $region2: #{pipeline.4} parent=0 // pred_check
    _
  $region3: #{pipeline.4} parent=0 // pred_check_branch
    %9 = sbr.rel (0) target = $region5
  $region4: #{pipeline.4} parent=0 // pred_region
    _
  $region5: #{pipeline.4} parent=0 // pred_fallthru
    _
  // Predicated region
  $region6: #{pipeline.4} parent=0 // pred_check
    _
  $region7: #{pipeline.4} parent=0 // pred_check_branch
    %11 = sbr.rel (0) target = $region9
  $region8: #{pipeline.4} parent=0 // pred_region
    _
  $region9: #{pipeline.4} parent=0 // pred_fallthru
    _
  // Predicated region
  $region10: #{pipeline.4} parent=0 // pred_check
    _
  $region11: #{pipeline.4} parent=0 // pred_check_branch
    %13 = sbr.rel (0) target = $region13
  $region12: #{pipeline.4} parent=0 // pred_region
    _
  $region13: #{pipeline.4} parent=0 // pred_fallthru
    _
  %v15 = vld [vmem:[%s1] sm:$0xff]
  %v16 = vld [vmem:[%s1 + $0x8] sm:$0xff]
  %v17 = vld [vmem:[%s1 + $0x10] sm:$0xff]
  %v18 = vld [vmem:[%s1 + $0x18] sm:$0xff]
  %v19 = vld [vmem:[%s0] sm:$0xff]
  %v20 = vld [vmem:[%s0 + $0x8] sm:$0xff]
  %v21 = vld [vmem:[%s0 + $0x10] sm:$0xff]
  %v22 = vld [vmem:[%s0 + $0x18] sm:$0xf]
  %v23 = vld [vmem:[%s0 + $0x1c] sm:$0xff]
  %v24 = vld [vmem:[%s0 + $0x24] sm:$0xff]
  %v25 = vld [vmem:[%s0 + $0x2c] sm:$0xff]
  %v26 = vld [vmem:[%s0 + $0x34] sm:$0xf]
  %v27 = vld [vmem:[%s0 + $0x38] sm:$0xff]
  %v28 = vld [vmem:[%s0 + $0x40] sm:$0xff]
  %v29 = vld [vmem:[%s0 + $0x48] sm:$0xff]
  %v30 = vld [vmem:[%s0 + $0x50] sm:$0xf]
  %v31 = vld [vmem:[%s0 + $0x54] sm:$0xff]
  %v32 = vld [vmem:[%s0 + $0x5c] sm:$0xff]
  %v33 = vld [vmem:[%s0 + $0x64] sm:$0xff]
  %v34 = vld [vmem:[%s0 + $0x6c] sm:$0xf]
  %v35 = vld [vmem:[%s0 + $0x70] sm:$0xff]
  %v36 = vld [vmem:[%s0 + $0x78] sm:$0xff]
  %v37 = vld [vmem:[%s0 + $0x80] sm:$0xff]
  %v38 = vld [vmem:[%s0 + $0x88] sm:$0xf]
  %v39 = vld [vmem:[%s0 + $0x8c] sm:$0xff]
  %v40 = vld [vmem:[%s0 + $0x94] sm:$0xff]
  %v41 = vld [vmem:[%s0 + $0x9c] sm:$0xff]
  %v42 = vld [vmem:[%s0 + $0xa4] sm:$0xf]
  %v43 = vld [vmem:[%s0 + $0xa8] sm:$0xff]
  %v44 = vld [vmem:[%s0 + $0xb0] sm:$0xff]
  %v45 = vld [vmem:[%s0 + $0xb8] sm:$0xff]
  %v46 = vld [vmem:[%s0 + $0xc0] sm:$0xf]
  %v47 = vld [vmem:[%s0 + $0xc4] sm:$0xff]
  %v48 = vld [vmem:[%s0 + $0xcc] sm:$0xff]
  %v49 = vld [vmem:[%s0 + $0xd4] sm:$0xff]
  %v50 = vld [vmem:[%s0 + $0xdc] sm:$0xf]
  %v51 = vld [vmem:[%s0 + $0xe0] sm:$0xff]
  %v52 = vld [vmem:[%s0 + $0xe8] sm:$0xff]
  %v53 = vld [vmem:[%s0 + $0xf0] sm:$0xff]
  %v54 = vld [vmem:[%s0 + $0xf8] sm:$0xf]
  %v55 = vld [vmem:[%s0 + $0xfc] sm:$0xff]
  %v56 = vld [vmem:[%s0 + $0x104] sm:$0xff]
  %v57 = vld [vmem:[%s0 + $0x10c] sm:$0xff]
  %v58 = vld [vmem:[%s0 + $0x114] sm:$0xf]
  %v59 = vld [vmem:[%s0 + $0x118] sm:$0xff]
  %v60 = vld [vmem:[%s0 + $0x120] sm:$0xff]
  %v61 = vld [vmem:[%s0 + $0x128] sm:$0xff]
  %v62 = vld [vmem:[%s0 + $0x130] sm:$0xf]
  %v63 = vld [vmem:[%s0 + $0x134] sm:$0xff]
  %v64 = vld [vmem:[%s0 + $0x13c] sm:$0xff]
  %v65 = vld [vmem:[%s0 + $0x144] sm:$0xff]
  %v66 = vld [vmem:[%s0 + $0x14c] sm:$0xf]
  %v67 = vld [vmem:[%s0 + $0x150] sm:$0xff]
  %v68 = vld [vmem:[%s0 + $0x158] sm:$0xff]
  %v69 = vld [vmem:[%s0 + $0x160] sm:$0xff]
  %v70 = vld [vmem:[%s0 + $0x168] sm:$0xf]
  %v71 = vld [vmem:[%s0 + $0x16c] sm:$0xff]
  %v72 = vld [vmem:[%s0 + $0x174] sm:$0xff]
  %v73 = vld [vmem:[%s0 + $0x17c] sm:$0xff]
  %v74 = vld [vmem:[%s0 + $0x184] sm:$0xf]
  %v75 = vld [vmem:[%s0 + $0x188] sm:$0xff]
  %v76 = vld [vmem:[%s0 + $0x190] sm:$0xff]
  %v77 = vld [vmem:[%s0 + $0x198] sm:$0xff]
  %v78 = vld [vmem:[%s0 + $0x1a0] sm:$0xf]
  %v79 = vld [vmem:[%s0 + $0x1a4] sm:$0xff]
  %v80 = vld [vmem:[%s0 + $0x1ac] sm:$0xff]
  %v81 = vld [vmem:[%s0 + $0x1b4] sm:$0xff]
  %v82 = vld [vmem:[%s0 + $0x1bc] sm:$0xf]
  %v83 = vld [vmem:[%s0 + $0x1c0] sm:$0xff]
  %v84 = vld [vmem:[%s0 + $0x1c8] sm:$0xff]
  %v85 = vld [vmem:[%s0 + $0x1d0] sm:$0xff]
  %v86 = vld [vmem:[%s0 + $0x1d8] sm:$0xf]
  %v87 = vld [vmem:[%s0 + $0x1dc] sm:$0xff]
  %v88 = vld [vmem:[%s0 + $0x1e4] sm:$0xff]
  %v89 = vld [vmem:[%s0 + $0x1ec] sm:$0xff]
  %v90 = vld [vmem:[%s0 + $0x1f4] sm:$0xf]
  %v95 = vunpack.c.l.b16 %v15
  %v96 = vunpack.c.h.b16 %v15
  %v97 = vunpack.c.l.b16 %v16
  %v98 = vunpack.c.h.b16 %v16
  %v99 = vunpack.c.l.b16 %v17
  %v100 = vunpack.c.h.b16 %v17
  %v101 = vunpack.c.l.b16 %v18
  %v102 = vunpack.c.h.b16 %v18
  %v103 = vpack.c.b16 %v97, %v95
  %v104 = vpack.c.b16 %v98, %v96
  %v105 = vpack.c.b16 %v101, %v99
  %v106 = vpack.c.b16 %v102, %v100
  %v181 = vunpack.c.l.b16 %v19
  %v182 = vunpack.c.h.b16 %v19
  %v183 = vunpack.c.l.b16 %v20
  %v184 = vunpack.c.h.b16 %v20
  %v185 = vunpack.c.l.b16 %v21
  %v186 = vunpack.c.h.b16 %v21
  %v187 = vunpack.c.l.b16 %v22
  %v188 = vunpack.c.l.b16 %v23
  %v189 = vunpack.c.h.b16 %v23
  %v190 = vunpack.c.l.b16 %v24
  %v191 = vunpack.c.h.b16 %v24
  %v192 = vunpack.c.l.b16 %v25
  %v193 = vunpack.c.h.b16 %v25
  %v194 = vunpack.c.l.b16 %v26
  %v195 = vunpack.c.l.b16 %v27
  %v196 = vunpack.c.h.b16 %v27
  %v197 = vunpack.c.l.b16 %v28
  %v198 = vunpack.c.h.b16 %v28
  %v199 = vunpack.c.l.b16 %v29
  %v200 = vunpack.c.h.b16 %v29
  %v201 = vunpack.c.l.b16 %v30
  %v202 = vunpack.c.l.b16 %v31
  %v203 = vunpack.c.h.b16 %v31
  %v204 = vunpack.c.l.b16 %v32
  %v205 = vunpack.c.h.b16 %v32
  %v206 = vunpack.c.l.b16 %v33
  %v207 = vunpack.c.h.b16 %v33
  %v208 = vunpack.c.l.b16 %v34
  %v209 = vunpack.c.l.b16 %v35
  %v210 = vunpack.c.h.b16 %v35
  %v211 = vunpack.c.l.b16 %v36
  %v212 = vunpack.c.h.b16 %v36
  %v213 = vunpack.c.l.b16 %v37
  %v214 = vunpack.c.h.b16 %v37
  %v215 = vunpack.c.l.b16 %v38
  %v216 = vunpack.c.l.b16 %v39
  %v217 = vunpack.c.h.b16 %v39
  %v218 = vunpack.c.l.b16 %v40
  %v219 = vunpack.c.h.b16 %v40
  %v220 = vunpack.c.l.b16 %v41
  %v221 = vunpack.c.h.b16 %v41
  %v222 = vunpack.c.l.b16 %v42
  %v223 = vunpack.c.l.b16 %v43
  %v224 = vunpack.c.h.b16 %v43
  %v225 = vunpack.c.l.b16 %v44
  %v226 = vunpack.c.h.b16 %v44
  %v227 = vunpack.c.l.b16 %v45
  %v228 = vunpack.c.h.b16 %v45
  %v229 = vunpack.c.l.b16 %v46
  %v230 = vunpack.c.l.b16 %v47
  %v231 = vunpack.c.h.b16 %v47
  %v232 = vunpack.c.l.b16 %v48
  %v233 = vunpack.c.h.b16 %v48
  %v234 = vunpack.c.l.b16 %v49
  %v235 = vunpack.c.h.b16 %v49
  %v236 = vunpack.c.l.b16 %v50
  %v237 = vunpack.c.l.b16 %v51
  %v238 = vunpack.c.h.b16 %v51
  %v239 = vunpack.c.l.b16 %v52
  %v240 = vunpack.c.h.b16 %v52
  %v241 = vunpack.c.l.b16 %v53
  %v242 = vunpack.c.h.b16 %v53
  %v243 = vunpack.c.l.b16 %v54
  %v244 = vunpack.c.l.b16 %v55
  %v245 = vunpack.c.h.b16 %v55
  %v246 = vunpack.c.l.b16 %v56
  %v247 = vunpack.c.h.b16 %v56
  %v248 = vunpack.c.l.b16 %v57
  %v249 = vunpack.c.h.b16 %v57
  %v250 = vunpack.c.l.b16 %v58
  %v251 = vunpack.c.l.b16 %v59
  %v252 = vunpack.c.h.b16 %v59
  %v253 = vunpack.c.l.b16 %v60
  %v254 = vunpack.c.h.b16 %v60
  %v255 = vunpack.c.l.b16 %v61
  %v256 = vunpack.c.h.b16 %v61
  %v257 = vunpack.c.l.b16 %v62
  %v258 = vunpack.c.l.b16 %v63
  %v259 = vunpack.c.h.b16 %v63
  %v260 = vunpack.c.l.b16 %v64
  %v261 = vunpack.c.h.b16 %v64
  %v262 = vunpack.c.l.b16 %v65
  %v263 = vunpack.c.h.b16 %v65
  %v264 = vunpack.c.l.b16 %v66
  %v265 = vunpack.c.l.b16 %v67
  %v266 = vunpack.c.h.b16 %v67
  %v267 = vunpack.c.l.b16 %v68
  %v268 = vunpack.c.h.b16 %v68
  %v269 = vunpack.c.l.b16 %v69
  %v270 = vunpack.c.h.b16 %v69
  %v271 = vunpack.c.l.b16 %v70
  %v272 = vunpack.c.l.b16 %v71
  %v273 = vunpack.c.h.b16 %v71
  %v274 = vunpack.c.l.b16 %v72
  %v275 = vunpack.c.h.b16 %v72
  %v276 = vunpack.c.l.b16 %v73
  %v277 = vunpack.c.h.b16 %v73
  %v278 = vunpack.c.l.b16 %v74
  %v279 = vunpack.c.l.b16 %v75
  %v280 = vunpack.c.h.b16 %v75
  %v281 = vunpack.c.l.b16 %v76
  %v282 = vunpack.c.h.b16 %v76
  %v283 = vunpack.c.l.b16 %v77
  %v284 = vunpack.c.h.b16 %v77
  %v285 = vunpack.c.l.b16 %v78
  %v286 = vunpack.c.l.b16 %v79
  %v287 = vunpack.c.h.b16 %v79
  %v288 = vunpack.c.l.b16 %v80
  %v289 = vunpack.c.h.b16 %v80
  %v290 = vunpack.c.l.b16 %v81
  %v291 = vunpack.c.h.b16 %v81
  %v292 = vunpack.c.l.b16 %v82
  %v293 = vunpack.c.l.b16 %v83
  %v294 = vunpack.c.h.b16 %v83
  %v295 = vunpack.c.l.b16 %v84
  %v296 = vunpack.c.h.b16 %v84
  %v297 = vunpack.c.l.b16 %v85
  %v298 = vunpack.c.h.b16 %v85
  %v299 = vunpack.c.l.b16 %v86
  %v300 = vunpack.c.l.b16 %v87
  %v301 = vunpack.c.h.b16 %v87
  %v302 = vunpack.c.l.b16 %v88
  %v303 = vunpack.c.h.b16 %v88
  %v304 = vunpack.c.l.b16 %v89
  %v305 = vunpack.c.h.b16 %v89
  %v306 = vunpack.c.l.b16 %v90
  %v307 = vpack.c.b16 %v188, %v181
  %v308 = vpack.c.b16 %v189, %v182
  %v309 = vpack.c.b16 %v190, %v183
  %v310 = vpack.c.b16 %v191, %v184
  %v311 = vpack.c.b16 %v192, %v185
  %v312 = vpack.c.b16 %v193, %v186
  %v313 = vpack.c.b16 %v194, %v187
  %v314 = vpack.c.b16 %v202, %v195
  %v315 = vpack.c.b16 %v203, %v196
  %v316 = vpack.c.b16 %v204, %v197
  %v317 = vpack.c.b16 %v205, %v198
  %v318 = vpack.c.b16 %v206, %v199
  %v319 = vpack.c.b16 %v207, %v200
  %v320 = vpack.c.b16 %v208, %v201
  %v321 = vpack.c.b16 %v216, %v209
  %v322 = vpack.c.b16 %v217, %v210
  %v323 = vpack.c.b16 %v218, %v211
  %v324 = vpack.c.b16 %v219, %v212
  %v325 = vpack.c.b16 %v220, %v213
  %v326 = vpack.c.b16 %v221, %v214
  %v327 = vpack.c.b16 %v222, %v215
  %v328 = vpack.c.b16 %v230, %v223
  %v329 = vpack.c.b16 %v231, %v224
  %v330 = vpack.c.b16 %v232, %v225
  %v331 = vpack.c.b16 %v233, %v226
  %v332 = vpack.c.b16 %v234, %v227
  %v333 = vpack.c.b16 %v235, %v228
  %v334 = vpack.c.b16 %v236, %v229
  %v335 = vpack.c.b16 %v244, %v237
  %v336 = vpack.c.b16 %v245, %v238
  %v337 = vpack.c.b16 %v246, %v239
  %v338 = vpack.c.b16 %v247, %v240
  %v339 = vpack.c.b16 %v248, %v241
  %v340 = vpack.c.b16 %v249, %v242
  %v341 = vpack.c.b16 %v250, %v243
  %v342 = vpack.c.b16 %v258, %v251
  %v343 = vpack.c.b16 %v259, %v252
  %v344 = vpack.c.b16 %v260, %v253
  %v345 = vpack.c.b16 %v261, %v254
  %v346 = vpack.c.b16 %v262, %v255
  %v347 = vpack.c.b16 %v263, %v256
  %v348 = vpack.c.b16 %v264, %v257
  %v349 = vpack.c.b16 %v272, %v265
  %v350 = vpack.c.b16 %v273, %v266
  %v351 = vpack.c.b16 %v274, %v267
  %v352 = vpack.c.b16 %v275, %v268
  %v353 = vpack.c.b16 %v276, %v269
  %v354 = vpack.c.b16 %v277, %v270
  %v355 = vpack.c.b16 %v278, %v271
  %v356 = vpack.c.b16 %v286, %v279
  %v357 = vpack.c.b16 %v287, %v280
  %v358 = vpack.c.b16 %v288, %v281
  %v359 = vpack.c.b16 %v289, %v282
  %v360 = vpack.c.b16 %v290, %v283
  %v361 = vpack.c.b16 %v291, %v284
  %v362 = vpack.c.b16 %v292, %v285
  %v363 = vpack.c.b16 %v300, %v293
  %v364 = vpack.c.b16 %v301, %v294
  %v365 = vpack.c.b16 %v302, %v295
  %v366 = vpack.c.b16 %v303, %v296
  %v367 = vpack.c.b16 %v304, %v297
  %v368 = vpack.c.b16 %v305, %v298
  %v369 = vpack.c.b16 %v306, %v299
  %vm433 = vcmask 130048
  %v435 = vsel %vm433, %v104, 0
  %v438 = vsel %vm433, %v106, 0
  %440 = vmatprep.subr.bf16.mxu0 %v308
  %441 = vmatpush1.bf16.msra.mxu0 %v307
  %442 = vmatprep.subr.bf16.mxu0 %v315
  %443 = vmatpush1.bf16.msra.mxu0 %v314
  %444 = vmatprep.subr.bf16.mxu0 %v322
  %445 = vmatpush1.bf16.msra.mxu0 %v321
  %446 = vmatprep.subr.bf16.mxu0 %v329
  %447 = vmatpush1.bf16.msra.mxu0 %v328
  %448 = vmatprep.subr.bf16.mxu0 %v336
  %449 = vmatpush1.bf16.msra.mxu0 %v335
  %450 = vmatprep.subr.bf16.mxu0 %v343
  %451 = vmatpush1.bf16.msra.mxu0 %v342
  %452 = vmatprep.subr.bf16.mxu0 %v350
  %453 = vmatpush1.bf16.msra.mxu0 %v349
  %454 = vmatprep.subr.bf16.mxu0 %v357
  %455 = vmatpush1.bf16.msra.mxu0 %v356
  %456 = vmatprep.subr.bf16.mxu0 %v364
  %457 = vmatpush1.bf16.msra.mxu0 %v363
  %458 = vmatprep.subr.bf16.mxu0 0
  %459 = vmatpush1.bf16.msra.mxu0 0
  %460 = vmatprep.subr.bf16.mxu0 0
  %461 = vmatpush1.bf16.msra.mxu0 0
  %462 = vmatprep.subr.bf16.mxu0 0
  %463 = vmatpush1.bf16.msra.mxu0 0
  %464 = vmatprep.subr.bf16.mxu0 0
  %465 = vmatpush1.bf16.msra.mxu0 0
  %466 = vmatprep.subr.bf16.mxu0 0
  %467 = vmatpush1.bf16.msra.mxu0 0
  %468 = vmatprep.subr.bf16.mxu0 0
  %469 = vmatpush1.bf16.msra.mxu0 0
  %470 = vmatprep.subr.bf16.mxu0 0
  %471 = vmatpush1.bf16.msra.mxu0 0
  %472 = vmatprep.mubr.bf16.mxu0 %v435
  %473 = vmatmul.mubr.bf16.gmra.mrb[0].mxu0 %v103
  %v474 = vpop.f32.mrb[0].mxu0
  %v475 = vadd.f32 0.0, %v474
  %v476 = vpop.f32.mrb[0].mxu0
  %v477 = vadd.f32 0.0, %v476
  %v478 = vpop.f32.mrb[0].mxu0
  %v479 = vadd.f32 0.0, %v478
  %v480 = vpop.f32.mrb[0].mxu0
  %v481 = vadd.f32 0.0, %v480
  %482 = vmatprep.mubr.bf16.mxu0 %v438
  %483 = vmatmul.mubr.bf16.gmra.mrb[0].mxu0 %v105
  %v484 = vpop.f32.mrb[0].mxu0
  %v485 = vadd.f32 0.0, %v484
  %v486 = vpop.f32.mrb[0].mxu0
  %v487 = vadd.f32 0.0, %v486
  %v488 = vpop.f32.mrb[0].mxu0
  %v489 = vadd.f32 0.0, %v488
  %v490 = vpop.f32.mrb[0].mxu0
  %v491 = vadd.f32 0.0, %v490
  %492 = vdwg.mxu0
  %493 = vmatprep.subr.bf16.mxu0 %v310
  %494 = vmatpush1.bf16.msra.mxu0 %v309
  %495 = vmatprep.subr.bf16.mxu0 %v317
  %496 = vmatpush1.bf16.msra.mxu0 %v316
  %497 = vmatprep.subr.bf16.mxu0 %v324
  %498 = vmatpush1.bf16.msra.mxu0 %v323
  %499 = vmatprep.subr.bf16.mxu0 %v331
  %500 = vmatpush1.bf16.msra.mxu0 %v330
  %501 = vmatprep.subr.bf16.mxu0 %v338
  %502 = vmatpush1.bf16.msra.mxu0 %v337
  %503 = vmatprep.subr.bf16.mxu0 %v345
  %504 = vmatpush1.bf16.msra.mxu0 %v344
  %505 = vmatprep.subr.bf16.mxu0 %v352
  %506 = vmatpush1.bf16.msra.mxu0 %v351
  %507 = vmatprep.subr.bf16.mxu0 %v359
  %508 = vmatpush1.bf16.msra.mxu0 %v358
  %509 = vmatprep.subr.bf16.mxu0 %v366
  %510 = vmatpush1.bf16.msra.mxu0 %v365
  %511 = vmatprep.subr.bf16.mxu0 0
  %512 = vmatpush1.bf16.msra.mxu0 0
  %513 = vmatprep.subr.bf16.mxu0 0
  %514 = vmatpush1.bf16.msra.mxu0 0
  %515 = vmatprep.subr.bf16.mxu0 0
  %516 = vmatpush1.bf16.msra.mxu0 0
  %517 = vmatprep.subr.bf16.mxu0 0
  %518 = vmatpush1.bf16.msra.mxu0 0
  %519 = vmatprep.subr.bf16.mxu0 0
  %520 = vmatpush1.bf16.msra.mxu0 0
  %521 = vmatprep.subr.bf16.mxu0 0
  %522 = vmatpush1.bf16.msra.mxu0 0
  %523 = vmatprep.subr.bf16.mxu0 0
  %524 = vmatpush1.bf16.msra.mxu0 0
  %525 = vmatprep.mubr.bf16.mxu0 %v435
  %526 = vmatmul.mubr.bf16.gmra.mrb[0].mxu0 %v103
  %v527 = vpop.f32.mrb[0].mxu0
  %v528 = vadd.f32 0.0, %v527
  %v529 = vpop.f32.mrb[0].mxu0
  %v530 = vadd.f32 0.0, %v529
  %v531 = vpop.f32.mrb[0].mxu0
  %v532 = vadd.f32 0.0, %v531
  %v533 = vpop.f32.mrb[0].mxu0
  %v534 = vadd.f32 0.0, %v533
  %535 = vmatprep.mubr.bf16.mxu0 %v438
  %536 = vmatmul.mubr.bf16.gmra.mrb[0].mxu0 %v105
  %v537 = vpop.f32.mrb[0].mxu0
  %v538 = vadd.f32 0.0, %v537
  %v539 = vpop.f32.mrb[0].mxu0
  %v540 = vadd.f32 0.0, %v539
  %v541 = vpop.f32.mrb[0].mxu0
  %v542 = vadd.f32 0.0, %v541
  %v543 = vpop.f32.mrb[0].mxu0
  %v544 = vadd.f32 0.0, %v543
  %545 = vdwg.mxu0
  %546 = vmatprep.subr.bf16.mxu0 %v312
  %547 = vmatpush1.bf16.msra.mxu0 %v311
  %548 = vmatprep.subr.bf16.mxu0 %v319
  %549 = vmatpush1.bf16.msra.mxu0 %v318
  %550 = vmatprep.subr.bf16.mxu0 %v326
  %551 = vmatpush1.bf16.msra.mxu0 %v325
  %552 = vmatprep.subr.bf16.mxu0 %v333
  %553 = vmatpush1.bf16.msra.mxu0 %v332
  %554 = vmatprep.subr.bf16.mxu0 %v340
  %555 = vmatpush1.bf16.msra.mxu0 %v339
  %556 = vmatprep.subr.bf16.mxu0 %v347
  %557 = vmatpush1.bf16.msra.mxu0 %v346
  %558 = vmatprep.subr.bf16.mxu0 %v354
  %559 = vmatpush1.bf16.msra.mxu0 %v353
  %560 = vmatprep.subr.bf16.mxu0 %v361
  %561 = vmatpush1.bf16.msra.mxu0 %v360
  %562 = vmatprep.subr.bf16.mxu0 %v368
  %563 = vmatpush1.bf16.msra.mxu0 %v367
  %564 = vmatprep.subr.bf16.mxu0 0
  %565 = vmatpush1.bf16.msra.mxu0 0
  %566 = vmatprep.subr.bf16.mxu0 0
  %567 = vmatpush1.bf16.msra.mxu0 0
  %568 = vmatprep.subr.bf16.mxu0 0
  %569 = vmatpush1.bf16.msra.mxu0 0
  %570 = vmatprep.subr.bf16.mxu0 0
  %571 = vmatpush1.bf16.msra.mxu0 0
  %572 = vmatprep.subr.bf16.mxu0 0
  %573 = vmatpush1.bf16.msra.mxu0 0
  %574 = vmatprep.subr.bf16.mxu0 0
  %575 = vmatpush1.bf16.msra.mxu0 0
  %576 = vmatprep.subr.bf16.mxu0 0
  %577 = vmatpush1.bf16.msra.mxu0 0
  %578 = vmatprep.mubr.bf16.mxu0 %v435
  %579 = vmatmul.mubr.bf16.gmra.mrb[0].mxu0 %v103
  %v580 = vpop.f32.mrb[0].mxu0
  %v581 = vadd.f32 0.0, %v580
  %v582 = vpop.f32.mrb[0].mxu0
  %v583 = vadd.f32 0.0, %v582
  %v584 = vpop.f32.mrb[0].mxu0
  %v585 = vadd.f32 0.0, %v584
  %v586 = vpop.f32.mrb[0].mxu0
  %v587 = vadd.f32 0.0, %v586
  %588 = vmatprep.mubr.bf16.mxu0 %v438
  %589 = vmatmul.mubr.bf16.gmra.mrb[0].mxu0 %v105
  %v590 = vpop.f32.mrb[0].mxu0
  %v591 = vadd.f32 0.0, %v590
  %v592 = vpop.f32.mrb[0].mxu0
  %v593 = vadd.f32 0.0, %v592
  %v594 = vpop.f32.mrb[0].mxu0
  %v595 = vadd.f32 0.0, %v594
  %v596 = vpop.f32.mrb[0].mxu0
  %v597 = vadd.f32 0.0, %v596
  %598 = vdwg.mxu0
  %599 = vmatprep.subr.bf16.mxu0 0
  %600 = vmatpush1.bf16.msra.mxu0 %v313
  %601 = vmatprep.subr.bf16.mxu0 0
  %602 = vmatpush1.bf16.msra.mxu0 %v320
  %603 = vmatprep.subr.bf16.mxu0 0
  %604 = vmatpush1.bf16.msra.mxu0 %v327
  %605 = vmatprep.subr.bf16.mxu0 0
  %606 = vmatpush1.bf16.msra.mxu0 %v334
  %607 = vmatprep.subr.bf16.mxu0 0
  %608 = vmatpush1.bf16.msra.mxu0 %v341
  %609 = vmatprep.subr.bf16.mxu0 0
  %610 = vmatpush1.bf16.msra.mxu0 %v348
  %611 = vmatprep.subr.bf16.mxu0 0
  %612 = vmatpush1.bf16.msra.mxu0 %v355
  %613 = vmatprep.subr.bf16.mxu0 0
  %614 = vmatpush1.bf16.msra.mxu0 %v362
  %615 = vmatprep.subr.bf16.mxu0 0
  %616 = vmatpush1.bf16.msra.mxu0 %v369
  %617 = vmatprep.subr.bf16.mxu0 0
  %618 = vmatpush1.bf16.msra.mxu0 0
  %619 = vmatprep.subr.bf16.mxu0 0
  %620 = vmatpush1.bf16.msra.mxu0 0
  %621 = vmatprep.subr.bf16.mxu0 0
  %622 = vmatpush1.bf16.msra.mxu0 0
  %623 = vmatprep.subr.bf16.mxu0 0
  %624 = vmatpush1.bf16.msra.mxu0 0
  %625 = vmatprep.subr.bf16.mxu0 0
  %626 = vmatpush1.bf16.msra.mxu0 0
  %627 = vmatprep.subr.bf16.mxu0 0
  %628 = vmatpush1.bf16.msra.mxu0 0
  %629 = vmatprep.subr.bf16.mxu0 0
  %630 = vmatpush1.bf16.msra.mxu0 0
  %631 = vmatprep.mubr.bf16.mxu0 %v435
  %632 = vmatmul.mubr.bf16.gmra.mrb[0].mxu0 %v103
  %v633 = vpop.f32.mrb[0].mxu0
  %v634 = vadd.f32 0.0, %v633
  %v635 = vpop.f32.mrb[0].mxu0
  %v636 = vpop.f32.mrb[0].mxu0
  %v637 = vadd.f32 0.0, %v636
  %v638 = vpop.f32.mrb[0].mxu0
  %639 = vmatprep.mubr.bf16.mxu0 %v438
  %640 = vmatmul.mubr.bf16.gmra.mrb[0].mxu0 %v105
  %v641 = vpop.f32.mrb[0].mxu0
  %v642 = vadd.f32 0.0, %v641
  %v643 = vpop.f32.mrb[0].mxu0
  %v644 = vpop.f32.mrb[0].mxu0
  %v645 = vadd.f32 0.0, %v644
  %v646 = vpop.f32.mrb[0].mxu0
  %647 = vdwg.mxu0
  %660 = vrot.lane.b32.xlu0 %v477, 60
  %v661 = vpop.permute.xlu0 %660
  %662 = vrot.lane.b32.xlu0 %v528, 60
  %v663 = vpop.permute.xlu0 %662
  %664 = vrot.lane.b32.xlu0 %v530, 60
  %v665 = vpop.permute.xlu0 %664
  %666 = vrot.lane.b32.xlu0 %v481, 60
  %v667 = vpop.permute.xlu0 %666
  %668 = vrot.lane.b32.xlu0 %v532, 60
  %v669 = vpop.permute.xlu0 %668
  %670 = vrot.lane.b32.xlu0 %v534, 60
  %v671 = vpop.permute.xlu0 %670
  %672 = vrot.lane.b32.xlu0 %v487, 60
  %v673 = vpop.permute.xlu0 %672
  %674 = vrot.lane.b32.xlu0 %v538, 60
  %v675 = vpop.permute.xlu0 %674
  %676 = vrot.lane.b32.xlu0 %v540, 60
  %v677 = vpop.permute.xlu0 %676
  %678 = vrot.lane.b32.xlu0 %v491, 60
  %v679 = vpop.permute.xlu0 %678
  %680 = vrot.lane.b32.xlu0 %v542, 60
  %v681 = vpop.permute.xlu0 %680
  %682 = vrot.lane.b32.xlu0 %v544, 60
  %v683 = vpop.permute.xlu0 %682
  %vm684 = vcmask 490496
  %v685 = vsel %vm684, %v661, %v663
  %v686 = vsel %vm684, %v663, %v665
  %v687 = vsel %vm684, %v667, %v669
  %v688 = vsel %vm684, %v669, %v671
  %v689 = vsel %vm684, %v673, %v675
  %v690 = vsel %vm684, %v675, %v677
  %v691 = vsel %vm684, %v679, %v681
  %v692 = vsel %vm684, %v681, %v683
  %v701 = vmax.f32 %v475, %v685
  %v702 = vmax.f32 %v477, %v686
  %v703 = vmax.f32 %v479, %v687
  %v704 = vmax.f32 %v481, %v688
  %v705 = vmax.f32 %v485, %v689
  %v706 = vmax.f32 %v487, %v690
  %v707 = vmax.f32 %v489, %v691
  %v708 = vmax.f32 %v491, %v692
  %721 = vrot.lane.b32.xlu0 %v581, 60
  %v722 = vpop.permute.xlu0 %721
  %723 = vrot.lane.b32.xlu0 %v583, 60
  %v724 = vpop.permute.xlu0 %723
  %725 = vrot.lane.b32.xlu0 %v634, 60
  %v726 = vpop.permute.xlu0 %725
  %727 = vrot.lane.b32.xlu0 %v585, 60
  %v728 = vpop.permute.xlu0 %727
  %729 = vrot.lane.b32.xlu0 %v587, 60
  %v730 = vpop.permute.xlu0 %729
  %731 = vrot.lane.b32.xlu0 %v637, 60
  %v732 = vpop.permute.xlu0 %731
  %733 = vrot.lane.b32.xlu0 %v591, 60
  %v734 = vpop.permute.xlu0 %733
  %735 = vrot.lane.b32.xlu0 %v593, 60
  %v736 = vpop.permute.xlu0 %735
  %737 = vrot.lane.b32.xlu0 %v642, 60
  %v738 = vpop.permute.xlu0 %737
  %739 = vrot.lane.b32.xlu0 %v595, 60
  %v740 = vpop.permute.xlu0 %739
  %741 = vrot.lane.b32.xlu0 %v597, 60
  %v742 = vpop.permute.xlu0 %741
  %743 = vrot.lane.b32.xlu0 %v645, 60
  %v744 = vpop.permute.xlu0 %743
  %v745 = vsel %vm684, %v722, %v724
  %v746 = vsel %vm684, %v724, %v726
  %v747 = vsel %vm684, %v728, %v730
  %v748 = vsel %vm684, %v730, %v732
  %v749 = vsel %vm684, %v734, %v736
  %v750 = vsel %vm684, %v736, %v738
  %v751 = vsel %vm684, %v740, %v742
  %v752 = vsel %vm684, %v742, %v744
  %v761 = vmax.f32 %v530, %v745
  %v762 = vmax.f32 %v581, %v746
  %v763 = vmax.f32 %v534, %v747
  %v764 = vmax.f32 %v585, %v748
  %v765 = vmax.f32 %v540, %v749
  %v766 = vmax.f32 %v591, %v750
  %v767 = vmax.f32 %v544, %v751
  %v768 = vmax.f32 %v595, %v752
  %777 = vrot.lane.b32.xlu0 %v761, 120
  %v778 = vpop.permute.xlu0 %777
  %779 = vrot.lane.b32.xlu0 %v762, 120
  %v780 = vpop.permute.xlu0 %779
  %781 = vrot.lane.b32.xlu0 %v763, 120
  %v782 = vpop.permute.xlu0 %781
  %783 = vrot.lane.b32.xlu0 %v764, 120
  %v784 = vpop.permute.xlu0 %783
  %785 = vrot.lane.b32.xlu0 %v765, 120
  %v786 = vpop.permute.xlu0 %785
  %787 = vrot.lane.b32.xlu0 %v766, 120
  %v788 = vpop.permute.xlu0 %787
  %789 = vrot.lane.b32.xlu0 %v767, 120
  %v790 = vpop.permute.xlu0 %789
  %791 = vrot.lane.b32.xlu0 %v768, 120
  %v792 = vpop.permute.xlu0 %791
  %vm793 = vcmask 982016
  %v794 = vsel %vm793, %v778, %v780
  %v795 = vsel %vm793, %v782, %v784
  %v796 = vsel %vm793, %v786, %v788
  %v797 = vsel %vm793, %v790, %v792
  %v806 = vmax.f32 %v701, %v794
  %v807 = vmax.f32 %v702, %v780
  %v808 = vmax.f32 %v703, %v795
  %v809 = vmax.f32 %v704, %v784
  %v810 = vmax.f32 %v705, %v796
  %v811 = vmax.f32 %v706, %v788
  %v812 = vmax.f32 %v707, %v797
  %v813 = vmax.f32 %v708, %v792
  %v814 = vld [vmem:[%s2] sm:$0xff]
  %v815 = vld [vmem:[%s2 + $0x8] sm:$0xff]
  %v816 = vld [vmem:[%s2 + $0x10] sm:$0xff]
  %v817 = vld [vmem:[%s2 + $0x18] sm:$0xff]
  %819 = vset.pattern.permute.xlu0 0
  %820 = vperm.xlu0 %819, %v814
  %v821 = vpop.permute.xlu0 %820
  %824 = vset.pattern.permute.xlu0 0
  %825 = vperm.xlu0 %824, %v815
  %v826 = vpop.permute.xlu0 %825
  %829 = vset.pattern.permute.xlu0 0
  %830 = vperm.xlu0 %829, %v816
  %v831 = vpop.permute.xlu0 %830
  %834 = vset.pattern.permute.xlu0 0
  %835 = vperm.xlu0 %834, %v817
  %v836 = vpop.permute.xlu0 %835
  %v838 = vadd.f32 %v806, %v821
  %v839 = vadd.f32 %v807, %v821
  %v840 = vadd.f32 %v808, %v826
  %v841 = vadd.f32 %v809, %v826
  %v842 = vadd.f32 %v810, %v831
  %v843 = vadd.f32 %v811, %v831
  %v844 = vadd.f32 %v812, %v836
  %v845 = vadd.f32 %v813, %v836
  %v846 = vmax.f32 %v838, 0.0
  %v847 = vmax.f32 %v839, 0.0
  %v848 = vmax.f32 %v840, 0.0
  %v849 = vmax.f32 %v841, 0.0
  %v850 = vmax.f32 %v842, 0.0
  %v851 = vmax.f32 %v843, 0.0
  %v852 = vmax.f32 %v844, 0.0
  %v853 = vmax.f32 %v845, 0.0
  %vm854 = vcmask 400384
  %855 = vst.msk [vmem:[%s3] sm:$0xff] %vm854, %v846
  %856 = vst.msk [vmem:[%s3 + $0x8] sm:$0xff] %vm854, %v848
  %857 = vst.msk [vmem:[%s3 + $0x10] sm:$0xff] %vm854, %v850
  %858 = vst.msk [vmem:[%s3 + $0x18] sm:$0xff] %vm854, %v852
  %863 = vrot.lane.b32.xlu0 %v846, 79
  %v864 = vpop.permute.xlu0 %863
  %865 = vrot.lane.b32.xlu0 %v848, 79
  %v866 = vpop.permute.xlu0 %865
  %867 = vrot.lane.b32.xlu0 %v850, 79
  %v868 = vpop.permute.xlu0 %867
  %869 = vrot.lane.b32.xlu0 %v852, 79
  %v870 = vpop.permute.xlu0 %869
  %s875 = scalar_lea.vmem %s3, 32
  %876 = vst.msk [vmem:[%s875] sm:$0xff] %vm854, %v864
  %877 = vst.msk [vmem:[%s875 + $0x8] sm:$0xff] %vm854, %v866
  %878 = vst.msk [vmem:[%s875 + $0x10] sm:$0xff] %vm854, %v868
  %879 = vst.msk [vmem:[%s875 + $0x18] sm:$0xff] %vm854, %v870
  %884 = vrot.lane.b32.xlu0 %v846, 30
  %v885 = vpop.permute.xlu0 %884
  %886 = vrot.lane.b32.xlu0 %v847, 30
  %v887 = vpop.permute.xlu0 %886
  %888 = vrot.lane.b32.xlu0 %v848, 30
  %v889 = vpop.permute.xlu0 %888
  %890 = vrot.lane.b32.xlu0 %v849, 30
  %v891 = vpop.permute.xlu0 %890
  %892 = vrot.lane.b32.xlu0 %v850, 30
  %v893 = vpop.permute.xlu0 %892
  %894 = vrot.lane.b32.xlu0 %v851, 30
  %v895 = vpop.permute.xlu0 %894
  %896 = vrot.lane.b32.xlu0 %v852, 30
  %v897 = vpop.permute.xlu0 %896
  %898 = vrot.lane.b32.xlu0 %v853, 30
  %v899 = vpop.permute.xlu0 %898
  %vm900 = vcmask 244736
  %v901 = vsel %vm900, %v885, %v887
  %v902 = vsel %vm900, %v889, %v891
  %v903 = vsel %vm900, %v893, %v895
  %v904 = vsel %vm900, %v897, %v899
  %s909 = scalar_lea.vmem %s3, 64
  %910 = vst.msk [vmem:[%s909] sm:$0xff] %vm854, %v901
  %911 = vst.msk [vmem:[%s909 + $0x8] sm:$0xff] %vm854, %v902
  %912 = vst.msk [vmem:[%s909 + $0x10] sm:$0xff] %vm854, %v903
  %913 = vst.msk [vmem:[%s909 + $0x18] sm:$0xff] %vm854, %v904
  %914 = vrot.lane.b32.xlu0 %v847, 109
  %v915 = vpop.permute.xlu0 %914
  %916 = vrot.lane.b32.xlu0 %v849, 109
  %v917 = vpop.permute.xlu0 %916
  %918 = vrot.lane.b32.xlu0 %v851, 109
  %v919 = vpop.permute.xlu0 %918
  %920 = vrot.lane.b32.xlu0 %v853, 109
  %v921 = vpop.permute.xlu0 %920
  %s926 = scalar_lea.vmem %s3, 96
  %927 = vst.msk [vmem:[%s926] sm:$0xff] %vm854, %v915
  %928 = vst.msk [vmem:[%s926 + $0x8] sm:$0xff] %vm854, %v917
  %929 = vst.msk [vmem:[%s926 + $0x10] sm:$0xff] %vm854, %v919
  %930 = vst.msk [vmem:[%s926 + $0x18] sm:$0xff] %vm854, %v921
  // Predicated region
  $region14: #{pipeline.4} parent=0 // pred_check
    _
  $region15: #{pipeline.4} parent=0 // pred_check_branch
    %932 = sbr.rel (0) target = $region17
  $region16: #{pipeline.4} parent=0 // pred_region
    _
  $region17: #{pipeline.4} parent=0 // pred_fallthru
    _
  // Predicated region
  $region18: #{pipeline.4} parent=0 // pred_check
    _
  $region19: #{pipeline.4} parent=0 // pred_check_branch
    %934 = sbr.rel (0) target = $region21
  $region20: #{pipeline.4} parent=0 // pred_region
    _
  $region21: #{pipeline.4} parent=0 // pred_fallthru
    _

// kernel: pipeline.5
$region0: #{pipeline.5}
  #allocation0 [shape = 'u32[]', space=smem, size = 0x4, offset = 0x4, fixed_abs, tag = 'smem constant byte address 0x4 - core index']
  #allocation1 [shape = 'u32[144,128]{1,0:T(1,128)}', space=vmem, size = 0x12000, scoped, tag = 'internal scratch']
  %s0 = inlined_call_operand.vmem [shape: bf16[2,3136], index: 0, kind: input, shape index: {}]
  %s1 = inlined_call_operand.vmem [shape: bf16[3136,128], index: 1, kind: input, shape index: {}]
  %s2 = inlined_call_operand.vmem [shape: f32[1,128], index: 2, kind: input, shape index: {}]
  %s3 = inlined_call_operand.vmem [shape: bf16[128,64], index: 3, kind: input, shape index: {}]
  %s4 = inlined_call_operand.vmem [shape: f32[1,64], index: 4, kind: input, shape index: {}]
  %s5 = inlined_call_operand.vmem [shape: bf16[64,128], index: 5, kind: input, shape index: {}]
  %s6 = inlined_call_operand.vmem [shape: f32[1,128], index: 6, kind: input, shape index: {}]
  %s7 = inlined_call_operand.hbm [shape: f32[2,128], index: 7, kind: output, shape index: {}]
  %s8 = sld [smem:[#allocation0]]
  $region38: #{pipeline.5} parent=0
    _
  %s10 = ssub.s32 1, %s8
  %s11 = scalar_select 0, %s10, %s8
  $region1: #{pipeline.5} parent=0
    #allocation2 [shape = 'u8[1024]{0}', space=vmem, size = 0x400, scoped, tag = 'output window, operand 0, single buffered']
    #allocation3 [shape = 's32[1]{0}', space=sflag, size = 0x4, scoped, tag = 'scoped memory for pipeline.5']
    %12 = vsyncpa [#allocation3], 0
    // Predicated region
    $region2: #{pipeline.5} parent=1 // pred_check
      _
    $region3: #{pipeline.5} parent=1 // pred_check_branch
      %14 = sbr.rel (0) target = $region5
    $region4: #{pipeline.5} parent=1 // pred_region
      _
    $region5: #{pipeline.5} parent=1 // pred_fallthru
      _
    // Predicated region
    $region6: #{pipeline.5} parent=1 // pred_check
      _
    $region7: #{pipeline.5} parent=1 // pred_check_branch
      %16 = sbr.rel (0) target = $region9
    $region8: #{pipeline.5} parent=1 // pred_region
      _
    $region9: #{pipeline.5} parent=1 // pred_fallthru
      _
    // Predicated region
    $region10: #{pipeline.5} parent=1 // pred_check
      _
    $region11: #{pipeline.5} parent=1 // pred_check_branch
      %18 = sbr.rel (0) target = $region13
    $region12: #{pipeline.5} parent=1 // pred_region
      _
    $region13: #{pipeline.5} parent=1 // pred_fallthru
      _
    // Predicated region
    $region14: #{pipeline.5} parent=1 // pred_check
      _
    $region15: #{pipeline.5} parent=1 // pred_check_branch
      %20 = sbr.rel (0) target = $region17
    $region16: #{pipeline.5} parent=1 // pred_region
      _
    $region17: #{pipeline.5} parent=1 // pred_fallthru
      _
    // Predicated region
    $region18: #{pipeline.5} parent=1 // pred_check
      _
    $region19: #{pipeline.5} parent=1 // pred_check_branch
      %22 = sbr.rel (0) target = $region21
    $region20: #{pipeline.5} parent=1 // pred_region
      _
    $region21: #{pipeline.5} parent=1 // pred_fallthru
      _
    // Predicated region
    $region22: #{pipeline.5} parent=1 // pred_check
      _
    $region23: #{pipeline.5} parent=1 // pred_check_branch
      %24 = sbr.rel (0) target = $region25
    $region24: #{pipeline.5} parent=1 // pred_region
      _
    $region25: #{pipeline.5} parent=1 // pred_fallthru
      _
    // Predicated region
    $region26: #{pipeline.5} parent=1 // pred_check
      _
    $region27: #{pipeline.5} parent=1 // pred_check_branch
      %26 = sbr.rel (0) target = $region29
    $region28: #{pipeline.5} parent=1 // pred_region
      _
    $region29: #{pipeline.5} parent=1 // pred_fallthru
      _
    %v28 = vld [vmem:[%s0] sm:$0xff]
    %v29 = vld [vmem:[%s0 + $0x8] sm:$0xff]
    %v30 = vld [vmem:[%s0 + $0x10] sm:$0xff]
    %v31 = vld [vmem:[%s0 + $0x18] sm:$0x1]
    %v32 = vld [vmem:[%s1] sm:$0xf]
    %v33 = vld [vmem:[%s1 + $0x4] sm:$0xf]
    %v34 = vld [vmem:[%s1 + $0x8] sm:$0xf]
    %v35 = vld [vmem:[%s1 + $0xc] sm:$0xf]
    %v36 = vld [vmem:[%s1 + $0x10] sm:$0xf]
    %v37 = vld [vmem:[%s1 + $0x14] sm:$0xf]
    %v38 = vld [vmem:[%s1 + $0x18] sm:$0xf]
    %v39 = vld [vmem:[%s1 + $0x1c] sm:$0xf]
    %v40 = vld [vmem:[%s1 + $0x20] sm:$0xf]
    %v41 = vld [vmem:[%s1 + $0x24] sm:$0xf]
    %v42 = vld [vmem:[%s1 + $0x28] sm:$0xf]
    %v43 = vld [vmem:[%s1 + $0x2c] sm:$0xf]
    %v44 = vld [vmem:[%s1 + $0x30] sm:$0xf]
    %v45 = vld [vmem:[%s1 + $0x34] sm:$0xf]
    %v46 = vld [vmem:[%s1 + $0x38] sm:$0xf]
    %v47 = vld [vmem:[%s1 + $0x3c] sm:$0xf]
    %v48 = vld [vmem:[%s1 + $0x40] sm:$0xf]
    %v49 = vld [vmem:[%s1 + $0x44] sm:$0xf]
    %v50 = vld [vmem:[%s1 + $0x48] sm:$0xf]
    %v51 = vld [vmem:[%s1 + $0x4c] sm:$0xf]
    %v52 = vld [vmem:[%s1 + $0x50] sm:$0xf]
    %v53 = vld [vmem:[%s1 + $0x54] sm:$0xf]
    %v54 = vld [vmem:[%s1 + $0x58] sm:$0xf]
    %v55 = vld [vmem:[%s1 + $0x5c] sm:$0xf]
    %v56 = vld [vmem:[%s1 + $0x60] sm:$0xf]
    %v57 = vld [vmem:[%s1 + $0x64] sm:$0xf]
    %v58 = vld [vmem:[%s1 + $0x68] sm:$0xf]
    %v59 = vld [vmem:[%s1 + $0x6c] sm:$0xf]
    %v60 = vld [vmem:[%s1 + $0x70] sm:$0xf]
    %v61 = vld [vmem:[%s1 + $0x74] sm:$0xf]
    %v62 = vld [vmem:[%s1 + $0x78] sm:$0xf]
    %v63 = vld [vmem:[%s1 + $0x7c] sm:$0xf]
    %v64 = vld [vmem:[%s1 + $0x80] sm:$0xf]
    %v65 = vld [vmem:[%s1 + $0x84] sm:$0xf]
    %v66 = vld [vmem:[%s1 + $0x88] sm:$0xf]
    %v67 = vld [vmem:[%s1 + $0x8c] sm:$0xf]
    %v68 = vld [vmem:[%s1 + $0x90] sm:$0xf]
    %v69 = vld [vmem:[%s1 + $0x94] sm:$0xf]
    %v70 = vld [vmem:[%s1 + $0x98] sm:$0xf]
    %v71 = vld [vmem:[%s1 + $0x9c] sm:$0xf]
    %v72 = vld [vmem:[%s1 + $0xa0] sm:$0xf]
    %v73 = vld [vmem:[%s1 + $0xa4] sm:$0xf]
    %v74 = vld [vmem:[%s1 + $0xa8] sm:$0xf]
    %v75 = vld [vmem:[%s1 + $0xac] sm:$0xf]
    %v76 = vld [vmem:[%s1 + $0xb0] sm:$0xf]
    %v77 = vld [vmem:[%s1 + $0xb4] sm:$0xf]
    %v78 = vld [vmem:[%s1 + $0xb8] sm:$0xf]
    %v79 = vld [vmem:[%s1 + $0xbc] sm:$0xf]
    %v80 = vld [vmem:[%s1 + $0xc0] sm:$0xf]
    %v81 = vld [vmem:[%s1 + $0xc4] sm:$0xf]
    %v82 = vld [vmem:[%s1 + $0xc8] sm:$0xf]
    %v83 = vld [vmem:[%s1 + $0xcc] sm:$0xf]
    %v84 = vld [vmem:[%s1 + $0xd0] sm:$0xf]
    %v85 = vld [vmem:[%s1 + $0xd4] sm:$0xf]
    %v86 = vld [vmem:[%s1 + $0xd8] sm:$0xf]
    %v87 = vld [vmem:[%s1 + $0xdc] sm:$0xf]
    %v88 = vld [vmem:[%s1 + $0xe0] sm:$0xf]
    %v89 = vld [vmem:[%s1 + $0xe4] sm:$0xf]
    %v90 = vld [vmem:[%s1 + $0xe8] sm:$0xf]
    %v91 = vld [vmem:[%s1 + $0xec] sm:$0xf]
    %v92 = vld [vmem:[%s1 + $0xf0] sm:$0xf]
    %v93 = vld [vmem:[%s1 + $0xf4] sm:$0xf]
    %v94 = vld [vmem:[%s1 + $0xf8] sm:$0xf]
    %v95 = vld [vmem:[%s1 + $0xfc] sm:$0xf]
    %v96 = vld [vmem:[%s1 + $0x100] sm:$0xf]
    %v97 = vld [vmem:[%s1 + $0x104] sm:$0xf]
    %v98 = vld [vmem:[%s1 + $0x108] sm:$0xf]
    %v99 = vld [vmem:[%s1 + $0x10c] sm:$0xf]
    %v100 = vld [vmem:[%s1 + $0x110] sm:$0xf]
    %v101 = vld [vmem:[%s1 + $0x114] sm:$0xf]
    %v102 = vld [vmem:[%s1 + $0x118] sm:$0xf]
    %v103 = vld [vmem:[%s1 + $0x11c] sm:$0xf]
    %v104 = vld [vmem:[%s1 + $0x120] sm:$0xf]
    %v105 = vld [vmem:[%s1 + $0x124] sm:$0xf]
    %v106 = vld [vmem:[%s1 + $0x128] sm:$0xf]
    %v107 = vld [vmem:[%s1 + $0x12c] sm:$0xf]
    %v108 = vld [vmem:[%s1 + $0x130] sm:$0xf]
    %v109 = vld [vmem:[%s1 + $0x134] sm:$0xf]
    %v110 = vld [vmem:[%s1 + $0x138] sm:$0xf]
    %v111 = vld [vmem:[%s1 + $0x13c] sm:$0xf]
    %v112 = vld [vmem:[%s1 + $0x140] sm:$0xf]
    %v113 = vld [vmem:[%s1 + $0x144] sm:$0xf]
    %v114 = vld [vmem:[%s1 + $0x148] sm:$0xf]
    %v115 = vld [vmem:[%s1 + $0x14c] sm:$0xf]
    %v116 = vld [vmem:[%s1 + $0x150] sm:$0xf]
    %v117 = vld [vmem:[%s1 + $0x154] sm:$0xf]
    %v118 = vld [vmem:[%s1 + $0x158] sm:$0xf]
    %v119 = vld [vmem:[%s1 + $0x15c] sm:$0xf]
    %v120 = vld [vmem:[%s1 + $0x160] sm:$0xf]
    %v121 = vld [vmem:[%s1 + $0x164] sm:$0xf]
    %v122 = vld [vmem:[%s1 + $0x168] sm:$0xf]
    %v123 = vld [vmem:[%s1 + $0x16c] sm:$0xf]
    %v124 = vld [vmem:[%s1 + $0x170] sm:$0xf]
    %v125 = vld [vmem:[%s1 + $0x174] sm:$0xf]
    %v126 = vld [vmem:[%s1 + $0x178] sm:$0xf]
    %v127 = vld [vmem:[%s1 + $0x17c] sm:$0xf]
    %v128 = vld [vmem:[%s1 + $0x180] sm:$0xf]
    %v129 = vld [vmem:[%s1 + $0x184] sm:$0xf]
    %v130 = vld [vmem:[%s1 + $0x188] sm:$0xf]
    %v131 = vld [vmem:[%s1 + $0x18c] sm:$0xf]
    %v132 = vld [vmem:[%s1 + $0x190] sm:$0xf]
    %v133 = vld [vmem:[%s1 + $0x194] sm:$0xf]
    %v134 = vld [vmem:[%s1 + $0x198] sm:$0xf]
    %v135 = vld [vmem:[%s1 + $0x19c] sm:$0xf]
    %v136 = vld [vmem:[%s1 + $0x1a0] sm:$0xf]
    %v137 = vld [vmem:[%s1 + $0x1a4] sm:$0xf]
    %v138 = vld [vmem:[%s1 + $0x1a8] sm:$0xf]
    %v139 = vld [vmem:[%s1 + $0x1ac] sm:$0xf]
    %v140 = vld [vmem:[%s1 + $0x1b0] sm:$0xf]
    %v141 = vld [vmem:[%s1 + $0x1b4] sm:$0xf]
    %v142 = vld [vmem:[%s1 + $0x1b8] sm:$0xf]
    %v143 = vld [vmem:[%s1 + $0x1bc] sm:$0xf]
    %v144 = vld [vmem:[%s1 + $0x1c0] sm:$0xf]
    %v145 = vld [vmem:[%s1 + $0x1c4] sm:$0xf]
    %v146 = vld [vmem:[%s1 + $0x1c8] sm:$0xf]
    %v147 = vld [vmem:[%s1 + $0x1cc] sm:$0xf]
    %v148 = vld [vmem:[%s1 + $0x1d0] sm:$0xf]
    %v149 = vld [vmem:[%s1 + $0x1d4] sm:$0xf]
    %v150 = vld [vmem:[%s1 + $0x1d8] sm:$0xf]
    %v151 = vld [vmem:[%s1 + $0x1dc] sm:$0xf]
    %v152 = vld [vmem:[%s1 + $0x1e0] sm:$0xf]
    %v153 = vld [vmem:[%s1 + $0x1e4] sm:$0xf]
    %v154 = vld [vmem:[%s1 + $0x1e8] sm:$0xf]
    %v155 = vld [vmem:[%s1 + $0x1ec] sm:$0xf]
    %v156 = vld [vmem:[%s1 + $0x1f0] sm:$0xf]
    %v157 = vld [vmem:[%s1 + $0x1f4] sm:$0xf]
    %v158 = vld [vmem:[%s1 + $0x1f8] sm:$0xf]
    %v159 = vld [vmem:[%s1 + $0x1fc] sm:$0xf]
    %v160 = vld [vmem:[%s1 + $0x200] sm:$0xf]
    %v161 = vld [vmem:[%s1 + $0x204] sm:$0xf]
    %v162 = vld [vmem:[%s1 + $0x208] sm:$0xf]
    %v163 = vld [vmem:[%s1 + $0x20c] sm:$0xf]
    %v164 = vld [vmem:[%s1 + $0x210] sm:$0xf]
    %v165 = vld [vmem:[%s1 + $0x214] sm:$0xf]
    %v166 = vld [vmem:[%s1 + $0x218] sm:$0xf]
    %v167 = vld [vmem:[%s1 + $0x21c] sm:$0xf]
    %v168 = vld [vmem:[%s1 + $0x220] sm:$0xf]
    %v169 = vld [vmem:[%s1 + $0x224] sm:$0xf]
    %v170 = vld [vmem:[%s1 + $0x228] sm:$0xf]
    %v171 = vld [vmem:[%s1 + $0x22c] sm:$0xf]
    %v172 = vld [vmem:[%s1 + $0x230] sm:$0xf]
    %v173 = vld [vmem:[%s1 + $0x234] sm:$0xf]
    %v174 = vld [vmem:[%s1 + $0x238] sm:$0xf]
    %v175 = vld [vmem:[%s1 + $0x23c] sm:$0xf]
    %v176 = vld [vmem:[%s1 + $0x240] sm:$0xf]
    %v177 = vld [vmem:[%s1 + $0x244] sm:$0xf]
    %v178 = vld [vmem:[%s1 + $0x248] sm:$0xf]
    %v179 = vld [vmem:[%s1 + $0x24c] sm:$0xf]
    %v180 = vld [vmem:[%s1 + $0x250] sm:$0xf]
    %v181 = vld [vmem:[%s1 + $0x254] sm:$0xf]
    %v182 = vld [vmem:[%s1 + $0x258] sm:$0xf]
    %v183 = vld [vmem:[%s1 + $0x25c] sm:$0xf]
    %v184 = vld [vmem:[%s1 + $0x260] sm:$0xf]
    %v185 = vld [vmem:[%s1 + $0x264] sm:$0xf]
    %v186 = vld [vmem:[%s1 + $0x268] sm:$0xf]
    %v187 = vld [vmem:[%s1 + $0x26c] sm:$0xf]
    %v188 = vld [vmem:[%s1 + $0x270] sm:$0xf]
    %v189 = vld [vmem:[%s1 + $0x274] sm:$0xf]
    %v190 = vld [vmem:[%s1 + $0x278] sm:$0xf]
    %v191 = vld [vmem:[%s1 + $0x27c] sm:$0xf]
    %v192 = vld [vmem:[%s1 + $0x280] sm:$0xf]
    %v193 = vld [vmem:[%s1 + $0x284] sm:$0xf]
    %v194 = vld [vmem:[%s1 + $0x288] sm:$0xf]
    %v195 = vld [vmem:[%s1 + $0x28c] sm:$0xf]
    %v196 = vld [vmem:[%s1 + $0x290] sm:$0xf]
    %v197 = vld [vmem:[%s1 + $0x294] sm:$0xf]
    %v198 = vld [vmem:[%s1 + $0x298] sm:$0xf]
    %v199 = vld [vmem:[%s1 + $0x29c] sm:$0xf]
    %v200 = vld [vmem:[%s1 + $0x2a0] sm:$0xf]
    %v201 = vld [vmem:[%s1 + $0x2a4] sm:$0xf]
    %v202 = vld [vmem:[%s1 + $0x2a8] sm:$0xf]
    %v203 = vld [vmem:[%s1 + $0x2ac] sm:$0xf]
    %v204 = vld [vmem:[%s1 + $0x2b0] sm:$0xf]
    %v205 = vld [vmem:[%s1 + $0x2b4] sm:$0xf]
    %v206 = vld [vmem:[%s1 + $0x2b8] sm:$0xf]
    %v207 = vld [vmem:[%s1 + $0x2bc] sm:$0xf]
    %v208 = vld [vmem:[%s1 + $0x2c0] sm:$0xf]
    %v209 = vld [vmem:[%s1 + $0x2c4] sm:$0xf]
    %v210 = vld [vmem:[%s1 + $0x2c8] sm:$0xf]
    %v211 = vld [vmem:[%s1 + $0x2cc] sm:$0xf]
    %v212 = vld [vmem:[%s1 + $0x2d0] sm:$0xf]
    %v213 = vld [vmem:[%s1 + $0x2d4] sm:$0xf]
    %v214 = vld [vmem:[%s1 + $0x2d8] sm:$0xf]
    %v215 = vld [vmem:[%s1 + $0x2dc] sm:$0xf]
    %v216 = vld [vmem:[%s1 + $0x2e0] sm:$0xf]
    %v217 = vld [vmem:[%s1 + $0x2e4] sm:$0xf]
    %v218 = vld [vmem:[%s1 + $0x2e8] sm:$0xf]
    %v219 = vld [vmem:[%s1 + $0x2ec] sm:$0xf]
    %v220 = vld [vmem:[%s1 + $0x2f0] sm:$0xf]
    %v221 = vld [vmem:[%s1 + $0x2f4] sm:$0xf]
    %v222 = vld [vmem:[%s1 + $0x2f8] sm:$0xf]
    %v223 = vld [vmem:[%s1 + $0x2fc] sm:$0xf]
    %v224 = vld [vmem:[%s1 + $0x300] sm:$0xf]
    %v225 = vld [vmem:[%s1 + $0x304] sm:$0xf]
    %v226 = vld [vmem:[%s1 + $0x308] sm:$0xf]
    %v227 = vld [vmem:[%s1 + $0x30c] sm:$0xf]
    %v228 = vld [vmem:[%s1 + $0x310] sm:$0xf]
    %v229 = vld [vmem:[%s1 + $0x314] sm:$0xf]
    %v230 = vld [vmem:[%s1 + $0x318] sm:$0xf]
    %v231 = vld [vmem:[%s1 + $0x31c] sm:$0xf]
    %v232 = vld [vmem:[%s1 + $0x320] sm:$0xf]
    %v233 = vld [vmem:[%s1 + $0x324] sm:$0xf]
    %v234 = vld [vmem:[%s1 + $0x328] sm:$0xf]
    %v235 = vld [vmem:[%s1 + $0x32c] sm:$0xf]
    %v236 = vld [vmem:[%s1 + $0x330] sm:$0xf]
    %v237 = vld [vmem:[%s1 + $0x334] sm:$0xf]
    %v238 = vld [vmem:[%s1 + $0x338] sm:$0xf]
    %v239 = vld [vmem:[%s1 + $0x33c] sm:$0xf]
    %v240 = vld [vmem:[%s1 + $0x340] sm:$0xf]
    %v241 = vld [vmem:[%s1 + $0x344] sm:$0xf]
    %v242 = vld [vmem:[%s1 + $0x348] sm:$0xf]
    %v243 = vld [vmem:[%s1 + $0x34c] sm:$0xf]
    %v244 = vld [vmem:[%s1 + $0x350] sm:$0xf]
    %v245 = vld [vmem:[%s1 + $0x354] sm:$0xf]
    %v246 = vld [vmem:[%s1 + $0x358] sm:$0xf]
    %v247 = vld [vmem:[%s1 + $0x35c] sm:$0xf]
    %v248 = vld [vmem:[%s1 + $0x360] sm:$0xf]
    %v249 = vld [vmem:[%s1 + $0x364] sm:$0xf]
    %v250 = vld [vmem:[%s1 + $0x368] sm:$0xf]
    %v251 = vld [vmem:[%s1 + $0x36c] sm:$0xf]
    %v252 = vld [vmem:[%s1 + $0x370] sm:$0xf]
    %v253 = vld [vmem:[%s1 + $0x374] sm:$0xf]
    %v254 = vld [vmem:[%s1 + $0x378] sm:$0xf]
    %v255 = vld [vmem:[%s1 + $0x37c] sm:$0xf]
    %v256 = vld [vmem:[%s1 + $0x380] sm:$0xf]
    %v257 = vld [vmem:[%s1 + $0x384] sm:$0xf]
    %v258 = vld [vmem:[%s1 + $0x388] sm:$0xf]
    %v259 = vld [vmem:[%s1 + $0x38c] sm:$0xf]
    %v260 = vld [vmem:[%s1 + $0x390] sm:$0xf]
    %v261 = vld [vmem:[%s1 + $0x394] sm:$0xf]
    %v262 = vld [vmem:[%s1 + $0x398] sm:$0xf]
    %v263 = vld [vmem:[%s1 + $0x39c] sm:$0xf]
    %v264 = vld [vmem:[%s1 + $0x3a0] sm:$0xf]
    %v265 = vld [vmem:[%s1 + $0x3a4] sm:$0xf]
    %v266 = vld [vmem:[%s1 + $0x3a8] sm:$0xf]
    %v267 = vld [vmem:[%s1 + $0x3ac] sm:$0xf]
    %v268 = vld [vmem:[%s1 + $0x3b0] sm:$0xf]
    %v269 = vld [vmem:[%s1 + $0x3b4] sm:$0xf]
    %v270 = vld [vmem:[%s1 + $0x3b8] sm:$0xf]
    %v271 = vld [vmem:[%s1 + $0x3bc] sm:$0xf]
    %v272 = vld [vmem:[%s1 + $0x3c0] sm:$0xf]
    %v273 = vld [vmem:[%s1 + $0x3c4] sm:$0xf]
    %v274 = vld [vmem:[%s1 + $0x3c8] sm:$0xf]
    %v275 = vld [vmem:[%s1 + $0x3cc] sm:$0xf]
    %v276 = vld [vmem:[%s1 + $0x3d0] sm:$0xf]
    %v277 = vld [vmem:[%s1 + $0x3d4] sm:$0xf]
    %v278 = vld [vmem:[%s1 + $0x3d8] sm:$0xf]
    %v279 = vld [vmem:[%s1 + $0x3dc] sm:$0xf]
    %v280 = vld [vmem:[%s1 + $0x3e0] sm:$0xf]
    %v281 = vld [vmem:[%s1 + $0x3e4] sm:$0xf]
    %v282 = vld [vmem:[%s1 + $0x3e8] sm:$0xf]
    %v283 = vld [vmem:[%s1 + $0x3ec] sm:$0xf]
    %v284 = vld [vmem:[%s1 + $0x3f0] sm:$0xf]
    %v285 = vld [vmem:[%s1 + $0x3f4] sm:$0xf]
    %v286 = vld [vmem:[%s1 + $0x3f8] sm:$0xf]
    %v287 = vld [vmem:[%s1 + $0x3fc] sm:$0xf]
    %v288 = vld [vmem:[%s1 + $0x400] sm:$0xf]
    %v289 = vld [vmem:[%s1 + $0x404] sm:$0xf]
    %v290 = vld [vmem:[%s1 + $0x408] sm:$0xf]
    %v291 = vld [vmem:[%s1 + $0x40c] sm:$0xf]
    %v292 = vld [vmem:[%s1 + $0x410] sm:$0xf]
    %v293 = vld [vmem:[%s1 + $0x414] sm:$0xf]
    %v294 = vld [vmem:[%s1 + $0x418] sm:$0xf]
    %v295 = vld [vmem:[%s1 + $0x41c] sm:$0xf]
    %v296 = vld [vmem:[%s1 + $0x420] sm:$0xf]
    %v297 = vld [vmem:[%s1 + $0x424] sm:$0xf]
    %v298 = vld [vmem:[%s1 + $0x428] sm:$0xf]
    %v299 = vld [vmem:[%s1 + $0x42c] sm:$0xf]
    %v300 = vld [vmem:[%s1 + $0x430] sm:$0xf]
    %v301 = vld [vmem:[%s1 + $0x434] sm:$0xf]
    %v302 = vld [vmem:[%s1 + $0x438] sm:$0xf]
    %v303 = vld [vmem:[%s1 + $0x43c] sm:$0xf]
    %v304 = vld [vmem:[%s1 + $0x440] sm:$0xf]
    %v305 = vld [vmem:[%s1 + $0x444] sm:$0xf]
    %v306 = vld [vmem:[%s1 + $0x448] sm:$0xf]
    %v307 = vld [vmem:[%s1 + $0x44c] sm:$0xf]
    %v308 = vld [vmem:[%s1 + $0x450] sm:$0xf]
    %v309 = vld [vmem:[%s1 + $0x454] sm:$0xf]
    %v310 = vld [vmem:[%s1 + $0x458] sm:$0xf]
    %v311 = vld [vmem:[%s1 + $0x45c] sm:$0xf]
    %v312 = vld [vmem:[%s1 + $0x460] sm:$0xf]
    %v313 = vld [vmem:[%s1 + $0x464] sm:$0xf]
    %v314 = vld [vmem:[%s1 + $0x468] sm:$0xf]
    %v315 = vld [vmem:[%s1 + $0x46c] sm:$0xf]
    %v316 = vld [vmem:[%s1 + $0x470] sm:$0xf]
    %v317 = vld [vmem:[%s1 + $0x474] sm:$0xf]
    %v318 = vld [vmem:[%s1 + $0x478] sm:$0xf]
    %v319 = vld [vmem:[%s1 + $0x47c] sm:$0xf]
    %v320 = vld [vmem:[%s1 + $0x480] sm:$0xf]
    %v321 = vld [vmem:[%s1 + $0x484] sm:$0xf]
    %v322 = vld [vmem:[%s1 + $0x488] sm:$0xf]
    %v323 = vld [vmem:[%s1 + $0x48c] sm:$0xf]
    %v324 = vld [vmem:[%s1 + $0x490] sm:$0xf]
    %v325 = vld [vmem:[%s1 + $0x494] sm:$0xf]
    %v326 = vld [vmem:[%s1 + $0x498] sm:$0xf]
    %v327 = vld [vmem:[%s1 + $0x49c] sm:$0xf]
    %v328 = vld [vmem:[%s1 + $0x4a0] sm:$0xf]
    %v329 = vld [vmem:[%s1 + $0x4a4] sm:$0xf]
    %v330 = vld [vmem:[%s1 + $0x4a8] sm:$0xf]
    %v331 = vld [vmem:[%s1 + $0x4ac] sm:$0xf]
    %v332 = vld [vmem:[%s1 + $0x4b0] sm:$0xf]
    %v333 = vld [vmem:[%s1 + $0x4b4] sm:$0xf]
    %v334 = vld [vmem:[%s1 + $0x4b8] sm:$0xf]
    %v335 = vld [vmem:[%s1 + $0x4bc] sm:$0xf]
    %v336 = vld [vmem:[%s1 + $0x4c0] sm:$0xf]
    %v337 = vld [vmem:[%s1 + $0x4c4] sm:$0xf]
    %v338 = vld [vmem:[%s1 + $0x4c8] sm:$0xf]
    %v339 = vld [vmem:[%s1 + $0x4cc] sm:$0xf]
    %v340 = vld [vmem:[%s1 + $0x4d0] sm:$0xf]
    %v341 = vld [vmem:[%s1 + $0x4d4] sm:$0xf]
    %v342 = vld [vmem:[%s1 + $0x4d8] sm:$0xf]
    %v343 = vld [vmem:[%s1 + $0x4dc] sm:$0xf]
    %v344 = vld [vmem:[%s1 + $0x4e0] sm:$0xf]
    %v345 = vld [vmem:[%s1 + $0x4e4] sm:$0xf]
    %v346 = vld [vmem:[%s1 + $0x4e8] sm:$0xf]
    %v347 = vld [vmem:[%s1 + $0x4ec] sm:$0xf]
    %v348 = vld [vmem:[%s1 + $0x4f0] sm:$0xf]
    %v349 = vld [vmem:[%s1 + $0x4f4] sm:$0xf]
    %v350 = vld [vmem:[%s1 + $0x4f8] sm:$0xf]
    %v351 = vld [vmem:[%s1 + $0x4fc] sm:$0xf]
    %v352 = vld [vmem:[%s1 + $0x500] sm:$0xf]
    %v353 = vld [vmem:[%s1 + $0x504] sm:$0xf]
    %v354 = vld [vmem:[%s1 + $0x508] sm:$0xf]
    %v355 = vld [vmem:[%s1 + $0x50c] sm:$0xf]
    %v356 = vld [vmem:[%s1 + $0x510] sm:$0xf]
    %v357 = vld [vmem:[%s1 + $0x514] sm:$0xf]
    %v358 = vld [vmem:[%s1 + $0x518] sm:$0xf]
    %v359 = vld [vmem:[%s1 + $0x51c] sm:$0xf]
    %v360 = vld [vmem:[%s1 + $0x520] sm:$0xf]
    %v361 = vld [vmem:[%s1 + $0x524] sm:$0xf]
    %v362 = vld [vmem:[%s1 + $0x528] sm:$0xf]
    %v363 = vld [vmem:[%s1 + $0x52c] sm:$0xf]
    %v364 = vld [vmem:[%s1 + $0x530] sm:$0xf]
    %v365 = vld [vmem:[%s1 + $0x534] sm:$0xf]
    %v366 = vld [vmem:[%s1 + $0x538] sm:$0xf]
    %v367 = vld [vmem:[%s1 + $0x53c] sm:$0xf]
    %v368 = vld [vmem:[%s1 + $0x540] sm:$0xf]
    %v369 = vld [vmem:[%s1 + $0x544] sm:$0xf]
    %v370 = vld [vmem:[%s1 + $0x548] sm:$0xf]
    %v371 = vld [vmem:[%s1 + $0x54c] sm:$0xf]
    %v372 = vld [vmem:[%s1 + $0x550] sm:$0xf]
    %v373 = vld [vmem:[%s1 + $0x554] sm:$0xf]
    %v374 = vld [vmem:[%s1 + $0x558] sm:$0xf]
    %v375 = vld [vmem:[%s1 + $0x55c] sm:$0xf]
    %v376 = vld [vmem:[%s1 + $0x560] sm:$0xf]
    %v377 = vld [vmem:[%s1 + $0x564] sm:$0xf]
    %v378 = vld [vmem:[%s1 + $0x568] sm:$0xf]
    %v379 = vld [vmem:[%s1 + $0x56c] sm:$0xf]
    %v380 = vld [vmem:[%s1 + $0x570] sm:$0xf]
    %v381 = vld [vmem:[%s1 + $0x574] sm:$0xf]
    %v382 = vld [vmem:[%s1 + $0x578] sm:$0xf]
    %v383 = vld [vmem:[%s1 + $0x57c] sm:$0xf]
    %v384 = vld [vmem:[%s1 + $0x580] sm:$0xf]
    %v385 = vld [vmem:[%s1 + $0x584] sm:$0xf]
    %v386 = vld [vmem:[%s1 + $0x588] sm:$0xf]
    %v387 = vld [vmem:[%s1 + $0x58c] sm:$0xf]
    %v388 = vld [vmem:[%s1 + $0x590] sm:$0xf]
    %v389 = vld [vmem:[%s1 + $0x594] sm:$0xf]
    %v390 = vld [vmem:[%s1 + $0x598] sm:$0xf]
    %v391 = vld [vmem:[%s1 + $0x59c] sm:$0xf]
    %v392 = vld [vmem:[%s1 + $0x5a0] sm:$0xf]
    %v393 = vld [vmem:[%s1 + $0x5a4] sm:$0xf]
    %v394 = vld [vmem:[%s1 + $0x5a8] sm:$0xf]
    %v395 = vld [vmem:[%s1 + $0x5ac] sm:$0xf]
    %v396 = vld [vmem:[%s1 + $0x5b0] sm:$0xf]
    %v397 = vld [vmem:[%s1 + $0x5b4] sm:$0xf]
    %v398 = vld [vmem:[%s1 + $0x5b8] sm:$0xf]
    %v399 = vld [vmem:[%s1 + $0x5bc] sm:$0xf]
    %v400 = vld [vmem:[%s1 + $0x5c0] sm:$0xf]
    %v401 = vld [vmem:[%s1 + $0x5c4] sm:$0xf]
    %v402 = vld [vmem:[%s1 + $0x5c8] sm:$0xf]
    %v403 = vld [vmem:[%s1 + $0x5cc] sm:$0xf]
    %v404 = vld [vmem:[%s1 + $0x5d0] sm:$0xf]
    %v405 = vld [vmem:[%s1 + $0x5d4] sm:$0xf]
    %v406 = vld [vmem:[%s1 + $0x5d8] sm:$0xf]
    %v407 = vld [vmem:[%s1 + $0x5dc] sm:$0xf]
    %v408 = vld [vmem:[%s1 + $0x5e0] sm:$0xf]
    %v409 = vld [vmem:[%s1 + $0x5e4] sm:$0xf]
    %v410 = vld [vmem:[%s1 + $0x5e8] sm:$0xf]
    %v411 = vld [vmem:[%s1 + $0x5ec] sm:$0xf]
    %v412 = vld [vmem:[%s1 + $0x5f0] sm:$0xf]
    %v413 = vld [vmem:[%s1 + $0x5f4] sm:$0xf]
    %v414 = vld [vmem:[%s1 + $0x5f8] sm:$0xf]
    %v415 = vld [vmem:[%s1 + $0x5fc] sm:$0xf]
    %v416 = vld [vmem:[%s1 + $0x600] sm:$0xf]
    %v417 = vld [vmem:[%s1 + $0x604] sm:$0xf]
    %v418 = vld [vmem:[%s1 + $0x608] sm:$0xf]
    %v419 = vld [vmem:[%s1 + $0x60c] sm:$0xf]
    %v420 = vld [vmem:[%s1 + $0x610] sm:$0xf]
    %v421 = vld [vmem:[%s1 + $0x614] sm:$0xf]
    %v422 = vld [vmem:[%s1 + $0x618] sm:$0xf]
    %v423 = vld [vmem:[%s1 + $0x61c] sm:$0xf]
    %v424 = vld [vmem:[%s2] sm:$0x1]
    %v426 = vlaneseq
    %v427 = vshrl.u32 %v426, 7
    %v428 = vsub.s32 0, %v427
    %v429 = vrot.slane %v424, %v428
    %v435 = vcombine.high %v28, %v28
    %v437 = vunpack.c.l.s4 1966171168
    %v438 = vunpack.c.0.s8 %v437
    %v439 = vlaneseq
    %v440 = vshrl.u32 %v439, 7
    %v441 = vsub.s32 %v438, %v440
    %v442 = vrot.slane %v28, %v441
    %v444 = vunpack.c.l.s4 1966171168
    %v445 = vunpack.c.0.s8 %v444
    %v446 = vlaneseq
    %v447 = vshrl.u32 %v446, 7
    %v448 = vsub.s32 %v445, %v447
    %v449 = vrot.slane %v435, %v448
    %v450 = vcombine.high %v442, %v442
    %v451 = vcombine.high %v449, %v449
    %v453 = vunpack.c.l.s4 1966171168
    %v454 = vunpack.c.0.s8 %v453
    %v455 = vlaneseq
    %v456 = vshrl.u32 %v455, 7
    %v457 = vsub.s32 %v454, %v456
    %v458 = vrot.slane %v442, %v457
    %v460 = vunpack.c.l.s4 1966171168
    %v461 = vunpack.c.0.s8 %v460
    %v462 = vlaneseq
    %v463 = vshrl.u32 %v462, 7
    %v464 = vsub.s32 %v461, %v463
    %v465 = vrot.slane %v449, %v464
    %v467 = vunpack.c.l.s4 1966171168
    %v468 = vunpack.c.0.s8 %v467
    %v469 = vlaneseq
    %v470 = vshrl.u32 %v469, 7
    %v471 = vsub.s32 %v468, %v470
    %v472 = vrot.slane %v450, %v471
    %v474 = vunpack.c.l.s4 1966171168
    %v475 = vunpack.c.0.s8 %v474
    %v476 = vlaneseq
    %v477 = vshrl.u32 %v476, 7
    %v478 = vsub.s32 %v475, %v477
    %v479 = vrot.slane %v451, %v478
    %v480 = vcombine.high %v458, %v458
    %v481 = vcombine.high %v465, %v465
    %v482 = vcombine.high %v472, %v472
    %v483 = vcombine.high %v479, %v479
    %v484 = vcombine.high %v29, %v29
    %v486 = vunpack.c.l.s4 1966171168
    %v487 = vunpack.c.0.s8 %v486
    %v488 = vlaneseq
    %v489 = vshrl.u32 %v488, 7
    %v490 = vsub.s32 %v487, %v489
    %v491 = vrot.slane %v29, %v490
    %v493 = vunpack.c.l.s4 1966171168
    %v494 = vunpack.c.0.s8 %v493
    %v495 = vlaneseq
    %v496 = vshrl.u32 %v495, 7
    %v497 = vsub.s32 %v494, %v496
    %v498 = vrot.slane %v484, %v497
    %v499 = vcombine.high %v491, %v491
    %v500 = vcombine.high %v498, %v498
    %v502 = vunpack.c.l.s4 1966171168
    %v503 = vunpack.c.0.s8 %v502
    %v504 = vlaneseq
    %v505 = vshrl.u32 %v504, 7
    %v506 = vsub.s32 %v503, %v505
    %v507 = vrot.slane %v491, %v506
    %v509 = vunpack.c.l.s4 1966171168
    %v510 = vunpack.c.0.s8 %v509
    %v511 = vlaneseq
    %v512 = vshrl.u32 %v511, 7
    %v513 = vsub.s32 %v510, %v512
    %v514 = vrot.slane %v498, %v513
    %v516 = vunpack.c.l.s4 1966171168
    %v517 = vunpack.c.0.s8 %v516
    %v518 = vlaneseq
    %v519 = vshrl.u32 %v518, 7
    %v520 = vsub.s32 %v517, %v519
    %v521 = vrot.slane %v499, %v520
    %v523 = vunpack.c.l.s4 1966171168
    %v524 = vunpack.c.0.s8 %v523
    %v525 = vlaneseq
    %v526 = vshrl.u32 %v525, 7
    %v527 = vsub.s32 %v524, %v526
    %v528 = vrot.slane %v500, %v527
    %v529 = vcombine.high %v507, %v507
    %v530 = vcombine.high %v514, %v514
    %v531 = vcombine.high %v521, %v521
    %v532 = vcombine.high %v528, %v528
    %v533 = vcombine.high %v30, %v30
    %v535 = vunpack.c.l.s4 1966171168
    %v536 = vunpack.c.0.s8 %v535
    %v537 = vlaneseq
    %v538 = vshrl.u32 %v537, 7
    %v539 = vsub.s32 %v536, %v538
    %v540 = vrot.slane %v30, %v539
    %v542 = vunpack.c.l.s4 1966171168
    %v543 = vunpack.c.0.s8 %v542
    %v544 = vlaneseq
    %v545 = vshrl.u32 %v544, 7
    %v546 = vsub.s32 %v543, %v545
    %v547 = vrot.slane %v533, %v546
    %v548 = vcombine.high %v540, %v540
    %v549 = vcombine.high %v547, %v547
    %v551 = vunpack.c.l.s4 1966171168
    %v552 = vunpack.c.0.s8 %v551
    %v553 = vlaneseq
    %v554 = vshrl.u32 %v553, 7
    %v555 = vsub.s32 %v552, %v554
    %v556 = vrot.slane %v540, %v555
    %v558 = vunpack.c.l.s4 1966171168
    %v559 = vunpack.c.0.s8 %v558
    %v560 = vlaneseq
    %v561 = vshrl.u32 %v560, 7
    %v562 = vsub.s32 %v559, %v561
    %v563 = vrot.slane %v547, %v562
    %v565 = vunpack.c.l.s4 1966171168
    %v566 = vunpack.c.0.s8 %v565
    %v567 = vlaneseq
    %v568 = vshrl.u32 %v567, 7
    %v569 = vsub.s32 %v566, %v568
    %v570 = vrot.slane %v548, %v569
    %v572 = vunpack.c.l.s4 1966171168
    %v573 = vunpack.c.0.s8 %v572
    %v574 = vlaneseq
    %v575 = vshrl.u32 %v574, 7
    %v576 = vsub.s32 %v573, %v575
    %v577 = vrot.slane %v549, %v576
    %v578 = vcombine.high %v556, %v556
    %v579 = vcombine.high %v563, %v563
    %v580 = vcombine.high %v570, %v570
    %v581 = vcombine.high %v577, %v577
    %v583 = vunpack.c.l.s4 1966171168
    %v584 = vunpack.c.0.s8 %v583
    %v585 = vlaneseq
    %v586 = vshrl.u32 %v585, 7
    %v587 = vsub.s32 %v584, %v586
    %v588 = vrot.slane %v31, %v587
    %v590 = vunpack.c.l.s4 1966171168
    %v591 = vunpack.c.0.s8 %v590
    %v592 = vlaneseq
    %v593 = vshrl.u32 %v592, 7
    %v594 = vsub.s32 %v591, %v593
    %v595 = vrot.slane %v588, %v594
    %v1012 = vunpack.c.l.b16 %v32
    %v1013 = vunpack.c.l.b16 %v33
    %v1014 = vunpack.c.l.b16 %v34
    %v1015 = vunpack.c.l.b16 %v35
    %v1016 = vunpack.c.l.b16 %v36
    %v1017 = vunpack.c.l.b16 %v37
    %v1018 = vunpack.c.l.b16 %v38
    %v1019 = vunpack.c.l.b16 %v39
    %v1020 = vunpack.c.l.b16 %v40
    %v1021 = vunpack.c.l.b16 %v41
    %v1022 = vunpack.c.l.b16 %v42
    %v1023 = vunpack.c.l.b16 %v43
    %v1024 = vunpack.c.l.b16 %v44
    %v1025 = vunpack.c.l.b16 %v45
    %v1026 = vunpack.c.l.b16 %v46
    %v1027 = vunpack.c.l.b16 %v47
    %v1028 = vunpack.c.l.b16 %v48
    %v1029 = vunpack.c.l.b16 %v49
    %v1030 = vunpack.c.l.b16 %v50
    %v1031 = vunpack.c.l.b16 %v51
    %v1032 = vunpack.c.l.b16 %v52
    %v1033 = vunpack.c.l.b16 %v53
    %v1034 = vunpack.c.l.b16 %v54
    %v1035 = vunpack.c.l.b16 %v55
    %v1036 = vunpack.c.l.b16 %v56
    %v1037 = vunpack.c.l.b16 %v57
    %v1038 = vunpack.c.l.b16 %v58
    %v1039 = vunpack.c.l.b16 %v59
    %v1040 = vunpack.c.l.b16 %v60
    %v1041 = vunpack.c.l.b16 %v61
    %v1042 = vunpack.c.l.b16 %v62
    %v1043 = vunpack.c.l.b16 %v63
    %v1044 = vunpack.c.l.b16 %v64
    %v1045 = vunpack.c.l.b16 %v65
    %v1046 = vunpack.c.l.b16 %v66
    %v1047 = vunpack.c.l.b16 %v67
    %v1048 = vunpack.c.l.b16 %v68
    %v1049 = vunpack.c.l.b16 %v69
    %v1050 = vunpack.c.l.b16 %v70
    %v1051 = vunpack.c.l.b16 %v71
    %v1052 = vunpack.c.l.b16 %v72
    %v1053 = vunpack.c.l.b16 %v73
    %v1054 = vunpack.c.l.b16 %v74
    %v1055 = vunpack.c.l.b16 %v75
    %v1056 = vunpack.c.l.b16 %v76
    %v1057 = vunpack.c.l.b16 %v77
    %v1058 = vunpack.c.l.b16 %v78
    %v1059 = vunpack.c.l.b16 %v79
    %v1060 = vunpack.c.l.b16 %v80
    %v1061 = vunpack.c.l.b16 %v81
    %v1062 = vunpack.c.l.b16 %v82
    %v1063 = vunpack.c.l.b16 %v83
    %v1064 = vunpack.c.l.b16 %v84
    %v1065 = vunpack.c.l.b16 %v85
    %v1066 = vunpack.c.l.b16 %v86
    %v1067 = vunpack.c.l.b16 %v87
    %v1068 = vunpack.c.l.b16 %v88
    %v1069 = vunpack.c.l.b16 %v89
    %v1070 = vunpack.c.l.b16 %v90
    %v1071 = vunpack.c.l.b16 %v91
    %v1072 = vunpack.c.l.b16 %v92
    %v1073 = vunpack.c.l.b16 %v93
    %v1074 = vunpack.c.l.b16 %v94
    %v1075 = vunpack.c.l.b16 %v95
    %v1076 = vunpack.c.l.b16 %v96
    %v1077 = vunpack.c.l.b16 %v97
    %v1078 = vunpack.c.l.b16 %v98
    %v1079 = vunpack.c.l.b16 %v99
    %v1080 = vunpack.c.l.b16 %v100
    %v1081 = vunpack.c.l.b16 %v101
    %v1082 = vunpack.c.l.b16 %v102
    %v1083 = vunpack.c.l.b16 %v103
    %v1084 = vunpack.c.l.b16 %v104
    %v1085 = vunpack.c.l.b16 %v105
    %v1086 = vunpack.c.l.b16 %v106
    %v1087 = vunpack.c.l.b16 %v107
    %v1088 = vunpack.c.l.b16 %v108
    %v1089 = vunpack.c.l.b16 %v109
    %v1090 = vunpack.c.l.b16 %v110
    %v1091 = vunpack.c.l.b16 %v111
    %v1092 = vunpack.c.l.b16 %v112
    %v1093 = vunpack.c.l.b16 %v113
    %v1094 = vunpack.c.l.b16 %v114
    %v1095 = vunpack.c.l.b16 %v115
    %v1096 = vunpack.c.l.b16 %v116
    %v1097 = vunpack.c.l.b16 %v117
    %v1098 = vunpack.c.l.b16 %v118
    %v1099 = vunpack.c.l.b16 %v119
    %v1100 = vunpack.c.l.b16 %v120
    %v1101 = vunpack.c.l.b16 %v121
    %v1102 = vunpack.c.l.b16 %v122
    %v1103 = vunpack.c.l.b16 %v123
    %v1104 = vunpack.c.l.b16 %v124
    %v1105 = vunpack.c.l.b16 %v125
    %v1106 = vunpack.c.l.b16 %v126
    %v1107 = vunpack.c.l.b16 %v127
    %v1108 = vunpack.c.l.b16 %v128
    %v1109 = vunpack.c.l.b16 %v129
    %v1110 = vunpack.c.l.b16 %v130
    %v1111 = vunpack.c.l.b16 %v131
    %v1112 = vunpack.c.l.b16 %v132
    %v1113 = vunpack.c.l.b16 %v133
    %v1114 = vunpack.c.l.b16 %v134
    %v1115 = vunpack.c.l.b16 %v135
    %v1116 = vunpack.c.l.b16 %v136
    %v1117 = vunpack.c.l.b16 %v137
    %v1118 = vunpack.c.l.b16 %v138
    %v1119 = vunpack.c.l.b16 %v139
    %v1120 = vunpack.c.l.b16 %v140
    %v1121 = vunpack.c.l.b16 %v141
    %v1122 = vunpack.c.l.b16 %v142
    %v1123 = vunpack.c.l.b16 %v143
    %v1124 = vunpack.c.l.b16 %v144
    %v1125 = vunpack.c.l.b16 %v145
    %v1126 = vunpack.c.l.b16 %v146
    %v1127 = vunpack.c.l.b16 %v147
    %v1128 = vunpack.c.l.b16 %v148
    %v1129 = vunpack.c.l.b16 %v149
    %v1130 = vunpack.c.l.b16 %v150
    %v1131 = vunpack.c.l.b16 %v151
    %v1132 = vunpack.c.l.b16 %v152
    %v1133 = vunpack.c.l.b16 %v153
    %v1134 = vunpack.c.l.b16 %v154
    %v1135 = vunpack.c.l.b16 %v155
    %v1136 = vunpack.c.l.b16 %v156
    %v1137 = vunpack.c.l.b16 %v157
    %v1138 = vunpack.c.l.b16 %v158
    %v1139 = vunpack.c.l.b16 %v159
    %v1140 = vunpack.c.l.b16 %v160
    %v1141 = vunpack.c.l.b16 %v161
    %v1142 = vunpack.c.l.b16 %v162
    %v1143 = vunpack.c.l.b16 %v163
    %v1144 = vunpack.c.l.b16 %v164
    %v1145 = vunpack.c.l.b16 %v165
    %v1146 = vunpack.c.l.b16 %v166
    %v1147 = vunpack.c.l.b16 %v167
    %v1148 = vunpack.c.l.b16 %v168
    %v1149 = vunpack.c.l.b16 %v169
    %v1150 = vunpack.c.l.b16 %v170
    %v1151 = vunpack.c.l.b16 %v171
    %v1152 = vunpack.c.l.b16 %v172
    %v1153 = vunpack.c.l.b16 %v173
    %v1154 = vunpack.c.l.b16 %v174
    %v1155 = vunpack.c.l.b16 %v175
    %v1156 = vunpack.c.l.b16 %v176
    %v1157 = vunpack.c.l.b16 %v177
    %v1158 = vunpack.c.l.b16 %v178
    %v1159 = vunpack.c.l.b16 %v179
    %v1160 = vunpack.c.l.b16 %v180
    %v1161 = vunpack.c.l.b16 %v181
    %v1162 = vunpack.c.l.b16 %v182
    %v1163 = vunpack.c.l.b16 %v183
    %v1164 = vunpack.c.l.b16 %v184
    %v1165 = vunpack.c.l.b16 %v185
    %v1166 = vunpack.c.l.b16 %v186
    %v1167 = vunpack.c.l.b16 %v187
    %v1168 = vunpack.c.l.b16 %v188
    %v1169 = vunpack.c.l.b16 %v189
    %v1170 = vunpack.c.l.b16 %v190
    %v1171 = vunpack.c.l.b16 %v191
    %v1172 = vunpack.c.l.b16 %v192
    %v1173 = vunpack.c.l.b16 %v193
    %v1174 = vunpack.c.l.b16 %v194
    %v1175 = vunpack.c.l.b16 %v195
    %v1176 = vunpack.c.l.b16 %v196
    %v1177 = vunpack.c.l.b16 %v197
    %v1178 = vunpack.c.l.b16 %v198
    %v1179 = vunpack.c.l.b16 %v199
    %v1180 = vunpack.c.l.b16 %v200
    %v1181 = vunpack.c.l.b16 %v201
    %v1182 = vunpack.c.l.b16 %v202
    %v1183 = vunpack.c.l.b16 %v203
    %v1184 = vunpack.c.l.b16 %v204
    %v1185 = vunpack.c.l.b16 %v205
    %v1186 = vunpack.c.l.b16 %v206
    %v1187 = vunpack.c.l.b16 %v207
    %v1188 = vunpack.c.l.b16 %v208
    %v1189 = vunpack.c.l.b16 %v209
    %v1190 = vunpack.c.l.b16 %v210
    %v1191 = vunpack.c.l.b16 %v211
    %v1192 = vunpack.c.l.b16 %v212
    %v1193 = vunpack.c.l.b16 %v213
    %v1194 = vunpack.c.l.b16 %v214
    %v1195 = vunpack.c.l.b16 %v215
    %v1196 = vunpack.c.l.b16 %v216
    %v1197 = vunpack.c.l.b16 %v217
    %v1198 = vunpack.c.l.b16 %v218
    %v1199 = vunpack.c.l.b16 %v219
    %v1200 = vunpack.c.l.b16 %v220
    %v1201 = vunpack.c.l.b16 %v221
    %v1202 = vunpack.c.l.b16 %v222
    %v1203 = vunpack.c.l.b16 %v223
    %v1204 = vunpack.c.l.b16 %v224
    %v1205 = vunpack.c.l.b16 %v225
    %v1206 = vunpack.c.l.b16 %v226
    %v1207 = vunpack.c.l.b16 %v227
    %v1208 = vunpack.c.l.b16 %v228
    %v1209 = vunpack.c.l.b16 %v229
    %v1210 = vunpack.c.l.b16 %v230
    %v1211 = vunpack.c.l.b16 %v231
    %v1212 = vunpack.c.l.b16 %v232
    %v1213 = vunpack.c.l.b16 %v233
    %v1214 = vunpack.c.l.b16 %v234
    %v1215 = vunpack.c.l.b16 %v235
    %v1216 = vunpack.c.l.b16 %v236
    %v1217 = vunpack.c.l.b16 %v237
    %v1218 = vunpack.c.l.b16 %v238
    %v1219 = vunpack.c.l.b16 %v239
    %v1220 = vunpack.c.l.b16 %v240
    %v1221 = vunpack.c.l.b16 %v241
    %v1222 = vunpack.c.l.b16 %v242
    %v1223 = vunpack.c.l.b16 %v243
    %v1224 = vunpack.c.l.b16 %v244
    %v1225 = vunpack.c.l.b16 %v245
    %v1226 = vunpack.c.l.b16 %v246
    %v1227 = vunpack.c.l.b16 %v247
    %v1228 = vunpack.c.l.b16 %v248
    %v1229 = vunpack.c.l.b16 %v249
    %v1230 = vunpack.c.l.b16 %v250
    %v1231 = vunpack.c.l.b16 %v251
    %v1232 = vunpack.c.l.b16 %v252
    %v1233 = vunpack.c.l.b16 %v253
    %v1234 = vunpack.c.l.b16 %v254
    %v1235 = vunpack.c.l.b16 %v255
    %v1236 = vunpack.c.l.b16 %v256
    %v1237 = vunpack.c.l.b16 %v257
    %v1238 = vunpack.c.l.b16 %v258
    %v1239 = vunpack.c.l.b16 %v259
    %v1240 = vunpack.c.l.b16 %v260
    %v1241 = vunpack.c.l.b16 %v261
    %v1242 = vunpack.c.l.b16 %v262
    %v1243 = vunpack.c.l.b16 %v263
    %v1244 = vunpack.c.l.b16 %v264
    %v1245 = vunpack.c.l.b16 %v265
    %v1246 = vunpack.c.l.b16 %v266
    %v1247 = vunpack.c.l.b16 %v267
    %v1248 = vunpack.c.l.b16 %v268
    %v1249 = vunpack.c.l.b16 %v269
    %v1250 = vunpack.c.l.b16 %v270
    %v1251 = vunpack.c.l.b16 %v271
    %v1252 = vunpack.c.l.b16 %v272
    %v1253 = vunpack.c.l.b16 %v273
    %v1254 = vunpack.c.l.b16 %v274
    %v1255 = vunpack.c.l.b16 %v275
    %v1256 = vunpack.c.l.b16 %v276
    %v1257 = vunpack.c.l.b16 %v277
    %v1258 = vunpack.c.l.b16 %v278
    %v1259 = vunpack.c.l.b16 %v279
    %v1260 = vunpack.c.l.b16 %v280
    %v1261 = vunpack.c.l.b16 %v281
    %v1262 = vunpack.c.l.b16 %v282
    %v1263 = vunpack.c.l.b16 %v283
    %v1264 = vunpack.c.l.b16 %v284
    %v1265 = vunpack.c.l.b16 %v285
    %v1266 = vunpack.c.l.b16 %v286
    %v1267 = vunpack.c.l.b16 %v287
    %v1268 = vunpack.c.l.b16 %v288
    %v1269 = vunpack.c.l.b16 %v289
    %v1270 = vunpack.c.l.b16 %v290
    %v1271 = vunpack.c.l.b16 %v291
    %v1272 = vunpack.c.l.b16 %v292
    %v1273 = vunpack.c.l.b16 %v293
    %v1274 = vunpack.c.l.b16 %v294
    %v1275 = vunpack.c.l.b16 %v295
    %v1276 = vunpack.c.l.b16 %v296
    %v1277 = vunpack.c.l.b16 %v297
    %v1278 = vunpack.c.l.b16 %v298
    %v1279 = vunpack.c.l.b16 %v299
    %v1280 = vunpack.c.l.b16 %v300
    %v1281 = vunpack.c.l.b16 %v301
    %v1282 = vunpack.c.l.b16 %v302
    %v1283 = vunpack.c.l.b16 %v303
    %v1284 = vunpack.c.l.b16 %v304
    %v1285 = vunpack.c.l.b16 %v305
    %v1286 = vunpack.c.l.b16 %v306
    %v1287 = vunpack.c.l.b16 %v307
    %v1288 = vunpack.c.l.b16 %v308
    %v1289 = vunpack.c.l.b16 %v309
    %v1290 = vunpack.c.l.b16 %v310
    %v1291 = vunpack.c.l.b16 %v311
    %v1292 = vunpack.c.l.b16 %v312
    %v1293 = vunpack.c.l.b16 %v313
    %v1294 = vunpack.c.l.b16 %v314
    %v1295 = vunpack.c.l.b16 %v315
    %v1296 = vunpack.c.l.b16 %v316
    %v1297 = vunpack.c.l.b16 %v317
    %v1298 = vunpack.c.l.b16 %v318
    %v1299 = vunpack.c.l.b16 %v319
    %v1300 = vunpack.c.l.b16 %v320
    %v1301 = vunpack.c.l.b16 %v321
    %v1302 = vunpack.c.l.b16 %v322
    %v1303 = vunpack.c.l.b16 %v323
    %v1304 = vunpack.c.l.b16 %v324
    %v1305 = vunpack.c.l.b16 %v325
    %v1306 = vunpack.c.l.b16 %v326
    %v1307 = vunpack.c.l.b16 %v327
    %v1308 = vunpack.c.l.b16 %v328
    %v1309 = vunpack.c.l.b16 %v329
    %v1310 = vunpack.c.l.b16 %v330
    %v1311 = vunpack.c.l.b16 %v331
    %v1312 = vunpack.c.l.b16 %v332
    %v1313 = vunpack.c.l.b16 %v333
    %v1314 = vunpack.c.l.b16 %v334
    %v1315 = vunpack.c.l.b16 %v335
    %v1316 = vunpack.c.l.b16 %v336
    %v1317 = vunpack.c.l.b16 %v337
    %v1318 = vunpack.c.l.b16 %v338
    %v1319 = vunpack.c.l.b16 %v339
    %v1320 = vunpack.c.l.b16 %v340
    %v1321 = vunpack.c.l.b16 %v341
    %v1322 = vunpack.c.l.b16 %v342
    %v1323 = vunpack.c.l.b16 %v343
    %v1324 = vunpack.c.l.b16 %v344
    %v1325 = vunpack.c.l.b16 %v345
    %v1326 = vunpack.c.l.b16 %v346
    %v1327 = vunpack.c.l.b16 %v347
    %v1328 = vunpack.c.l.b16 %v348
    %v1329 = vunpack.c.l.b16 %v349
    %v1330 = vunpack.c.l.b16 %v350
    %v1331 = vunpack.c.l.b16 %v351
    %v1332 = vunpack.c.l.b16 %v352
    %v1333 = vunpack.c.l.b16 %v353
    %v1334 = vunpack.c.l.b16 %v354
    %v1335 = vunpack.c.l.b16 %v355
    %v1336 = vunpack.c.l.b16 %v356
    %v1337 = vunpack.c.l.b16 %v357
    %v1338 = vunpack.c.l.b16 %v358
    %v1339 = vunpack.c.l.b16 %v359
    %v1340 = vunpack.c.l.b16 %v360
    %v1341 = vunpack.c.l.b16 %v361
    %v1342 = vunpack.c.l.b16 %v362
    %v1343 = vunpack.c.l.b16 %v363
    %v1344 = vunpack.c.l.b16 %v364
    %v1345 = vunpack.c.l.b16 %v365
    %v1346 = vunpack.c.l.b16 %v366
    %v1347 = vunpack.c.l.b16 %v367
    %v1348 = vunpack.c.l.b16 %v368
    %v1349 = vunpack.c.l.b16 %v369
    %v1350 = vunpack.c.l.b16 %v370
    %v1351 = vunpack.c.l.b16 %v371
    %v1352 = vunpack.c.l.b16 %v372
    %v1353 = vunpack.c.l.b16 %v373
    %v1354 = vunpack.c.l.b16 %v374
    %v1355 = vunpack.c.l.b16 %v375
    %v1356 = vunpack.c.l.b16 %v376
    %v1357 = vunpack.c.l.b16 %v377
    %v1358 = vunpack.c.l.b16 %v378
    %v1359 = vunpack.c.l.b16 %v379
    %v1360 = vunpack.c.l.b16 %v380
    %v1361 = vunpack.c.l.b16 %v381
    %v1362 = vunpack.c.l.b16 %v382
    %v1363 = vunpack.c.l.b16 %v383
    %v1364 = vunpack.c.l.b16 %v384
    %v1365 = vunpack.c.l.b16 %v385
    %v1366 = vunpack.c.l.b16 %v386
    %v1367 = vunpack.c.l.b16 %v387
    %v1368 = vunpack.c.l.b16 %v388
    %v1369 = vunpack.c.l.b16 %v389
    %v1370 = vunpack.c.l.b16 %v390
    %v1371 = vunpack.c.l.b16 %v391
    %v1372 = vunpack.c.l.b16 %v392
    %v1373 = vunpack.c.l.b16 %v393
    %v1374 = vunpack.c.l.b16 %v394
    %v1375 = vunpack.c.l.b16 %v395
    %v1376 = vunpack.c.l.b16 %v396
    %v1377 = vunpack.c.l.b16 %v397
    %v1378 = vunpack.c.l.b16 %v398
    %v1379 = vunpack.c.l.b16 %v399
    %v1380 = vunpack.c.l.b16 %v400
    %v1381 = vunpack.c.l.b16 %v401
    %v1382 = vunpack.c.l.b16 %v402
    %v1383 = vunpack.c.l.b16 %v403
    %v1384 = vunpack.c.l.b16 %v404
    %v1385 = vunpack.c.l.b16 %v405
    %v1386 = vunpack.c.l.b16 %v406
    %v1387 = vunpack.c.l.b16 %v407
    %v1388 = vunpack.c.l.b16 %v408
    %v1389 = vunpack.c.l.b16 %v409
    %v1390 = vunpack.c.l.b16 %v410
    %v1391 = vunpack.c.l.b16 %v411
    %v1392 = vunpack.c.l.b16 %v412
    %v1393 = vunpack.c.l.b16 %v413
    %v1394 = vunpack.c.l.b16 %v414
    %v1395 = vunpack.c.l.b16 %v415
    %v1396 = vunpack.c.l.b16 %v416
    %v1397 = vunpack.c.l.b16 %v417
    %v1398 = vunpack.c.l.b16 %v418
    %v1399 = vunpack.c.l.b16 %v419
    %v1400 = vunpack.c.l.b16 %v420
    %v1401 = vunpack.c.l.b16 %v421
    %v1402 = vunpack.c.l.b16 %v422
    %v1403 = vunpack.c.l.b16 %v423
    %v1404 = vpack.c.b16 %v1013, %v1012
    %v1405 = vpack.c.b16 %v1015, %v1014
    %v1406 = vpack.c.b16 %v1017, %v1016
    %v1407 = vpack.c.b16 %v1019, %v1018
    %v1408 = vpack.c.b16 %v1021, %v1020
    %v1409 = vpack.c.b16 %v1023, %v1022
    %v1410 = vpack.c.b16 %v1025, %v1024
    %v1411 = vpack.c.b16 %v1027, %v1026
    %v1412 = vpack.c.b16 %v1029, %v1028
    %v1413 = vpack.c.b16 %v1031, %v1030
    %v1414 = vpack.c.b16 %v1033, %v1032
    %v1415 = vpack.c.b16 %v1035, %v1034
    %v1416 = vpack.c.b16 %v1037, %v1036
    %v1417 = vpack.c.b16 %v1039, %v1038
    %v1418 = vpack.c.b16 %v1041, %v1040
    %v1419 = vpack.c.b16 %v1043, %v1042
    %v1420 = vpack.c.b16 %v1045, %v1044
    %v1421 = vpack.c.b16 %v1047, %v1046
    %v1422 = vpack.c.b16 %v1049, %v1048
    %v1423 = vpack.c.b16 %v1051, %v1050
    %v1424 = vpack.c.b16 %v1053, %v1052
    %v1425 = vpack.c.b16 %v1055, %v1054
    %v1426 = vpack.c.b16 %v1057, %v1056
    %v1427 = vpack.c.b16 %v1059, %v1058
    %v1428 = vpack.c.b16 %v1061, %v1060
    %v1429 = vpack.c.b16 %v1063, %v1062
    %v1430 = vpack.c.b16 %v1065, %v1064
    %v1431 = vpack.c.b16 %v1067, %v1066
    %v1432 = vpack.c.b16 %v1069, %v1068
    %v1433 = vpack.c.b16 %v1071, %v1070
    %v1434 = vpack.c.b16 %v1073, %v1072
    %v1435 = vpack.c.b16 %v1075, %v1074
    %v1436 = vpack.c.b16 %v1077, %v1076
    %v1437 = vpack.c.b16 %v1079, %v1078
    %v1438 = vpack.c.b16 %v1081, %v1080
    %v1439 = vpack.c.b16 %v1083, %v1082
    %v1440 = vpack.c.b16 %v1085, %v1084
    %v1441 = vpack.c.b16 %v1087, %v1086
    %v1442 = vpack.c.b16 %v1089, %v1088
    %v1443 = vpack.c.b16 %v1091, %v1090
    %v1444 = vpack.c.b16 %v1093, %v1092
    %v1445 = vpack.c.b16 %v1095, %v1094
    %v1446 = vpack.c.b16 %v1097, %v1096
    %v1447 = vpack.c.b16 %v1099, %v1098
    %v1448 = vpack.c.b16 %v1101, %v1100
    %v1449 = vpack.c.b16 %v1103, %v1102
    %v1450 = vpack.c.b16 %v1105, %v1104
    %v1451 = vpack.c.b16 %v1107, %v1106
    %v1452 = vpack.c.b16 %v1109, %v1108
    %v1453 = vpack.c.b16 %v1111, %v1110
    %v1454 = vpack.c.b16 %v1113, %v1112
    %v1455 = vpack.c.b16 %v1115, %v1114
    %v1456 = vpack.c.b16 %v1117, %v1116
    %v1457 = vpack.c.b16 %v1119, %v1118
    %v1458 = vpack.c.b16 %v1121, %v1120
    %v1459 = vpack.c.b16 %v1123, %v1122
    %v1460 = vpack.c.b16 %v1125, %v1124
    %v1461 = vpack.c.b16 %v1127, %v1126
    %v1462 = vpack.c.b16 %v1129, %v1128
    %v1463 = vpack.c.b16 %v1131, %v1130
    %v1464 = vpack.c.b16 %v1133, %v1132
    %v1465 = vpack.c.b16 %v1135, %v1134
    %v1466 = vpack.c.b16 %v1137, %v1136
    %v1467 = vpack.c.b16 %v1139, %v1138
    %v1468 = vpack.c.b16 %v1141, %v1140
    %v1469 = vpack.c.b16 %v1143, %v1142
    %v1470 = vpack.c.b16 %v1145, %v1144
    %v1471 = vpack.c.b16 %v1147, %v1146
    %v1472 = vpack.c.b16 %v1149, %v1148
    %v1473 = vpack.c.b16 %v1151, %v1150
    %v1474 = vpack.c.b16 %v1153, %v1152
    %v1475 = vpack.c.b16 %v1155, %v1154
    %v1476 = vpack.c.b16 %v1157, %v1156
    %v1477 = vpack.c.b16 %v1159, %v1158
    %v1478 = vpack.c.b16 %v1161, %v1160
    %v1479 = vpack.c.b16 %v1163, %v1162
    %v1480 = vpack.c.b16 %v1165, %v1164
    %v1481 = vpack.c.b16 %v1167, %v1166
    %v1482 = vpack.c.b16 %v1169, %v1168
    %v1483 = vpack.c.b16 %v1171, %v1170
    %v1484 = vpack.c.b16 %v1173, %v1172
    %v1485 = vpack.c.b16 %v1175, %v1174
    %v1486 = vpack.c.b16 %v1177, %v1176
    %v1487 = vpack.c.b16 %v1179, %v1178
    %v1488 = vpack.c.b16 %v1181, %v1180
    %v1489 = vpack.c.b16 %v1183, %v1182
    %v1490 = vpack.c.b16 %v1185, %v1184
    %v1491 = vpack.c.b16 %v1187, %v1186
    %v1492 = vpack.c.b16 %v1189, %v1188
    %v1493 = vpack.c.b16 %v1191, %v1190
    %v1494 = vpack.c.b16 %v1193, %v1192
    %v1495 = vpack.c.b16 %v1195, %v1194
    %v1496 = vpack.c.b16 %v1197, %v1196
    %v1497 = vpack.c.b16 %v1199, %v1198
    %v1498 = vpack.c.b16 %v1201, %v1200
    %v1499 = vpack.c.b16 %v1203, %v1202
    %v1500 = vpack.c.b16 %v1205, %v1204
    %v1501 = vpack.c.b16 %v1207, %v1206
    %v1502 = vpack.c.b16 %v1209, %v1208
    %v1503 = vpack.c.b16 %v1211, %v1210
    %v1504 = vpack.c.b16 %v1213, %v1212
    %v1505 = vpack.c.b16 %v1215, %v1214
    %v1506 = vpack.c.b16 %v1217, %v1216
    %v1507 = vpack.c.b16 %v1219, %v1218
    %v1508 = vpack.c.b16 %v1221, %v1220
    %v1509 = vpack.c.b16 %v1223, %v1222
    %v1510 = vpack.c.b16 %v1225, %v1224
    %v1511 = vpack.c.b16 %v1227, %v1226
    %v1512 = vpack.c.b16 %v1229, %v1228
    %v1513 = vpack.c.b16 %v1231, %v1230
    %v1514 = vpack.c.b16 %v1233, %v1232
    %v1515 = vpack.c.b16 %v1235, %v1234
    %v1516 = vpack.c.b16 %v1237, %v1236
    %v1517 = vpack.c.b16 %v1239, %v1238
    %v1518 = vpack.c.b16 %v1241, %v1240
    %v1519 = vpack.c.b16 %v1243, %v1242
    %v1520 = vpack.c.b16 %v1245, %v1244
    %v1521 = vpack.c.b16 %v1247, %v1246
    %v1522 = vpack.c.b16 %v1249, %v1248
    %v1523 = vpack.c.b16 %v1251, %v1250
    %v1524 = vpack.c.b16 %v1253, %v1252
    %v1525 = vpack.c.b16 %v1255, %v1254
    %v1526 = vpack.c.b16 %v1257, %v1256
    %v1527 = vpack.c.b16 %v1259, %v1258
    %v1528 = vpack.c.b16 %v1261, %v1260
    %v1529 = vpack.c.b16 %v1263, %v1262
    %v1530 = vpack.c.b16 %v1265, %v1264
    %v1531 = vpack.c.b16 %v1267, %v1266
    %v1532 = vpack.c.b16 %v1269, %v1268
    %v1533 = vpack.c.b16 %v1271, %v1270
    %v1534 = vpack.c.b16 %v1273, %v1272
    %v1535 = vpack.c.b16 %v1275, %v1274
    %v1536 = vpack.c.b16 %v1277, %v1276
    %v1537 = vpack.c.b16 %v1279, %v1278
    %v1538 = vpack.c.b16 %v1281, %v1280
    %v1539 = vpack.c.b16 %v1283, %v1282
    %v1540 = vpack.c.b16 %v1285, %v1284
    %v1541 = vpack.c.b16 %v1287, %v1286
    %v1542 = vpack.c.b16 %v1289, %v1288
    %v1543 = vpack.c.b16 %v1291, %v1290
    %v1544 = vpack.c.b16 %v1293, %v1292
    %v1545 = vpack.c.b16 %v1295, %v1294
    %v1546 = vpack.c.b16 %v1297, %v1296
    %v1547 = vpack.c.b16 %v1299, %v1298
    %v1548 = vpack.c.b16 %v1301, %v1300
    %v1549 = vpack.c.b16 %v1303, %v1302
    %v1550 = vpack.c.b16 %v1305, %v1304
    %v1551 = vpack.c.b16 %v1307, %v1306
    %v1552 = vpack.c.b16 %v1309, %v1308
    %v1553 = vpack.c.b16 %v1311, %v1310
    %v1554 = vpack.c.b16 %v1313, %v1312
    %v1555 = vpack.c.b16 %v1315, %v1314
    %v1556 = vpack.c.b16 %v1317, %v1316
    %v1557 = vpack.c.b16 %v1319, %v1318
    %v1558 = vpack.c.b16 %v1321, %v1320
    %v1559 = vpack.c.b16 %v1323, %v1322
    %v1560 = vpack.c.b16 %v1325, %v1324
    %v1561 = vpack.c.b16 %v1327, %v1326
    %v1562 = vpack.c.b16 %v1329, %v1328
    %v1563 = vpack.c.b16 %v1331, %v1330
    %v1564 = vpack.c.b16 %v1333, %v1332
    %v1565 = vpack.c.b16 %v1335, %v1334
    %v1566 = vpack.c.b16 %v1337, %v1336
    %v1567 = vpack.c.b16 %v1339, %v1338
    %v1568 = vpack.c.b16 %v1341, %v1340
    %v1569 = vpack.c.b16 %v1343, %v1342
    %v1570 = vpack.c.b16 %v1345, %v1344
    %v1571 = vpack.c.b16 %v1347, %v1346
    %v1572 = vpack.c.b16 %v1349, %v1348
    %v1573 = vpack.c.b16 %v1351, %v1350
    %v1574 = vpack.c.b16 %v1353, %v1352
    %v1575 = vpack.c.b16 %v1355, %v1354
    %v1576 = vpack.c.b16 %v1357, %v1356
    %v1577 = vpack.c.b16 %v1359, %v1358
    %v1578 = vpack.c.b16 %v1361, %v1360
    %v1579 = vpack.c.b16 %v1363, %v1362
    %v1580 = vpack.c.b16 %v1365, %v1364
    %v1581 = vpack.c.b16 %v1367, %v1366
    %v1582 = vpack.c.b16 %v1369, %v1368
    %v1583 = vpack.c.b16 %v1371, %v1370
    %v1584 = vpack.c.b16 %v1373, %v1372
    %v1585 = vpack.c.b16 %v1375, %v1374
    %v1586 = vpack.c.b16 %v1377, %v1376
    %v1587 = vpack.c.b16 %v1379, %v1378
    %v1588 = vpack.c.b16 %v1381, %v1380
    %v1589 = vpack.c.b16 %v1383, %v1382
    %v1590 = vpack.c.b16 %v1385, %v1384
    %v1591 = vpack.c.b16 %v1387, %v1386
    %v1592 = vpack.c.b16 %v1389, %v1388
    %v1593 = vpack.c.b16 %v1391, %v1390
    %v1594 = vpack.c.b16 %v1393, %v1392
    %v1595 = vpack.c.b16 %v1395, %v1394
    %v1596 = vpack.c.b16 %v1397, %v1396
    %v1597 = vpack.c.b16 %v1399, %v1398
    %v1598 = vpack.c.b16 %v1401, %v1400
    %v1599 = vpack.c.b16 %v1403, %v1402
    %vm1796 = vcmask 523264
    %v1798 = vsel %vm1796, %v595, 0
    %1800 = vmatprep.subr.bf16.mxu0 0
    %1801 = vmatpush1.bf16.msra.mxu0 %v1404
    %1802 = vmatprep.subr.bf16.mxu0 0
    %1803 = vmatpush1.bf16.msra.mxu0 %v1405
    %1804 = vmatprep.subr.bf16.mxu0 0
    %1805 = vmatpush1.bf16.msra.mxu0 %v1406
    %1806 = vmatprep.subr.bf16.mxu0 0
    %1807 = vmatpush1.bf16.msra.mxu0 %v1407
    %1808 = vmatprep.subr.bf16.mxu0 0
    %1809 = vmatpush1.bf16.msra.mxu0 %v1408
    %1810 = vmatprep.subr.bf16.mxu0 0
    %1811 = vmatpush1.bf16.msra.mxu0 %v1409
    %1812 = vmatprep.subr.bf16.mxu0 0
    %1813 = vmatpush1.bf16.msra.mxu0 %v1410
    %1814 = vmatprep.subr.bf16.mxu0 0
    %1815 = vmatpush1.bf16.msra.mxu0 %v1411
    %1816 = vmatprep.subr.bf16.mxu0 0
    %1817 = vmatpush1.bf16.msra.mxu0 %v1412
    %1818 = vmatprep.subr.bf16.mxu0 0
    %1819 = vmatpush1.bf16.msra.mxu0 %v1413
    %1820 = vmatprep.subr.bf16.mxu0 0
    %1821 = vmatpush1.bf16.msra.mxu0 %v1414
    %1822 = vmatprep.subr.bf16.mxu0 0
    %1823 = vmatpush1.bf16.msra.mxu0 %v1415
    %1824 = vmatprep.subr.bf16.mxu0 0
    %1825 = vmatpush1.bf16.msra.mxu0 %v1416
    %1826 = vmatprep.subr.bf16.mxu0 0
    %1827 = vmatpush1.bf16.msra.mxu0 %v1417
    %1828 = vmatprep.subr.bf16.mxu0 0
    %1829 = vmatpush1.bf16.msra.mxu0 %v1418
    %1830 = vmatprep.subr.bf16.mxu0 0
    %1831 = vmatpush1.bf16.msra.mxu0 %v1419
    %1832 = vmatprep.mubr.bf16.mxu0 %v472
    %1833 = vmatmul.mubr.bf16.gmra.mrb[0].mxu0 %v458
    %v1834 = vpop.f32.mrb[0].mxu0
    %v1835 = vadd.f32 %v429, %v1834
    %v1836 = vpop.f32.mrb[0].mxu0
    %v1837 = vpop.f32.mrb[0].mxu0
    %v1838 = vpop.f32.mrb[0].mxu0
    %1839 = vdwg.mxu0
    %1840 = vmatprep.subr.bf16.mxu0 0
    %1841 = vmatpush1.bf16.msra.mxu0 %v1420
    %1842 = vmatprep.subr.bf16.mxu0 0
    %1843 = vmatpush1.bf16.msra.mxu0 %v1421
    %1844 = vmatprep.subr.bf16.mxu0 0
    %1845 = vmatpush1.bf16.msra.mxu0 %v1422
    %1846 = vmatprep.subr.bf16.mxu0 0
    %1847 = vmatpush1.bf16.msra.mxu0 %v1423
    %1848 = vmatprep.subr.bf16.mxu0 0
    %1849 = vmatpush1.bf16.msra.mxu0 %v1424
    %1850 = vmatprep.subr.bf16.mxu0 0
    %1851 = vmatpush1.bf16.msra.mxu0 %v1425
    %1852 = vmatprep.subr.bf16.mxu0 0
    %1853 = vmatpush1.bf16.msra.mxu0 %v1426
    %1854 = vmatprep.subr.bf16.mxu0 0
    %1855 = vmatpush1.bf16.msra.mxu0 %v1427
    %1856 = vmatprep.subr.bf16.mxu0 0
    %1857 = vmatpush1.bf16.msra.mxu0 %v1428
    %1858 = vmatprep.subr.bf16.mxu0 0
    %1859 = vmatpush1.bf16.msra.mxu0 %v1429
    %1860 = vmatprep.subr.bf16.mxu0 0
    %1861 = vmatpush1.bf16.msra.mxu0 %v1430
    %1862 = vmatprep.subr.bf16.mxu0 0
    %1863 = vmatpush1.bf16.msra.mxu0 %v1431
    %1864 = vmatprep.subr.bf16.mxu0 0
    %1865 = vmatpush1.bf16.msra.mxu0 %v1432
    %1866 = vmatprep.subr.bf16.mxu0 0
    %1867 = vmatpush1.bf16.msra.mxu0 %v1433
    %1868 = vmatprep.subr.bf16.mxu0 0
    %1869 = vmatpush1.bf16.msra.mxu0 %v1434
    %1870 = vmatprep.subr.bf16.mxu0 0
    %1871 = vmatpush1.bf16.msra.mxu0 %v1435
    %1872 = vmatprep.mubr.bf16.mxu0 %v482
    %1873 = vmatmul.mubr.bf16.gmra.mrb[0].mxu0 %v480
    %v1874 = vpop.f32.mrb[0].mxu0
    %v1875 = vadd.f32 %v1835, %v1874
    %v1876 = vpop.f32.mrb[0].mxu0
    %v1877 = vpop.f32.mrb[0].mxu0
    %v1878 = vpop.f32.mrb[0].mxu0
    %1879 = vdwg.mxu0
    %1880 = vmatprep.subr.bf16.mxu0 0
    %1881 = vmatpush1.bf16.msra.mxu0 %v1436
    %1882 = vmatprep.subr.bf16.mxu0 0
    %1883 = vmatpush1.bf16.msra.mxu0 %v1437
    %1884 = vmatprep.subr.bf16.mxu0 0
    %1885 = vmatpush1.bf16.msra.mxu0 %v1438
    %1886 = vmatprep.subr.bf16.mxu0 0
    %1887 = vmatpush1.bf16.msra.mxu0 %v1439
    %1888 = vmatprep.subr.bf16.mxu0 0
    %1889 = vmatpush1.bf16.msra.mxu0 %v1440
    %1890 = vmatprep.subr.bf16.mxu0 0
    %1891 = vmatpush1.bf16.msra.mxu0 %v1441
    %1892 = vmatprep.subr.bf16.mxu0 0
    %1893 = vmatpush1.bf16.msra.mxu0 %v1442
    %1894 = vmatprep.subr.bf16.mxu0 0
    %1895 = vmatpush1.bf16.msra.mxu0 %v1443
    %1896 = vmatprep.subr.bf16.mxu0 0
    %1897 = vmatpush1.bf16.msra.mxu0 %v1444
    %1898 = vmatprep.subr.bf16.mxu0 0
    %1899 = vmatpush1.bf16.msra.mxu0 %v1445
    %1900 = vmatprep.subr.bf16.mxu0 0
    %1901 = vmatpush1.bf16.msra.mxu0 %v1446
    %1902 = vmatprep.subr.bf16.mxu0 0
    %1903 = vmatpush1.bf16.msra.mxu0 %v1447
    %1904 = vmatprep.subr.bf16.mxu0 0
    %1905 = vmatpush1.bf16.msra.mxu0 %v1448
    %1906 = vmatprep.subr.bf16.mxu0 0
    %1907 = vmatpush1.bf16.msra.mxu0 %v1449
    %1908 = vmatprep.subr.bf16.mxu0 0
    %1909 = vmatpush1.bf16.msra.mxu0 %v1450
    %1910 = vmatprep.subr.bf16.mxu0 0
    %1911 = vmatpush1.bf16.msra.mxu0 %v1451
    %1912 = vmatprep.mubr.bf16.mxu0 %v479
    %1913 = vmatmul.mubr.bf16.gmra.mrb[0].mxu0 %v465
    %v1914 = vpop.f32.mrb[0].mxu0
    %v1915 = vadd.f32 %v1875, %v1914
    %v1916 = vpop.f32.mrb[0].mxu0
    %v1917 = vpop.f32.mrb[0].mxu0
    %v1918 = vpop.f32.mrb[0].mxu0
    %1919 = vdwg.mxu0
    %1920 = vmatprep.subr.bf16.mxu0 0
    %1921 = vmatpush1.bf16.msra.mxu0 %v1452
    %1922 = vmatprep.subr.bf16.mxu0 0
    %1923 = vmatpush1.bf16.msra.mxu0 %v1453
    %1924 = vmatprep.subr.bf16.mxu0 0
    %1925 = vmatpush1.bf16.msra.mxu0 %v1454
    %1926 = vmatprep.subr.bf16.mxu0 0
    %1927 = vmatpush1.bf16.msra.mxu0 %v1455
    %1928 = vmatprep.subr.bf16.mxu0 0
    %1929 = vmatpush1.bf16.msra.mxu0 %v1456
    %1930 = vmatprep.subr.bf16.mxu0 0
    %1931 = vmatpush1.bf16.msra.mxu0 %v1457
    %1932 = vmatprep.subr.bf16.mxu0 0
    %1933 = vmatpush1.bf16.msra.mxu0 %v1458
    %1934 = vmatprep.subr.bf16.mxu0 0
    %1935 = vmatpush1.bf16.msra.mxu0 %v1459
    %1936 = vmatprep.subr.bf16.mxu0 0
    %1937 = vmatpush1.bf16.msra.mxu0 %v1460
    %1938 = vmatprep.subr.bf16.mxu0 0
    %1939 = vmatpush1.bf16.msra.mxu0 %v1461
    %1940 = vmatprep.subr.bf16.mxu0 0
    %1941 = vmatpush1.bf16.msra.mxu0 %v1462
    %1942 = vmatprep.subr.bf16.mxu0 0
    %1943 = vmatpush1.bf16.msra.mxu0 %v1463
    %1944 = vmatprep.subr.bf16.mxu0 0
    %1945 = vmatpush1.bf16.msra.mxu0 %v1464
    %1946 = vmatprep.subr.bf16.mxu0 0
    %1947 = vmatpush1.bf16.msra.mxu0 %v1465
    %1948 = vmatprep.subr.bf16.mxu0 0
    %1949 = vmatpush1.bf16.msra.mxu0 %v1466
    %1950 = vmatprep.subr.bf16.mxu0 0
    %1951 = vmatpush1.bf16.msra.mxu0 %v1467
    %1952 = vmatprep.mubr.bf16.mxu0 %v483
    %1953 = vmatmul.mubr.bf16.gmra.mrb[0].mxu0 %v481
    %v1954 = vpop.f32.mrb[0].mxu0
    %v1955 = vadd.f32 %v1915, %v1954
    %v1956 = vpop.f32.mrb[0].mxu0
    %v1957 = vpop.f32.mrb[0].mxu0
    %v1958 = vpop.f32.mrb[0].mxu0
    %1959 = vdwg.mxu0
    %1960 = vmatprep.subr.bf16.mxu0 0
    %1961 = vmatpush1.bf16.msra.mxu0 %v1468
    %1962 = vmatprep.subr.bf16.mxu0 0
    %1963 = vmatpush1.bf16.msra.mxu0 %v1469
    %1964 = vmatprep.subr.bf16.mxu0 0
    %1965 = vmatpush1.bf16.msra.mxu0 %v1470
    %1966 = vmatprep.subr.bf16.mxu0 0
    %1967 = vmatpush1.bf16.msra.mxu0 %v1471
    %1968 = vmatprep.subr.bf16.mxu0 0
    %1969 = vmatpush1.bf16.msra.mxu0 %v1472
    %1970 = vmatprep.subr.bf16.mxu0 0
    %1971 = vmatpush1.bf16.msra.mxu0 %v1473
    %1972 = vmatprep.subr.bf16.mxu0 0
    %1973 = vmatpush1.bf16.msra.mxu0 %v1474
    %1974 = vmatprep.subr.bf16.mxu0 0
    %1975 = vmatpush1.bf16.msra.mxu0 %v1475
    %1976 = vmatprep.subr.bf16.mxu0 0
    %1977 = vmatpush1.bf16.msra.mxu0 %v1476
    %1978 = vmatprep.subr.bf16.mxu0 0
    %1979 = vmatpush1.bf16.msra.mxu0 %v1477
    %1980 = vmatprep.subr.bf16.mxu0 0
    %1981 = vmatpush1.bf16.msra.mxu0 %v1478
    %1982 = vmatprep.subr.bf16.mxu0 0
    %1983 = vmatpush1.bf16.msra.mxu0 %v1479
    %1984 = vmatprep.subr.bf16.mxu0 0
    %1985 = vmatpush1.bf16.msra.mxu0 %v1480
    %1986 = vmatprep.subr.bf16.mxu0 0
    %1987 = vmatpush1.bf16.msra.mxu0 %v1481
    %1988 = vmatprep.subr.bf16.mxu0 0
    %1989 = vmatpush1.bf16.msra.mxu0 %v1482
    %1990 = vmatprep.subr.bf16.mxu0 0
    %1991 = vmatpush1.bf16.msra.mxu0 %v1483
    %1992 = vmatprep.mubr.bf16.mxu0 %v521
    %1993 = vmatmul.mubr.bf16.gmra.mrb[0].mxu0 %v507
    %v1994 = vpop.f32.mrb[0].mxu0
    %v1995 = vadd.f32 %v1955, %v1994
    %v1996 = vpop.f32.mrb[0].mxu0
    %v1997 = vpop.f32.mrb[0].mxu0
    %v1998 = vpop.f32.mrb[0].mxu0
    %1999 = vdwg.mxu0
    %2000 = vmatprep.subr.bf16.mxu0 0
    %2001 = vmatpush1.bf16.msra.mxu0 %v1484
    %2002 = vmatprep.subr.bf16.mxu0 0
    %2003 = vmatpush1.bf16.msra.mxu0 %v1485
    %2004 = vmatprep.subr.bf16.mxu0 0
    %2005 = vmatpush1.bf16.msra.mxu0 %v1486
    %2006 = vmatprep.subr.bf16.mxu0 0
    %2007 = vmatpush1.bf16.msra.mxu0 %v1487
    %2008 = vmatprep.subr.bf16.mxu0 0
    %2009 = vmatpush1.bf16.msra.mxu0 %v1488
    %2010 = vmatprep.subr.bf16.mxu0 0
    %2011 = vmatpush1.bf16.msra.mxu0 %v1489
    %2012 = vmatprep.subr.bf16.mxu0 0
    %2013 = vmatpush1.bf16.msra.mxu0 %v1490
    %2014 = vmatprep.subr.bf16.mxu0 0
    %2015 = vmatpush1.bf16.msra.mxu0 %v1491
    %2016 = vmatprep.subr.bf16.mxu0 0
    %2017 = vmatpush1.bf16.msra.mxu0 %v1492
    %2018 = vmatprep.subr.bf16.mxu0 0
    %2019 = vmatpush1.bf16.msra.mxu0 %v1493
    %2020 = vmatprep.subr.bf16.mxu0 0
    %2021 = vmatpush1.bf16.msra.mxu0 %v1494
    %2022 = vmatprep.subr.bf16.mxu0 0
    %2023 = vmatpush1.bf16.msra.mxu0 %v1495
    %2024 = vmatprep.subr.bf16.mxu0 0
    %2025 = vmatpush1.bf16.msra.mxu0 %v1496
    %2026 = vmatprep.subr.bf16.mxu0 0
    %2027 = vmatpush1.bf16.msra.mxu0 %v1497
    %2028 = vmatprep.subr.bf16.mxu0 0
    %2029 = vmatpush1.bf16.msra.mxu0 %v1498
    %2030 = vmatprep.subr.bf16.mxu0 0
    %2031 = vmatpush1.bf16.msra.mxu0 %v1499
    %2032 = vmatprep.mubr.bf16.mxu0 %v531
    %2033 = vmatmul.mubr.bf16.gmra.mrb[0].mxu0 %v529
    %v2034 = vpop.f32.mrb[0].mxu0
    %v2035 = vadd.f32 %v1995, %v2034
    %v2036 = vpop.f32.mrb[0].mxu0
    %v2037 = vpop.f32.mrb[0].mxu0
    %v2038 = vpop.f32.mrb[0].mxu0
    %2039 = vdwg.mxu0
    %2040 = vmatprep.subr.bf16.mxu0 0
    %2041 = vmatpush1.bf16.msra.mxu0 %v1500
    %2042 = vmatprep.subr.bf16.mxu0 0
    %2043 = vmatpush1.bf16.msra.mxu0 %v1501
    %2044 = vmatprep.subr.bf16.mxu0 0
    %2045 = vmatpush1.bf16.msra.mxu0 %v1502
    %2046 = vmatprep.subr.bf16.mxu0 0
    %2047 = vmatpush1.bf16.msra.mxu0 %v1503
    %2048 = vmatprep.subr.bf16.mxu0 0
    %2049 = vmatpush1.bf16.msra.mxu0 %v1504
    %2050 = vmatprep.subr.bf16.mxu0 0
    %2051 = vmatpush1.bf16.msra.mxu0 %v1505
    %2052 = vmatprep.subr.bf16.mxu0 0
    %2053 = vmatpush1.bf16.msra.mxu0 %v1506
    %2054 = vmatprep.subr.bf16.mxu0 0
    %2055 = vmatpush1.bf16.msra.mxu0 %v1507
    %2056 = vmatprep.subr.bf16.mxu0 0
    %2057 = vmatpush1.bf16.msra.mxu0 %v1508
    %2058 = vmatprep.subr.bf16.mxu0 0
    %2059 = vmatpush1.bf16.msra.mxu0 %v1509
    %2060 = vmatprep.subr.bf16.mxu0 0
    %2061 = vmatpush1.bf16.msra.mxu0 %v1510
    %2062 = vmatprep.subr.bf16.mxu0 0
    %2063 = vmatpush1.bf16.msra.mxu0 %v1511
    %2064 = vmatprep.subr.bf16.mxu0 0
    %2065 = vmatpush1.bf16.msra.mxu0 %v1512
    %2066 = vmatprep.subr.bf16.mxu0 0
    %2067 = vmatpush1.bf16.msra.mxu0 %v1513
    %2068 = vmatprep.subr.bf16.mxu0 0
    %2069 = vmatpush1.bf16.msra.mxu0 %v1514
    %2070 = vmatprep.subr.bf16.mxu0 0
    %2071 = vmatpush1.bf16.msra.mxu0 %v1515
    %2072 = vmatprep.mubr.bf16.mxu0 %v528
    %2073 = vmatmul.mubr.bf16.gmra.mrb[0].mxu0 %v514
    %v2074 = vpop.f32.mrb[0].mxu0
    %v2075 = vadd.f32 %v2035, %v2074
    %v2076 = vpop.f32.mrb[0].mxu0
    %v2077 = vpop.f32.mrb[0].mxu0
    %v2078 = vpop.f32.mrb[0].mxu0
    %2079 = vdwg.mxu0
    %2080 = vmatprep.subr.bf16.mxu0 0
    %2081 = vmatpush1.bf16.msra.mxu0 %v1516
    %2082 = vmatprep.subr.bf16.mxu0 0
    %2083 = vmatpush1.bf16.msra.mxu0 %v1517
    %2084 = vmatprep.subr.bf16.mxu0 0
    %2085 = vmatpush1.bf16.msra.mxu0 %v1518
    %2086 = vmatprep.subr.bf16.mxu0 0
    %2087 = vmatpush1.bf16.msra.mxu0 %v1519
    %2088 = vmatprep.subr.bf16.mxu0 0
    %2089 = vmatpush1.bf16.msra.mxu0 %v1520
    %2090 = vmatprep.subr.bf16.mxu0 0
    %2091 = vmatpush1.bf16.msra.mxu0 %v1521
    %2092 = vmatprep.subr.bf16.mxu0 0
    %2093 = vmatpush1.bf16.msra.mxu0 %v1522
    %2094 = vmatprep.subr.bf16.mxu0 0
    %2095 = vmatpush1.bf16.msra.mxu0 %v1523
    %2096 = vmatprep.subr.bf16.mxu0 0
    %2097 = vmatpush1.bf16.msra.mxu0 %v1524
    %2098 = vmatprep.subr.bf16.mxu0 0
    %2099 = vmatpush1.bf16.msra.mxu0 %v1525
    %2100 = vmatprep.subr.bf16.mxu0 0
    %2101 = vmatpush1.bf16.msra.mxu0 %v1526
    %2102 = vmatprep.subr.bf16.mxu0 0
    %2103 = vmatpush1.bf16.msra.mxu0 %v1527
    %2104 = vmatprep.subr.bf16.mxu0 0
    %2105 = vmatpush1.bf16.msra.mxu0 %v1528
    %2106 = vmatprep.subr.bf16.mxu0 0
    %2107 = vmatpush1.bf16.msra.mxu0 %v1529
    %2108 = vmatprep.subr.bf16.mxu0 0
    %2109 = vmatpush1.bf16.msra.mxu0 %v1530
    %2110 = vmatprep.subr.bf16.mxu0 0
    %2111 = vmatpush1.bf16.msra.mxu0 %v1531
    %2112 = vmatprep.mubr.bf16.mxu0 %v532
    %2113 = vmatmul.mubr.bf16.gmra.mrb[0].mxu0 %v530
    %v2114 = vpop.f32.mrb[0].mxu0
    %v2115 = vadd.f32 %v2075, %v2114
    %v2116 = vpop.f32.mrb[0].mxu0
    %v2117 = vpop.f32.mrb[0].mxu0
    %v2118 = vpop.f32.mrb[0].mxu0
    %2119 = vdwg.mxu0
    %2120 = vmatprep.subr.bf16.mxu0 0
    %2121 = vmatpush1.bf16.msra.mxu0 %v1532
    %2122 = vmatprep.subr.bf16.mxu0 0
    %2123 = vmatpush1.bf16.msra.mxu0 %v1533
    %2124 = vmatprep.subr.bf16.mxu0 0
    %2125 = vmatpush1.bf16.msra.mxu0 %v1534
    %2126 = vmatprep.subr.bf16.mxu0 0
    %2127 = vmatpush1.bf16.msra.mxu0 %v1535
    %2128 = vmatprep.subr.bf16.mxu0 0
    %2129 = vmatpush1.bf16.msra.mxu0 %v1536
    %2130 = vmatprep.subr.bf16.mxu0 0
    %2131 = vmatpush1.bf16.msra.mxu0 %v1537
    %2132 = vmatprep.subr.bf16.mxu0 0
    %2133 = vmatpush1.bf16.msra.mxu0 %v1538
    %2134 = vmatprep.subr.bf16.mxu0 0
    %2135 = vmatpush1.bf16.msra.mxu0 %v1539
    %2136 = vmatprep.subr.bf16.mxu0 0
    %2137 = vmatpush1.bf16.msra.mxu0 %v1540
    %2138 = vmatprep.subr.bf16.mxu0 0
    %2139 = vmatpush1.bf16.msra.mxu0 %v1541
    %2140 = vmatprep.subr.bf16.mxu0 0
    %2141 = vmatpush1.bf16.msra.mxu0 %v1542
    %2142 = vmatprep.subr.bf16.mxu0 0
    %2143 = vmatpush1.bf16.msra.mxu0 %v1543
    %2144 = vmatprep.subr.bf16.mxu0 0
    %2145 = vmatpush1.bf16.msra.mxu0 %v1544
    %2146 = vmatprep.subr.bf16.mxu0 0
    %2147 = vmatpush1.bf16.msra.mxu0 %v1545
    %2148 = vmatprep.subr.bf16.mxu0 0
    %2149 = vmatpush1.bf16.msra.mxu0 %v1546
    %2150 = vmatprep.subr.bf16.mxu0 0
    %2151 = vmatpush1.bf16.msra.mxu0 %v1547
    %2152 = vmatprep.mubr.bf16.mxu0 %v570
    %2153 = vmatmul.mubr.bf16.gmra.mrb[0].mxu0 %v556
    %v2154 = vpop.f32.mrb[0].mxu0
    %v2155 = vadd.f32 %v2115, %v2154
    %v2156 = vpop.f32.mrb[0].mxu0
    %v2157 = vpop.f32.mrb[0].mxu0
    %v2158 = vpop.f32.mrb[0].mxu0
    %2159 = vdwg.mxu0
    %2160 = vmatprep.subr.bf16.mxu0 0
    %2161 = vmatpush1.bf16.msra.mxu0 %v1548
    %2162 = vmatprep.subr.bf16.mxu0 0
    %2163 = vmatpush1.bf16.msra.mxu0 %v1549
    %2164 = vmatprep.subr.bf16.mxu0 0
    %2165 = vmatpush1.bf16.msra.mxu0 %v1550
    %2166 = vmatprep.subr.bf16.mxu0 0
    %2167 = vmatpush1.bf16.msra.mxu0 %v1551
    %2168 = vmatprep.subr.bf16.mxu0 0
    %2169 = vmatpush1.bf16.msra.mxu0 %v1552
    %2170 = vmatprep.subr.bf16.mxu0 0
    %2171 = vmatpush1.bf16.msra.mxu0 %v1553
    %2172 = vmatprep.subr.bf16.mxu0 0
    %2173 = vmatpush1.bf16.msra.mxu0 %v1554
    %2174 = vmatprep.subr.bf16.mxu0 0
    %2175 = vmatpush1.bf16.msra.mxu0 %v1555
    %2176 = vmatprep.subr.bf16.mxu0 0
    %2177 = vmatpush1.bf16.msra.mxu0 %v1556
    %2178 = vmatprep.subr.bf16.mxu0 0
    %2179 = vmatpush1.bf16.msra.mxu0 %v1557
    %2180 = vmatprep.subr.bf16.mxu0 0
    %2181 = vmatpush1.bf16.msra.mxu0 %v1558
    %2182 = vmatprep.subr.bf16.mxu0 0
    %2183 = vmatpush1.bf16.msra.mxu0 %v1559
    %2184 = vmatprep.subr.bf16.mxu0 0
    %2185 = vmatpush1.bf16.msra.mxu0 %v1560
    %2186 = vmatprep.subr.bf16.mxu0 0
    %2187 = vmatpush1.bf16.msra.mxu0 %v1561
    %2188 = vmatprep.subr.bf16.mxu0 0
    %2189 = vmatpush1.bf16.msra.mxu0 %v1562
    %2190 = vmatprep.subr.bf16.mxu0 0
    %2191 = vmatpush1.bf16.msra.mxu0 %v1563
    %2192 = vmatprep.mubr.bf16.mxu0 %v580
    %2193 = vmatmul.mubr.bf16.gmra.mrb[0].mxu0 %v578
    %v2194 = vpop.f32.mrb[0].mxu0
    %v2195 = vadd.f32 %v2155, %v2194
    %v2196 = vpop.f32.mrb[0].mxu0
    %v2197 = vpop.f32.mrb[0].mxu0
    %v2198 = vpop.f32.mrb[0].mxu0
    %2199 = vdwg.mxu0
    %2200 = vmatprep.subr.bf16.mxu0 0
    %2201 = vmatpush1.bf16.msra.mxu0 %v1564
    %2202 = vmatprep.subr.bf16.mxu0 0
    %2203 = vmatpush1.bf16.msra.mxu0 %v1565
    %2204 = vmatprep.subr.bf16.mxu0 0
    %2205 = vmatpush1.bf16.msra.mxu0 %v1566
    %2206 = vmatprep.subr.bf16.mxu0 0
    %2207 = vmatpush1.bf16.msra.mxu0 %v1567
    %2208 = vmatprep.subr.bf16.mxu0 0
    %2209 = vmatpush1.bf16.msra.mxu0 %v1568
    %2210 = vmatprep.subr.bf16.mxu0 0
    %2211 = vmatpush1.bf16.msra.mxu0 %v1569
    %2212 = vmatprep.subr.bf16.mxu0 0
    %2213 = vmatpush1.bf16.msra.mxu0 %v1570
    %2214 = vmatprep.subr.bf16.mxu0 0
    %2215 = vmatpush1.bf16.msra.mxu0 %v1571
    %2216 = vmatprep.subr.bf16.mxu0 0
    %2217 = vmatpush1.bf16.msra.mxu0 %v1572
    %2218 = vmatprep.subr.bf16.mxu0 0
    %2219 = vmatpush1.bf16.msra.mxu0 %v1573
    %2220 = vmatprep.subr.bf16.mxu0 0
    %2221 = vmatpush1.bf16.msra.mxu0 %v1574
    %2222 = vmatprep.subr.bf16.mxu0 0
    %2223 = vmatpush1.bf16.msra.mxu0 %v1575
    %2224 = vmatprep.subr.bf16.mxu0 0
    %2225 = vmatpush1.bf16.msra.mxu0 %v1576
    %2226 = vmatprep.subr.bf16.mxu0 0
    %2227 = vmatpush1.bf16.msra.mxu0 %v1577
    %2228 = vmatprep.subr.bf16.mxu0 0
    %2229 = vmatpush1.bf16.msra.mxu0 %v1578
    %2230 = vmatprep.subr.bf16.mxu0 0
    %2231 = vmatpush1.bf16.msra.mxu0 %v1579
    %2232 = vmatprep.mubr.bf16.mxu0 %v577
    %2233 = vmatmul.mubr.bf16.gmra.mrb[0].mxu0 %v563
    %v2234 = vpop.f32.mrb[0].mxu0
    %v2235 = vadd.f32 %v2195, %v2234
    %v2236 = vpop.f32.mrb[0].mxu0
    %v2237 = vpop.f32.mrb[0].mxu0
    %v2238 = vpop.f32.mrb[0].mxu0
    %2239 = vdwg.mxu0
    %2240 = vmatprep.subr.bf16.mxu0 0
    %2241 = vmatpush1.bf16.msra.mxu0 %v1580
    %2242 = vmatprep.subr.bf16.mxu0 0
    %2243 = vmatpush1.bf16.msra.mxu0 %v1581
    %2244 = vmatprep.subr.bf16.mxu0 0
    %2245 = vmatpush1.bf16.msra.mxu0 %v1582
    %2246 = vmatprep.subr.bf16.mxu0 0
    %2247 = vmatpush1.bf16.msra.mxu0 %v1583
    %2248 = vmatprep.subr.bf16.mxu0 0
    %2249 = vmatpush1.bf16.msra.mxu0 %v1584
    %2250 = vmatprep.subr.bf16.mxu0 0
    %2251 = vmatpush1.bf16.msra.mxu0 %v1585
    %2252 = vmatprep.subr.bf16.mxu0 0
    %2253 = vmatpush1.bf16.msra.mxu0 %v1586
    %2254 = vmatprep.subr.bf16.mxu0 0
    %2255 = vmatpush1.bf16.msra.mxu0 %v1587
    %2256 = vmatprep.subr.bf16.mxu0 0
    %2257 = vmatpush1.bf16.msra.mxu0 %v1588
    %2258 = vmatprep.subr.bf16.mxu0 0
    %2259 = vmatpush1.bf16.msra.mxu0 %v1589
    %2260 = vmatprep.subr.bf16.mxu0 0
    %2261 = vmatpush1.bf16.msra.mxu0 %v1590
    %2262 = vmatprep.subr.bf16.mxu0 0
    %2263 = vmatpush1.bf16.msra.mxu0 %v1591
    %2264 = vmatprep.subr.bf16.mxu0 0
    %2265 = vmatpush1.bf16.msra.mxu0 %v1592
    %2266 = vmatprep.subr.bf16.mxu0 0
    %2267 = vmatpush1.bf16.msra.mxu0 %v1593
    %2268 = vmatprep.subr.bf16.mxu0 0
    %2269 = vmatpush1.bf16.msra.mxu0 %v1594
    %2270 = vmatprep.subr.bf16.mxu0 0
    %2271 = vmatpush1.bf16.msra.mxu0 %v1595
    %2272 = vmatprep.mubr.bf16.mxu0 %v581
    %2273 = vmatmul.mubr.bf16.gmra.mrb[0].mxu0 %v579
    %v2274 = vpop.f32.mrb[0].mxu0
    %v2275 = vadd.f32 %v2235, %v2274
    %v2276 = vpop.f32.mrb[0].mxu0
    %v2277 = vpop.f32.mrb[0].mxu0
    %v2278 = vpop.f32.mrb[0].mxu0
    %2279 = vdwg.mxu0
    %2280 = vmatprep.subr.bf16.mxu0 0
    %2281 = vmatpush1.bf16.msra.mxu0 %v1596
    %2282 = vmatprep.subr.bf16.mxu0 0
    %2283 = vmatpush1.bf16.msra.mxu0 %v1597
    %2284 = vmatprep.subr.bf16.mxu0 0
    %2285 = vmatpush1.bf16.msra.mxu0 %v1598
    %2286 = vmatprep.subr.bf16.mxu0 0
    %2287 = vmatpush1.bf16.msra.mxu0 %v1599
    %2288 = vmatprep.subr.bf16.mxu0 0
    %2289 = vmatpush1.bf16.msra.mxu0 0
    %2290 = vmatprep.subr.bf16.mxu0 0
    %2291 = vmatpush1.bf16.msra.mxu0 0
    %2292 = vmatprep.subr.bf16.mxu0 0
    %2293 = vmatpush1.bf16.msra.mxu0 0
    %2294 = vmatprep.subr.bf16.mxu0 0
    %2295 = vmatpush1.bf16.msra.mxu0 0
    %2296 = vmatprep.subr.bf16.mxu0 0
    %2297 = vmatpush1.bf16.msra.mxu0 0
    %2298 = vmatprep.subr.bf16.mxu0 0
    %2299 = vmatpush1.bf16.msra.mxu0 0
    %2300 = vmatprep.subr.bf16.mxu0 0
    %2301 = vmatpush1.bf16.msra.mxu0 0
    %2302 = vmatprep.subr.bf16.mxu0 0
    %2303 = vmatpush1.bf16.msra.mxu0 0
    %2304 = vmatprep.subr.bf16.mxu0 0
    %2305 = vmatpush1.bf16.msra.mxu0 0
    %2306 = vmatprep.subr.bf16.mxu0 0
    %2307 = vmatpush1.bf16.msra.mxu0 0
    %2308 = vmatprep.subr.bf16.mxu0 0
    %2309 = vmatpush1.bf16.msra.mxu0 0
    %2310 = vmatprep.subr.bf16.mxu0 0
    %2311 = vmatpush1.bf16.msra.mxu0 0
    %2312 = vmatprep.mubr.bf16.mxu0 0
    %2313 = vmatmul.mubr.bf16.gmra.mrb[0].mxu0 %v1798
    %v2314 = vpop.f32.mrb[0].mxu0
    %v2315 = vadd.f32 %v2275, %v2314
    %v2316 = vpop.f32.mrb[0].mxu0
    %v2317 = vpop.f32.mrb[0].mxu0
    %v2318 = vpop.f32.mrb[0].mxu0
    %2319 = vdwg.mxu0
    %v2320 = vmax.f32 %v2315, 0.0
    %v2321 = vpack.c.bf16 %v2320, %v2320
    %v2322 = vld [vmem:[%s3] sm:$0xf]
    %v2323 = vld [vmem:[%s3 + $0x4] sm:$0xf]
    %v2324 = vld [vmem:[%s3 + $0x8] sm:$0xf]
    %v2325 = vld [vmem:[%s3 + $0xc] sm:$0xf]
    %v2326 = vld [vmem:[%s3 + $0x10] sm:$0xf]
    %v2327 = vld [vmem:[%s3 + $0x14] sm:$0xf]
    %v2328 = vld [vmem:[%s3 + $0x18] sm:$0xf]
    %v2329 = vld [vmem:[%s3 + $0x1c] sm:$0xf]
    %v2330 = vld [vmem:[%s3 + $0x20] sm:$0xf]
    %v2331 = vld [vmem:[%s3 + $0x24] sm:$0xf]
    %v2332 = vld [vmem:[%s3 + $0x28] sm:$0xf]
    %v2333 = vld [vmem:[%s3 + $0x2c] sm:$0xf]
    %v2334 = vld [vmem:[%s3 + $0x30] sm:$0xf]
    %v2335 = vld [vmem:[%s3 + $0x34] sm:$0xf]
    %v2336 = vld [vmem:[%s3 + $0x38] sm:$0xf]
    %v2337 = vld [vmem:[%s3 + $0x3c] sm:$0xf]
    %v2338 = vld [vmem:[%s4] sm:$0x1]
    %v2340 = vlaneseq
    %v2341 = vshrl.u32 %v2340, 7
    %v2342 = vsub.s32 0, %v2341
    %v2343 = vrot.slane %v2338, %v2342
    %v2361 = vunpack.c.l.b16 %v2322
    %v2362 = vunpack.c.l.b16 %v2323
    %v2363 = vunpack.c.l.b16 %v2324
    %v2364 = vunpack.c.l.b16 %v2325
    %v2365 = vunpack.c.l.b16 %v2326
    %v2366 = vunpack.c.l.b16 %v2327
    %v2367 = vunpack.c.l.b16 %v2328
    %v2368 = vunpack.c.l.b16 %v2329
    %v2369 = vunpack.c.l.b16 %v2330
    %v2370 = vunpack.c.l.b16 %v2331
    %v2371 = vunpack.c.l.b16 %v2332
    %v2372 = vunpack.c.l.b16 %v2333
    %v2373 = vunpack.c.l.b16 %v2334
    %v2374 = vunpack.c.l.b16 %v2335
    %v2375 = vunpack.c.l.b16 %v2336
    %v2376 = vunpack.c.l.b16 %v2337
    %v2377 = vpack.c.b16 %v2362, %v2361
    %v2378 = vpack.c.b16 %v2364, %v2363
    %v2379 = vpack.c.b16 %v2366, %v2365
    %v2380 = vpack.c.b16 %v2368, %v2367
    %v2381 = vpack.c.b16 %v2370, %v2369
    %v2382 = vpack.c.b16 %v2372, %v2371
    %v2383 = vpack.c.b16 %v2374, %v2373
    %v2384 = vpack.c.b16 %v2376, %v2375
    %2393 = vmatprep.subr.bf16.mxu0 0
    %2394 = vmatpush1.bf16.msra.mxu0 %v2377
    %2395 = vmatprep.subr.bf16.mxu0 0
    %2396 = vmatpush1.bf16.msra.mxu0 %v2378
    %2397 = vmatprep.subr.bf16.mxu0 0
    %2398 = vmatpush1.bf16.msra.mxu0 %v2379
    %2399 = vmatprep.subr.bf16.mxu0 0
    %2400 = vmatpush1.bf16.msra.mxu0 %v2380
    %2401 = vmatprep.subr.bf16.mxu0 0
    %2402 = vmatpush1.bf16.msra.mxu0 %v2381
    %2403 = vmatprep.subr.bf16.mxu0 0
    %2404 = vmatpush1.bf16.msra.mxu0 %v2382
    %2405 = vmatprep.subr.bf16.mxu0 0
    %2406 = vmatpush1.bf16.msra.mxu0 %v2383
    %2407 = vmatprep.subr.bf16.mxu0 0
    %2408 = vmatpush1.bf16.msra.mxu0 %v2384
    %2409 = vmatprep.subr.bf16.mxu0 0
    %2410 = vmatpush1.bf16.msra.mxu0 0
    %2411 = vmatprep.subr.bf16.mxu0 0
    %2412 = vmatpush1.bf16.msra.mxu0 0
    %2413 = vmatprep.subr.bf16.mxu0 0
    %2414 = vmatpush1.bf16.msra.mxu0 0
    %2415 = vmatprep.subr.bf16.mxu0 0
    %2416 = vmatpush1.bf16.msra.mxu0 0
    %2417 = vmatprep.subr.bf16.mxu0 0
    %2418 = vmatpush1.bf16.msra.mxu0 0
    %2419 = vmatprep.subr.bf16.mxu0 0
    %2420 = vmatpush1.bf16.msra.mxu0 0
    %2421 = vmatprep.subr.bf16.mxu0 0
    %2422 = vmatpush1.bf16.msra.mxu0 0
    %2423 = vmatprep.subr.bf16.mxu0 0
    %2424 = vmatpush1.bf16.msra.mxu0 0
    %2425 = vmatprep.mubr.bf16.mxu0 0
    %2426 = vmatmul.mubr.bf16.gmra.mrb[0].mxu0 %v2321
    %v2427 = vpop.f32.mrb[0].mxu0
    %v2428 = vadd.f32 %v2343, %v2427
    %v2429 = vpop.f32.mrb[0].mxu0
    %v2430 = vpop.f32.mrb[0].mxu0
    %v2431 = vpop.f32.mrb[0].mxu0
    %2432 = vdwg.mxu0
    %v2433 = vmax.f32 %v2428, 0.0
    %v2434 = vpack.c.bf16 %v2433, %v2433
    %v2435 = vld [vmem:[%s5] sm:$0xf]
    %v2436 = vld [vmem:[%s5 + $0x4] sm:$0xf]
    %v2437 = vld [vmem:[%s5 + $0x8] sm:$0xf]
    %v2438 = vld [vmem:[%s5 + $0xc] sm:$0xf]
    %v2439 = vld [vmem:[%s5 + $0x10] sm:$0xf]
    %v2440 = vld [vmem:[%s5 + $0x14] sm:$0xf]
    %v2441 = vld [vmem:[%s5 + $0x18] sm:$0xf]
    %v2442 = vld [vmem:[%s5 + $0x1c] sm:$0xf]
    %v2443 = vld [vmem:[%s6] sm:$0x1]
    %v2445 = vlaneseq
    %v2446 = vshrl.u32 %v2445, 7
    %v2447 = vsub.s32 0, %v2446
    %v2448 = vrot.slane %v2443, %v2447
    %v2458 = vunpack.c.l.b16 %v2435
    %v2459 = vunpack.c.l.b16 %v2436
    %v2460 = vunpack.c.l.b16 %v2437
    %v2461 = vunpack.c.l.b16 %v2438
    %v2462 = vunpack.c.l.b16 %v2439
    %v2463 = vunpack.c.l.b16 %v2440
    %v2464 = vunpack.c.l.b16 %v2441
    %v2465 = vunpack.c.l.b16 %v2442
    %v2466 = vpack.c.b16 %v2459, %v2458
    %v2467 = vpack.c.b16 %v2461, %v2460
    %v2468 = vpack.c.b16 %v2463, %v2462
    %v2469 = vpack.c.b16 %v2465, %v2464
    %v2475 = vsel %vm1796, %v2434, 0
    %2477 = vmatprep.subr.bf16.mxu0 0
    %2478 = vmatpush1.bf16.msra.mxu0 %v2466
    %2479 = vmatprep.subr.bf16.mxu0 0
    %2480 = vmatpush1.bf16.msra.mxu0 %v2467
    %2481 = vmatprep.subr.bf16.mxu0 0
    %2482 = vmatpush1.bf16.msra.mxu0 %v2468
    %2483 = vmatprep.subr.bf16.mxu0 0
    %2484 = vmatpush1.bf16.msra.mxu0 %v2469
    %2485 = vmatprep.subr.bf16.mxu0 0
    %2486 = vmatpush1.bf16.msra.mxu0 0
    %2487 = vmatprep.subr.bf16.mxu0 0
    %2488 = vmatpush1.bf16.msra.mxu0 0
    %2489 = vmatprep.subr.bf16.mxu0 0
    %2490 = vmatpush1.bf16.msra.mxu0 0
    %2491 = vmatprep.subr.bf16.mxu0 0
    %2492 = vmatpush1.bf16.msra.mxu0 0
    %2493 = vmatprep.subr.bf16.mxu0 0
    %2494 = vmatpush1.bf16.msra.mxu0 0
    %2495 = vmatprep.subr.bf16.mxu0 0
    %2496 = vmatpush1.bf16.msra.mxu0 0
    %2497 = vmatprep.subr.bf16.mxu0 0
    %2498 = vmatpush1.bf16.msra.mxu0 0
    %2499 = vmatprep.subr.bf16.mxu0 0
    %2500 = vmatpush1.bf16.msra.mxu0 0
    %2501 = vmatprep.subr.bf16.mxu0 0
    %2502 = vmatpush1.bf16.msra.mxu0 0
    %2503 = vmatprep.subr.bf16.mxu0 0
    %2504 = vmatpush1.bf16.msra.mxu0 0
    %2505 = vmatprep.subr.bf16.mxu0 0
    %2506 = vmatpush1.bf16.msra.mxu0 0
    %2507 = vmatprep.subr.bf16.mxu0 0
    %2508 = vmatpush1.bf16.msra.mxu0 0
    %2509 = vmatprep.mubr.bf16.mxu0 0
    %2510 = vmatmul.mubr.bf16.gmra.mrb[0].mxu0 %v2475
    %v2511 = vpop.f32.mrb[0].mxu0
    %v2512 = vadd.f32 %v2448, %v2511
    %v2513 = vpop.f32.mrb[0].mxu0
    %v2514 = vpop.f32.mrb[0].mxu0
    %v2515 = vpop.f32.mrb[0].mxu0
    %2516 = vdwg.mxu0
    %vm2517 = vcmask 1041408
    %v2518 = vsel %vm2517, %v2512, -inf
    %2519 = vmax.xlane.f32.xlu0 %v2518
    %v2520 = vpop.xlane.xlu0 %2519
    %v2521 = vsub.f32 %v2512, %v2520
    %v2522 = vmul.f32 %v2521, 1.442695
    %v2523 = vpow.pop %v2522
    %v2524 = vsel %vm2517, %v2523, 0.0
    %2525 = vadd.xlane.f32.xlu0 %v2524
    %v2526 = vpop.xlane.xlu0 %2525
    %v2527 = vrcp.pop %v2526
    %v2528 = vmul.f32 %v2523, %v2527
    %2529 = vst [vmem:[#allocation2] sm:$0x3] %v2528
    // Predicated region
    $region30: #{pipeline.5} parent=1 // pred_check
      _
    $region31: #{pipeline.5} parent=1 // pred_check_branch
      %2531 = sbr.rel (0) target = $region33
    $region32: #{pipeline.5} parent=1 // pred_region
      %s2533 = ssub.s32 32, 32
      %2534 = vsyncadd [#allocation3], %s2533
      %s2536 = sshll.u32 [#allocation2], 4
      %s2537 = int_to_ptr.vmem [resolvable:$true] %s2536
      %2539 = dma.vmem_to_hbm [thread:$0]  %s2537, 32, %s7, [#allocation3]
    $region33: #{pipeline.5} parent=1 // pred_fallthru
      _
    // Predicated region
    $region34: #{pipeline.5} parent=1 // pred_check
      _
    $region35: #{pipeline.5} parent=1 // pred_check_branch
      %2541 = sbr.rel (0) target = $region37
    $region36: #{pipeline.5} parent=1 // pred_region
      %2542 = dma.done [#allocation3], 32
    $region37: #{pipeline.5} parent=1 // pred_fallthru
      _
    %2543 = vsyncpa [#allocation3], 1

</llo_original>
